<compile_context>
chip_gen: v7x
topology: tpu7x:2x2x1
jax: 0.10.0
libtpu: 0.0.40
codegen_flags: <defaults>
</compile_context>

<pallas_src>
import functools

import jax
import jax.numpy as jnp
from jax.experimental import pallas as pl
from jax.experimental.pallas import tpu as pltpu


def _resnet_head_kernel(x_ref, w1_ref, b1_ref, wc_ref, bc_ref, out_ref,
                        acc_ref, *, inv_hw, c_in):
    """One (batch-block, HW-block) grid step.

    x_ref  : (B_t, HW_t, Cin)  streamed image tile (flattened NHWC)
    w1_ref : (Cin, D)          1x1-conv weight   (resident)
    b1_ref : (1, D)            1x1-conv bias     (resident)
    wc_ref : (D, 5)            classifier weight (resident)
    bc_ref : (1, 5)            classifier bias   (resident)
    out_ref: (B_t, 5)          logits (written once, at finalize)
    acc_ref: (B_t, D) f32      pooled-sum accumulator (VMEM scratch)
    """
    j = pl.program_id(1)

    @pl.when(j == 0)
    def _init():
        acc_ref[...] = jnp.zeros_like(acc_ref)

    x = x_ref[...]                                   # (B_t, HW_t, Cin) f32
    b1 = b1_ref[...]                                 # (1, D)

    if c_in < 128:
        # Tiny contraction: skip the MXU, do c_in VPU broadcast-FMAs over
        # the dense D=1024 lane axis.
        w1 = w1_ref[...]                             # (Cin, D)
        h = x[:, :, 0:1] * w1[0:1, :][None, :, :]    # (B_t, HW_t, D)
        for c in range(1, c_in):
            h = h + x[:, :, c:c + 1] * w1[c:c + 1, :][None, :, :]
        h = jnp.maximum(h + b1[None, :, :], 0.0)
    else:
        # Large contraction: single 2D bf16 matmul on the MXU, f32 accumulate.
        bt, hwt, cin = x.shape
        x2 = x.reshape(bt * hwt, cin).astype(jnp.bfloat16)
        h2 = jnp.dot(x2, w1_ref[...].astype(jnp.bfloat16),
                     preferred_element_type=jnp.float32)   # (B_t*HW_t, D)
        h = jnp.maximum(h2.reshape(bt, hwt, -1) + b1[None, :, :], 0.0)

    # Accumulate the spatial sum (mean's scale is applied once at finalize).
    acc_ref[...] += jnp.sum(h, axis=1)               # (B_t, D)

    @pl.when(j == pl.num_programs(1) - 1)
    def _finalize():
        feat = acc_ref[...] * inv_hw                 # (B_t, D)  global avg pool
        logits = jnp.dot(feat, wc_ref[...],
                         preferred_element_type=jnp.float32) + bc_ref[...]
        out_ref[...] = logits.astype(out_ref.dtype)  # (B_t, 5)


def my_resnet_forward(x_nchw, params, *, hw_tile=None):
    """x_nchw: [B, C, H, W] float32 (PyTorch layout).  Returns [B, 5] logits."""
    B, C, H, W = x_nchw.shape
    HW = H * W
    # NCHW -> [B, H*W, C]  (layout glue, plain JAX).
    x_flat = jnp.transpose(x_nchw, (0, 2, 3, 1)).reshape(B, HW, C)

    w1, b1, wc, bc = params["w1"], params["b1"], params["wc"], params["bc"]
    D = w1.shape[1]
    n_classes = wc.shape[1]

    # HW tile: a multiple of 8 dividing HW; capped so the (B, HW_t, D) f32
    # intermediate + double-buffered x tile fits comfortably in VMEM on every
    # generation (v5e 16 MiB scoped default .. v7x 64 MiB physical).
    if hw_tile is None:
        hw_tile = HW
        for cand in (1024, 512, 256, 128, 64, 32, 16, 8):
            if HW % cand == 0:
                hw_tile = cand
                break
    assert HW % hw_tile == 0

    # Small batches: keep the whole batch resident per grid step (full-dim
    # block is always layout-legal); batch axis still marked "parallel" for
    # v7x megacore sharding when B-blocking is used.
    b_tile = B
    grid = (B // b_tile, HW // hw_tile)
    inv_hw = 1.0 / float(HW)

    kernel = functools.partial(_resnet_head_kernel, inv_hw=inv_hw, c_in=C)

    out = pl.pallas_call(
        kernel,
        out_shape=jax.ShapeDtypeStruct((B, n_classes), jnp.float32),
        grid_spec=pltpu.PrefetchScalarGridSpec(
            num_scalar_prefetch=0,
            grid=grid,
            in_specs=[
                # streamed input tile
                pl.BlockSpec((b_tile, hw_tile, C), lambda i, j: (i, j, 0)),
                # resident weights (constant index_map -> DMA'd once)
                pl.BlockSpec((C, D), lambda i, j: (0, 0)),
                pl.BlockSpec((1, D), lambda i, j: (0, 0)),
                pl.BlockSpec((D, n_classes), lambda i, j: (0, 0)),
                pl.BlockSpec((1, n_classes), lambda i, j: (0, 0)),
            ],
            # same output block across the HW (reduction) axis -> resident,
            # written only in the finalize branch.
            out_specs=pl.BlockSpec((b_tile, n_classes), lambda i, j: (i, 0)),
            scratch_shapes=[pltpu.VMEM((b_tile, D), jnp.float32)],
        ),
        compiler_params=pltpu.CompilerParams(
            dimension_semantics=("parallel", "arbitrary"),
            vmem_limit_bytes=32 * 1024 * 1024,
        ),
    )(x_flat, w1, b1, wc, bc)
    return out


def init_params(key, c_in, hidden=1024, n_classes=5):
    """Deterministic parameter init (synthetic, PyTorch-like fan-in scaling)."""
    k1, k2, k3, k4 = jax.random.split(key, 4)
    s1 = 1.0 / jnp.sqrt(jnp.float32(c_in))
    sc = 1.0 / jnp.sqrt(jnp.float32(hidden))
    return {
        "w1": jax.random.uniform(k1, (c_in, hidden), jnp.float32, -s1, s1),
        "b1": jax.random.uniform(k2, (1, hidden), jnp.float32, -s1, s1),
        "wc": jax.random.uniform(k3, (hidden, n_classes), jnp.float32, -sc, sc),
        "bc": jax.random.uniform(k4, (1, n_classes), jnp.float32, -sc, sc),
    }


def _reference_forward(x_nchw, params):
    """Pure-JAX reference for correctness check."""
    B, C, H, W = x_nchw.shape
    x_flat = jnp.transpose(x_nchw, (0, 2, 3, 1)).reshape(B, H * W, C)
    h = jnp.einsum("bhc,cd->bhd", x_flat, params["w1"]) + params["b1"][None]
    h = jnp.maximum(h, 0.0)
    feat = jnp.mean(h, axis=1)
    return feat @ params["wc"] + params["bc"]


if __name__ == "__main__":
    key = jax.random.PRNGKey(0)
    kx, kp = jax.random.split(key)

    B, C, H, W = 2, 4, 16, 16
    x = jax.random.normal(kx, (B, C, H, W), dtype=jnp.float32)
    params = init_params(kp, C)

    # hw_tile=128 -> 2 HW grid steps, exercising the accumulate + finalize path.
    logits = my_resnet_forward(x, params, hw_tile=128)
    logits = jax.block_until_ready(logits)

    ref = _reference_forward(x, params)
    assert logits.shape == (B, 5)
    assert jnp.allclose(logits, ref, atol=1e-4, rtol=1e-4)

    print("KERNEL_OK")
</pallas_src>

<mosaic_0001>
module attributes {stable_mosaic.version = 11 : i64} {
  func.func @_resnet_head_kernel(%arg0: i32, %arg1: i32, %arg2: memref<2x128x4xf32, #tpu.memory_space<vmem>>, %arg3: memref<4x1024xf32, #tpu.memory_space<vmem>>, %arg4: memref<1x1024xf32, #tpu.memory_space<vmem>>, %arg5: memref<1024x5xf32, #tpu.memory_space<vmem>>, %arg6: memref<1x5xf32, #tpu.memory_space<vmem>>, %arg7: memref<2x5xf32, #tpu.memory_space<vmem>>, %arg8: memref<2x1024xf32, #tpu.memory_space<vmem>>) attributes {dimension_semantics = [#tpu.dimension_semantics<parallel>, #tpu.dimension_semantics<arbitrary>], iteration_bounds = array<i64: 1, 2>, scalar_prefetch = 0 : i64, scratch_operands = 1 : i64, tpu.core_type = #tpu.core_type<tc>, window_params = [{transform_indices = @transform_0, window_bounds = array<i64: 2, 128, 4>}, {pipeline_mode = #tpu.pipeline_mode<synchronous>, transform_indices = @transform_1, window_bounds = array<i64: 4, 1024>}, {pipeline_mode = #tpu.pipeline_mode<synchronous>, transform_indices = @transform_2, window_bounds = array<i64: 1, 1024>}, {pipeline_mode = #tpu.pipeline_mode<synchronous>, transform_indices = @transform_3, window_bounds = array<i64: 1024, 5>}, {pipeline_mode = #tpu.pipeline_mode<synchronous>, transform_indices = @transform_4, window_bounds = array<i64: 1, 5>}, {transform_indices = @transform_5, window_bounds = array<i64: 2, 5>}]} {
    %c0_i32 = arith.constant 0 : i32
    %0 = arith.cmpi eq, %arg1, %c0_i32 : i32
    %1 = arith.extui %0 : i1 to i32
    %c0_i32_0 = arith.constant 0 : i32
    %2 = arith.cmpi ne, %1, %c0_i32_0 : i32
    scf.if %2 {
      %cst_13 = arith.constant 0.000000e+00 : f32
      %45 = vector.broadcast %cst_13 : f32 to vector<2x1024xf32>
      %c0_14 = arith.constant 0 : index
      %c0_15 = arith.constant 0 : index
      %46 = vector.load %arg8[%c0_14, %c0_15] : memref<2x1024xf32, #tpu.memory_space<vmem>>, vector<2x1024xf32>
      tpu.vector_store %arg8[%c0_14, %c0_15], %45 {strides = array<i32>} : memref<2x1024xf32, #tpu.memory_space<vmem>>, vector<2x1024xf32>,
    } else {
    }
    %c0 = arith.constant 0 : index
    %c0_1 = arith.constant 0 : index
    %c0_2 = arith.constant 0 : index
    %3 = vector.load %arg2[%c0, %c0_1, %c0_2] : memref<2x128x4xf32, #tpu.memory_space<vmem>>, vector<2x128x4xf32>
    %c0_3 = arith.constant 0 : index
    %c0_4 = arith.constant 0 : index
    %4 = vector.load %arg4[%c0_3, %c0_4] : memref<1x1024xf32, #tpu.memory_space<vmem>>, vector<1x1024xf32>
    %c0_5 = arith.constant 0 : index
    %c0_6 = arith.constant 0 : index
    %5 = vector.load %arg3[%c0_5, %c0_6] : memref<4x1024xf32, #tpu.memory_space<vmem>>, vector<4x1024xf32>
    %6 = vector.extract_strided_slice %3 {offsets = [0, 0, 0], sizes = [2, 128, 1], strides = [1, 1, 1]} : vector<2x128x4xf32> to vector<2x128x1xf32>
    %7 = vector.extract_strided_slice %5 {offsets = [0, 0], sizes = [1, 1024], strides = [1, 1]} : vector<4x1024xf32> to vector<1x1024xf32>
    %8 = vector.shape_cast %7 : vector<1x1024xf32> to vector<1x1x1024xf32>
    %9 = vector.broadcast %6 : vector<2x128x1xf32> to vector<2x128x1024xf32>
    %10 = vector.broadcast %8 : vector<1x1x1024xf32> to vector<2x128x1024xf32>
    %11 = arith.mulf %9, %10 : vector<2x128x1024xf32>
    %12 = vector.extract_strided_slice %3 {offsets = [0, 0, 1], sizes = [2, 128, 1], strides = [1, 1, 1]} : vector<2x128x4xf32> to vector<2x128x1xf32>
    %13 = vector.extract_strided_slice %5 {offsets = [1, 0], sizes = [1, 1024], strides = [1, 1]} : vector<4x1024xf32> to vector<1x1024xf32>
    %14 = vector.shape_cast %13 : vector<1x1024xf32> to vector<1x1x1024xf32>
    %15 = vector.broadcast %12 : vector<2x128x1xf32> to vector<2x128x1024xf32>
    %16 = vector.broadcast %14 : vector<1x1x1024xf32> to vector<2x128x1024xf32>
    %17 = arith.mulf %15, %16 : vector<2x128x1024xf32>
    %18 = arith.addf %11, %17 : vector<2x128x1024xf32>
    %19 = vector.extract_strided_slice %3 {offsets = [0, 0, 2], sizes = [2, 128, 1], strides = [1, 1, 1]} : vector<2x128x4xf32> to vector<2x128x1xf32>
    %20 = vector.extract_strided_slice %5 {offsets = [2, 0], sizes = [1, 1024], strides = [1, 1]} : vector<4x1024xf32> to vector<1x1024xf32>
    %21 = vector.shape_cast %20 : vector<1x1024xf32> to vector<1x1x1024xf32>
    %22 = vector.broadcast %19 : vector<2x128x1xf32> to vector<2x128x1024xf32>
    %23 = vector.broadcast %21 : vector<1x1x1024xf32> to vector<2x128x1024xf32>
    %24 = arith.mulf %22, %23 : vector<2x128x1024xf32>
    %25 = arith.addf %18, %24 : vector<2x128x1024xf32>
    %26 = vector.extract_strided_slice %3 {offsets = [0, 0, 3], sizes = [2, 128, 1], strides = [1, 1, 1]} : vector<2x128x4xf32> to vector<2x128x1xf32>
    %27 = vector.extract_strided_slice %5 {offsets = [3, 0], sizes = [1, 1024], strides = [1, 1]} : vector<4x1024xf32> to vector<1x1024xf32>
    %28 = vector.shape_cast %27 : vector<1x1024xf32> to vector<1x1x1024xf32>
    %29 = vector.broadcast %26 : vector<2x128x1xf32> to vector<2x128x1024xf32>
    %30 = vector.broadcast %28 : vector<1x1x1024xf32> to vector<2x128x1024xf32>
    %31 = arith.mulf %29, %30 : vector<2x128x1024xf32>
    %32 = arith.addf %25, %31 : vector<2x128x1024xf32>
    %33 = vector.shape_cast %4 : vector<1x1024xf32> to vector<1x1x1024xf32>
    %34 = vector.broadcast %33 : vector<1x1x1024xf32> to vector<2x128x1024xf32>
    %35 = arith.addf %32, %34 : vector<2x128x1024xf32>
    %cst = arith.constant 0.000000e+00 : f32
    %36 = vector.broadcast %cst : f32 to vector<2x128x1024xf32>
    %37 = arith.maximumf %35, %36 : vector<2x128x1024xf32>
    %c0_7 = arith.constant 0 : index
    %c0_8 = arith.constant 0 : index
    %38 = vector.load %arg8[%c0_7, %c0_8] : memref<2x1024xf32, #tpu.memory_space<vmem>>, vector<2x1024xf32>
    %cst_9 = arith.constant dense<0.000000e+00> : vector<2x1024xf32>
    %39 = vector.multi_reduction <add>, %37, %cst_9 [1] : vector<2x128x1024xf32> to vector<2x1024xf32>
    %40 = arith.addf %38, %39 : vector<2x1024xf32>
    %c0_10 = arith.constant 0 : index
    %c0_11 = arith.constant 0 : index
    %41 = vector.load %arg8[%c0_10, %c0_11] : memref<2x1024xf32, #tpu.memory_space<vmem>>, vector<2x1024xf32>
    tpu.vector_store %arg8[%c0_10, %c0_11], %40 {strides = array<i32>} : memref<2x1024xf32, #tpu.memory_space<vmem>>, vector<2x1024xf32>,
    %c1_i32 = arith.constant 1 : i32
    %42 = arith.cmpi eq, %arg1, %c1_i32 : i32
    %43 = arith.extui %42 : i1 to i32
    %c0_i32_12 = arith.constant 0 : i32
    %44 = arith.cmpi ne, %43, %c0_i32_12 : i32
    scf.if %44 {
      %c0_13 = arith.constant 0 : index
      %c0_14 = arith.constant 0 : index
      %45 = vector.load %arg8[%c0_13, %c0_14] : memref<2x1024xf32, #tpu.memory_space<vmem>>, vector<2x1024xf32>
      %cst_15 = arith.constant 3.906250e-03 : f32
      %46 = vector.broadcast %cst_15 : f32 to vector<2x1024xf32>
      %47 = arith.mulf %45, %46 : vector<2x1024xf32>
      %c0_16 = arith.constant 0 : index
      %c0_17 = arith.constant 0 : index
      %48 = vector.load %arg5[%c0_16, %c0_17] : memref<1024x5xf32, #tpu.memory_space<vmem>>, vector<1024x5xf32>
      %cst_18 = arith.constant dense<0.000000e+00> : vector<2x5xf32>
      %49 = tpu.matmul %47, %48, %cst_18 {dimension_numbers = #tpu.dot_dimension_numbers<[1], [0], [0], [1], [0, 0, 1, 1], [], []>} : vector<2x1024xf32>, vector<1024x5xf32>, vector<2x5xf32> -> vector<2x5xf32>
      %c0_19 = arith.constant 0 : index
      %c0_20 = arith.constant 0 : index
      %50 = vector.load %arg6[%c0_19, %c0_20] : memref<1x5xf32, #tpu.memory_space<vmem>>, vector<1x5xf32>
      %51 = vector.broadcast %50 : vector<1x5xf32> to vector<2x5xf32>
      %52 = arith.addf %49, %51 : vector<2x5xf32>
      %c0_21 = arith.constant 0 : index
      %c0_22 = arith.constant 0 : index
      %53 = vector.load %arg7[%c0_21, %c0_22] : memref<2x5xf32, #tpu.memory_space<vmem>>, vector<2x5xf32>
      tpu.vector_store %arg7[%c0_21, %c0_22], %52 {strides = array<i32>} : memref<2x5xf32, #tpu.memory_space<vmem>>, vector<2x5xf32>,
    } else {
    }
    return
  }
  func.func @transform_0(%arg0: i32, %arg1: i32) -> (i32, i32, i32) {
    %c0_i32 = arith.constant 0 : i32
    %c0_i32_0 = arith.constant 0 : i32
    return %arg0, %arg1, %c0_i32 : i32, i32, i32
  }
  func.func @transform_1(%arg0: i32, %arg1: i32) -> (i32, i32) {
    %c0_i32 = arith.constant 0 : i32
    %c0_i32_0 = arith.constant 0 : i32
    %c0_i32_1 = arith.constant 0 : i32
    return %c0_i32, %c0_i32_0 : i32, i32
  }
  func.func @transform_2(%arg0: i32, %arg1: i32) -> (i32, i32) {
    %c0_i32 = arith.constant 0 : i32
    %c0_i32_0 = arith.constant 0 : i32
    %c0_i32_1 = arith.constant 0 : i32
    return %c0_i32, %c0_i32_0 : i32, i32
  }
  func.func @transform_3(%arg0: i32, %arg1: i32) -> (i32, i32) {
    %c0_i32 = arith.constant 0 : i32
    %c0_i32_0 = arith.constant 0 : i32
    %c0_i32_1 = arith.constant 0 : i32
    return %c0_i32, %c0_i32_0 : i32, i32
  }
  func.func @transform_4(%arg0: i32, %arg1: i32) -> (i32, i32) {
    %c0_i32 = arith.constant 0 : i32
    %c0_i32_0 = arith.constant 0 : i32
    %c0_i32_1 = arith.constant 0 : i32
    return %c0_i32, %c0_i32_0 : i32, i32
  }
  func.func @transform_5(%arg0: i32, %arg1: i32) -> (i32, i32) {
    %c0_i32 = arith.constant 0 : i32
    %c0_i32_0 = arith.constant 0 : i32
    return %arg0, %c0_i32 : i32, i32
  }
}

</mosaic_0001>

<llo_original>
// kernel: tpu_custom_call.1
$region0: #{tpu_custom_call.1}
  #allocation0 [shape = 'u32[]', space=smem, size = 0x4, offset = 0x4, fixed_abs, tag = 'smem constant byte address 0x4 - core index']
  #allocation1 [shape = 'u32[144,128]{1,0:T(1,128)}', space=vmem, size = 0x12000, scoped, tag = 'internal scratch']
  #allocation2 [shape = 'f32[2,1024]{1,0:T(2,128)}', space=vmem, size = 0x2000, scoped, tag = 'scratch operand']
  %s0 = inlined_call_operand.vmem [shape: f32[2,256,4], index: 0, kind: input, shape index: {}]
  %s1 = inlined_call_operand.vmem [shape: f32[4,1024], index: 1, kind: input, shape index: {}]
  %s2 = inlined_call_operand.vmem [shape: f32[1,1024], index: 2, kind: input, shape index: {}]
  %s3 = inlined_call_operand.vmem [shape: f32[1024,5], index: 3, kind: input, shape index: {}]
  %s4 = inlined_call_operand.vmem [shape: f32[1,5], index: 4, kind: input, shape index: {}]
  %s5 = inlined_call_operand.hbm [shape: f32[2,5], index: 5, kind: output, shape index: {}]
  %s6 = sld [smem:[#allocation0]]
  $region99: #{tpu_custom_call.1} parent=0
    _
  %s8 = ssub.s32 1, %s6
  %s9 = scalar_select 0, %s8, %s6
  $region1: #{tpu_custom_call.1} parent=0
    #allocation3 [shape = 'u8[262144]{0}', space=vmem, size = 0x40000, scoped, tag = 'input window, operand 0']
    #allocation4 [shape = 'u8[1024]{0}', space=vmem, size = 0x400, scoped, tag = 'output window, operand 0, single buffered']
    #allocation5 [shape = 's32[2]{0}', space=sflag, size = 0x8, scoped, tag = 'scoped memory for tpu_custom_call.1']
    %10 = vsyncpa [#allocation5], 0
    loop: start=0, step=1, limit=4
    $region2: #{tpu_custom_call.1} parent=1 // loop_pre_header
      _
    $region3: #{tpu_custom_call.1} parent=1 // loop_header
      %s12 = sphi 0, %s16
      %p13 = scmp.ge.s32.totalorder %s12, 4
      %s19 = sphi 0, %s31
      %s20 = sphi 0, %s27
      %s21 = sphi 0, %s19
      %s22 = sphi 0, %s20
      %s23 = sphi 0, %s21
      %s24 = sphi 0, %s22
      %s36 = sphi 0, %s38
      %s39 = sphi 0, %s36
      %s40 = sphi 0, %s39
      %s56 = sphi 0, %s40
      %s60 = sphi 0, %s60
      %s62 = sphi 0, %s60
      %s63 = sphi 0, %s62
      %s77 = sphi 0, %s63
      %s81 = sphi 0, %s81
      %s83 = sphi 0, %s81
      %s84 = sphi 0, %s83
      %s98 = sphi 0, %s84
      %s102 = sphi 0, %s102
      %s104 = sphi 0, %s102
      %s105 = sphi 0, %s104
      %s119 = sphi 0, %s105
      %s123 = sphi 0, %s123
      %s125 = sphi 0, %s123
      %s126 = sphi 0, %s125
      %s140 = sphi 0, %s126
      %s146 = sphi 0, %s148
      %s149 = sphi 0, %s146
      %s150 = sphi 0, %s149
      %s166 = sphi 0, %s150
    $region4: #{tpu_custom_call.1} parent=1 // loop_header_branch
      %15 = sbr.rel (%p13) target = $region8
    $region5: #{tpu_custom_call.1} parent=1 // loop_body
      %s17 = ssub.s32 %s12, 1
      %s18 = ssub.s32 %s12, 2
      %s25 = sadd.s32 1, %s20
      %p26 = scmp.ge.s32.totalorder %s25, 2
      %s27 = scalar_select %p26, 0, %s25
      %s28 = sadd.s32 1, %s19
      %s29 = scalar_select %p26, %s28, %s19
      %p30 = scmp.ge.s32.totalorder %s29, 1
      %s31 = scalar_select %p30, 0, %s29
      %s32 = ssub.s32 %s19, %s31
      %s33 = ssub.s32 %s20, %s27
      %s34 = sor.u32 %s32, %s33
      %p35 = scmp.eq.s32.totalorder %s34, 0
      %s37 = sadd.s32 %s36, 1
      %s38 = scalar_select %p35, %s36, %s37
      %p41 = pneg %p35
      %p42 = scmp.eq.s32.totalorder %s12, 1
      %p43 = por %p41, %p42
      %p44 = scmp.ne.s32.totalorder %s36, %s39
      %p45 = scmp.eq.s32.totalorder %s12, 0
      %p46 = por %p44, %p45
      %p47 = scmp.ne.s32.totalorder %s36, %s39
      %p48 = scmp.eq.s32.totalorder %s17, 1
      %p49 = por %p47, %p48
      %p50 = scmp.ne.s32.totalorder %s39, %s40
      %p51 = scmp.eq.s32.totalorder %s17, 0
      %p52 = por %p50, %p51
      %p53 = scmp.ne.s32.totalorder %s39, %s40
      %p54 = scmp.eq.s32.totalorder %s18, 1
      %p55 = por %p53, %p54
      %p57 = scmp.ne.s32.totalorder %s40, %s56
      %p58 = scmp.eq.s32.totalorder %s18, 0
      %p59 = por %p57, %p58
      %s61 = sadd.s32 %s60, 1
      %p64 = scmp.eq.s32.totalorder %s12, 1
      %p65 = scmp.ne.s32.totalorder %s60, %s62
      %p66 = scmp.eq.s32.totalorder %s12, 0
      %p67 = por %p65, %p66
      %p68 = scmp.ne.s32.totalorder %s60, %s62
      %p69 = scmp.eq.s32.totalorder %s17, 1
      %p70 = por %p68, %p69
      %p71 = scmp.ne.s32.totalorder %s62, %s63
      %p72 = scmp.eq.s32.totalorder %s17, 0
      %p73 = por %p71, %p72
      %p74 = scmp.ne.s32.totalorder %s62, %s63
      %p75 = scmp.eq.s32.totalorder %s18, 1
      %p76 = por %p74, %p75
      %p78 = scmp.ne.s32.totalorder %s63, %s77
      %p79 = scmp.eq.s32.totalorder %s18, 0
      %p80 = por %p78, %p79
      %s82 = sadd.s32 %s81, 1
      %p85 = scmp.eq.s32.totalorder %s12, 1
      %p86 = scmp.ne.s32.totalorder %s81, %s83
      %p87 = scmp.eq.s32.totalorder %s12, 0
      %p88 = por %p86, %p87
      %p89 = scmp.ne.s32.totalorder %s81, %s83
      %p90 = scmp.eq.s32.totalorder %s17, 1
      %p91 = por %p89, %p90
      %p92 = scmp.ne.s32.totalorder %s83, %s84
      %p93 = scmp.eq.s32.totalorder %s17, 0
      %p94 = por %p92, %p93
      %p95 = scmp.ne.s32.totalorder %s83, %s84
      %p96 = scmp.eq.s32.totalorder %s18, 1
      %p97 = por %p95, %p96
      %p99 = scmp.ne.s32.totalorder %s84, %s98
      %p100 = scmp.eq.s32.totalorder %s18, 0
      %p101 = por %p99, %p100
      %s103 = sadd.s32 %s102, 1
      %p106 = scmp.eq.s32.totalorder %s12, 1
      %p107 = scmp.ne.s32.totalorder %s102, %s104
      %p108 = scmp.eq.s32.totalorder %s12, 0
      %p109 = por %p107, %p108
      %p110 = scmp.ne.s32.totalorder %s102, %s104
      %p111 = scmp.eq.s32.totalorder %s17, 1
      %p112 = por %p110, %p111
      %p113 = scmp.ne.s32.totalorder %s104, %s105
      %p114 = scmp.eq.s32.totalorder %s17, 0
      %p115 = por %p113, %p114
      %p116 = scmp.ne.s32.totalorder %s104, %s105
      %p117 = scmp.eq.s32.totalorder %s18, 1
      %p118 = por %p116, %p117
      %p120 = scmp.ne.s32.totalorder %s105, %s119
      %p121 = scmp.eq.s32.totalorder %s18, 0
      %p122 = por %p120, %p121
      %s124 = sadd.s32 %s123, 1
      %p127 = scmp.eq.s32.totalorder %s12, 1
      %p128 = scmp.ne.s32.totalorder %s123, %s125
      %p129 = scmp.eq.s32.totalorder %s12, 0
      %p130 = por %p128, %p129
      %p131 = scmp.ne.s32.totalorder %s123, %s125
      %p132 = scmp.eq.s32.totalorder %s17, 1
      %p133 = por %p131, %p132
      %p134 = scmp.ne.s32.totalorder %s125, %s126
      %p135 = scmp.eq.s32.totalorder %s17, 0
      %p136 = por %p134, %p135
      %p137 = scmp.ne.s32.totalorder %s125, %s126
      %p138 = scmp.eq.s32.totalorder %s18, 1
      %p139 = por %p137, %p138
      %p141 = scmp.ne.s32.totalorder %s126, %s140
      %p142 = scmp.eq.s32.totalorder %s18, 0
      %p143 = por %p141, %p142
      %s144 = ssub.s32 %s19, %s31
      %p145 = scmp.eq.s32.totalorder %s144, 0
      %s147 = sadd.s32 %s146, 1
      %s148 = scalar_select %p145, %s146, %s147
      %p151 = pneg %p145
      %p152 = scmp.eq.s32.totalorder %s12, 1
      %p153 = por %p151, %p152
      %p154 = scmp.ne.s32.totalorder %s146, %s149
      %p155 = scmp.eq.s32.totalorder %s12, 0
      %p156 = por %p154, %p155
      %p157 = scmp.ne.s32.totalorder %s146, %s149
      %p158 = scmp.eq.s32.totalorder %s17, 1
      %p159 = por %p157, %p158
      %p160 = scmp.ne.s32.totalorder %s149, %s150
      %p161 = scmp.eq.s32.totalorder %s17, 0
      %p162 = por %p160, %p161
      %p163 = scmp.ne.s32.totalorder %s149, %s150
      %p164 = scmp.eq.s32.totalorder %s18, 1
      %p165 = por %p163, %p164
      %p167 = scmp.ne.s32.totalorder %s150, %s166
      %p168 = scmp.eq.s32.totalorder %s18, 0
      %p169 = por %p167, %p168
      %p170 = scmp.le.s32.totalorder 1, %s12
      %p171 = scmp.lt.s32.totalorder %s12, 3
      %p172 = pnand %p170, %p171
      %p173 = pneg %p172
      // Predicated region
      $region9: #{tpu_custom_call.1} parent=5 // pred_check
        _
      $region10: #{tpu_custom_call.1} parent=5 // pred_check_branch
        %175 = sbr.rel (%p172) target = $region12
      $region11: #{tpu_custom_call.1} parent=5 // pred_region
        %s176 = ssub.s32 %s12, 1
        // Predicated region
        $region13: #{tpu_custom_call.1} parent=11 // pred_check
          %p177 = pneg %p73
        $region14: #{tpu_custom_call.1} parent=11 // pred_check_branch
          %179 = sbr.rel (%p177) target = $region16
        $region15: #{tpu_custom_call.1} parent=11 // pred_region
          _
        $region16: #{tpu_custom_call.1} parent=11 // pred_fallthru
          _
        // Predicated region
        $region17: #{tpu_custom_call.1} parent=11 // pred_check
          %p180 = pneg %p94
        $region18: #{tpu_custom_call.1} parent=11 // pred_check_branch
          %182 = sbr.rel (%p180) target = $region20
        $region19: #{tpu_custom_call.1} parent=11 // pred_region
          _
        $region20: #{tpu_custom_call.1} parent=11 // pred_fallthru
          _
        // Predicated region
        $region21: #{tpu_custom_call.1} parent=11 // pred_check
          %p183 = pneg %p115
        $region22: #{tpu_custom_call.1} parent=11 // pred_check_branch
          %185 = sbr.rel (%p183) target = $region24
        $region23: #{tpu_custom_call.1} parent=11 // pred_region
          _
        $region24: #{tpu_custom_call.1} parent=11 // pred_fallthru
          _
        // Predicated region
        $region25: #{tpu_custom_call.1} parent=11 // pred_check
          %p186 = pneg %p136
        $region26: #{tpu_custom_call.1} parent=11 // pred_check_branch
          %188 = sbr.rel (%p186) target = $region28
        $region27: #{tpu_custom_call.1} parent=11 // pred_region
          _
        $region28: #{tpu_custom_call.1} parent=11 // pred_fallthru
          _
      $region12: #{tpu_custom_call.1} parent=5 // pred_fallthru
        _
      %p189 = scmp.lt.s32.totalorder %s12, 2
      // Predicated region
      $region29: #{tpu_custom_call.1} parent=5 // pred_check
        %p190 = pneg %p189
      $region30: #{tpu_custom_call.1} parent=5 // pred_check_branch
        %192 = sbr.rel (%p190) target = $region32
      $region31: #{tpu_custom_call.1} parent=5 // pred_region
        // Predicated region
        $region33: #{tpu_custom_call.1} parent=31 // pred_check
          %p193 = pneg %p46
        $region34: #{tpu_custom_call.1} parent=31 // pred_check_branch
          %195 = sbr.rel (%p193) target = $region36
        $region35: #{tpu_custom_call.1} parent=31 // pred_region
          %s196 = sand.u32 %s36, 1
          %s197 = sand.u32 %s36, 1
          %s198 = smul.addr %s197, 256
          %s199 = scalar_lea.vmem [#allocation3], %s198
          %s200 = smul.u32 2, %s19
          %s201 = smul.u32 16, %s20
          %s202 = smul.addr %s200, 32
          %s203 = sadd.s32 %s201, %s202
          %s204 = smul.addr %s203, 8
          %s205 = scalar_lea.vmem %s0, %s204
          // Predicated region
          $region37: #{tpu_custom_call.1} parent=35 // pred_check
            _
          $region38: #{tpu_custom_call.1} parent=35 // pred_check_branch
            %207 = sbr.rel (0) target = $region40
          $region39: #{tpu_custom_call.1} parent=35 // pred_region
            // Predicated region
            $region41: #{tpu_custom_call.1} parent=39 // pred_check
              _
            $region42: #{tpu_custom_call.1} parent=39 // pred_check_branch
              %209 = sbr.rel (0) target = $region44
            $region43: #{tpu_custom_call.1} parent=39 // pred_region
              // Predicated region
              $region56: #{tpu_custom_call.1} parent=43 // pred_check
                _
              $region57: #{tpu_custom_call.1} parent=43 // pred_check_branch
                %286 = sbr.rel (0) target = $region59
              $region58: #{tpu_custom_call.1} parent=43 // pred_region
                loop: start=0, step=1, limit=1
                $region60: #{tpu_custom_call.1} parent=58 // loop_pre_header
                  _
                $region61: #{tpu_custom_call.1} parent=58 // loop_header
                  %s288 = sphi 0, %s292
                  %p289 = scmp.ge.s32.totalorder %s288, 1
                  %s293 = sphi %s205, %s205
                  %s294 = sphi %s199, %s199
                $region62: #{tpu_custom_call.1} parent=58 // loop_header_branch
                  %291 = sbr.rel (%p289) target = $region66
                $region63: #{tpu_custom_call.1} parent=58 // loop_body
                  %v295 = vld [vmem:[%s293] sm:$0xff]
                  %296 = vst [vmem:[%s294] sm:$0xff] %v295
                  %v297 = vld [vmem:[%s293 + $0x8] sm:$0xff]
                  %298 = vst [vmem:[%s294 + $0x8] sm:$0xff] %v297
                  %v299 = vld [vmem:[%s293 + $0x10] sm:$0xff]
                  %300 = vst [vmem:[%s294 + $0x10] sm:$0xff] %v299
                  %v301 = vld [vmem:[%s293 + $0x18] sm:$0xff]
                  %302 = vst [vmem:[%s294 + $0x18] sm:$0xff] %v301
                  %v303 = vld [vmem:[%s293 + $0x20] sm:$0xff]
                  %304 = vst [vmem:[%s294 + $0x20] sm:$0xff] %v303
                  %v305 = vld [vmem:[%s293 + $0x28] sm:$0xff]
                  %306 = vst [vmem:[%s294 + $0x28] sm:$0xff] %v305
                  %v307 = vld [vmem:[%s293 + $0x30] sm:$0xff]
                  %308 = vst [vmem:[%s294 + $0x30] sm:$0xff] %v307
                  %v309 = vld [vmem:[%s293 + $0x38] sm:$0xff]
                  %310 = vst [vmem:[%s294 + $0x38] sm:$0xff] %v309
                  %v311 = vld [vmem:[%s293 + $0x40] sm:$0xff]
                  %312 = vst [vmem:[%s294 + $0x40] sm:$0xff] %v311
                  %v313 = vld [vmem:[%s293 + $0x48] sm:$0xff]
                  %314 = vst [vmem:[%s294 + $0x48] sm:$0xff] %v313
                  %v315 = vld [vmem:[%s293 + $0x50] sm:$0xff]
                  %316 = vst [vmem:[%s294 + $0x50] sm:$0xff] %v315
                  %v317 = vld [vmem:[%s293 + $0x58] sm:$0xff]
                  %318 = vst [vmem:[%s294 + $0x58] sm:$0xff] %v317
                  %v319 = vld [vmem:[%s293 + $0x60] sm:$0xff]
                  %320 = vst [vmem:[%s294 + $0x60] sm:$0xff] %v319
                  %v321 = vld [vmem:[%s293 + $0x68] sm:$0xff]
                  %322 = vst [vmem:[%s294 + $0x68] sm:$0xff] %v321
                  %v323 = vld [vmem:[%s293 + $0x70] sm:$0xff]
                  %324 = vst [vmem:[%s294 + $0x70] sm:$0xff] %v323
                  %v325 = vld [vmem:[%s293 + $0x78] sm:$0xff]
                  %326 = vst [vmem:[%s294 + $0x78] sm:$0xff] %v325
                  %v327 = vld [vmem:[%s293 + $0x100] sm:$0xff]
                  %328 = vst [vmem:[%s294 + $0x80] sm:$0xff] %v327
                  %v329 = vld [vmem:[%s293 + $0x108] sm:$0xff]
                  %330 = vst [vmem:[%s294 + $0x88] sm:$0xff] %v329
                  %v331 = vld [vmem:[%s293 + $0x110] sm:$0xff]
                  %332 = vst [vmem:[%s294 + $0x90] sm:$0xff] %v331
                  %v333 = vld [vmem:[%s293 + $0x118] sm:$0xff]
                  %334 = vst [vmem:[%s294 + $0x98] sm:$0xff] %v333
                  %v335 = vld [vmem:[%s293 + $0x120] sm:$0xff]
                  %336 = vst [vmem:[%s294 + $0xa0] sm:$0xff] %v335
                  %v337 = vld [vmem:[%s293 + $0x128] sm:$0xff]
                  %338 = vst [vmem:[%s294 + $0xa8] sm:$0xff] %v337
                  %v339 = vld [vmem:[%s293 + $0x130] sm:$0xff]
                  %340 = vst [vmem:[%s294 + $0xb0] sm:$0xff] %v339
                  %v341 = vld [vmem:[%s293 + $0x138] sm:$0xff]
                  %342 = vst [vmem:[%s294 + $0xb8] sm:$0xff] %v341
                  %v343 = vld [vmem:[%s293 + $0x140] sm:$0xff]
                  %344 = vst [vmem:[%s294 + $0xc0] sm:$0xff] %v343
                  %v345 = vld [vmem:[%s293 + $0x148] sm:$0xff]
                  %346 = vst [vmem:[%s294 + $0xc8] sm:$0xff] %v345
                  %v347 = vld [vmem:[%s293 + $0x150] sm:$0xff]
                  %348 = vst [vmem:[%s294 + $0xd0] sm:$0xff] %v347
                  %v349 = vld [vmem:[%s293 + $0x158] sm:$0xff]
                  %350 = vst [vmem:[%s294 + $0xd8] sm:$0xff] %v349
                  %v351 = vld [vmem:[%s293 + $0x160] sm:$0xff]
                  %352 = vst [vmem:[%s294 + $0xe0] sm:$0xff] %v351
                  %v353 = vld [vmem:[%s293 + $0x168] sm:$0xff]
                  %354 = vst [vmem:[%s294 + $0xe8] sm:$0xff] %v353
                  %v355 = vld [vmem:[%s293 + $0x170] sm:$0xff]
                  %356 = vst [vmem:[%s294 + $0xf0] sm:$0xff] %v355
                  %v357 = vld [vmem:[%s293 + $0x178] sm:$0xff]
                  %358 = vst [vmem:[%s294 + $0xf8] sm:$0xff] %v357
                $region64: #{tpu_custom_call.1} parent=58 // loop_footer
                  %s292 = sadd.s32 1, %s288
                $region65: #{tpu_custom_call.1} parent=58 // loop_footer_branch
                  %287 = sbr.rel target = $region61
                $region66: #{tpu_custom_call.1} parent=58 // loop_exit
                  _
              $region59: #{tpu_custom_call.1} parent=43 // pred_fallthru
                _
              // Predicated region
              $region67: #{tpu_custom_call.1} parent=43 // pred_check
                _
              $region68: #{tpu_custom_call.1} parent=43 // pred_check_branch
                %360 = sbr.rel target = $region70
              $region69: #{tpu_custom_call.1} parent=43 // pred_region
                _
              $region70: #{tpu_custom_call.1} parent=43 // pred_fallthru
                _
            $region44: #{tpu_custom_call.1} parent=39 // pred_fallthru
              _
            // Predicated region
            $region45: #{tpu_custom_call.1} parent=39 // pred_check
              _
            $region46: #{tpu_custom_call.1} parent=39 // pred_check_branch
              %211 = sbr.rel target = $region48
            $region47: #{tpu_custom_call.1} parent=39 // pred_region
              loop: start=0, step=1, limit=1
              $region49: #{tpu_custom_call.1} parent=47 // loop_pre_header
                _
              $region50: #{tpu_custom_call.1} parent=47 // loop_header
                %s214 = sphi 0, %s218
                %p215 = scmp.ge.s32.totalorder %s214, 1
                %s219 = sphi %s205, %s205
                %s220 = sphi %s199, %s199
              $region51: #{tpu_custom_call.1} parent=47 // loop_header_branch
                %217 = sbr.rel (%p215) target = $region55
              $region52: #{tpu_custom_call.1} parent=47 // loop_body
                %v221 = vld [vmem:[%s219] sm:$0xff]
                %222 = vst [vmem:[%s220] sm:$0xff] %v221
                %v223 = vld [vmem:[%s219 + $0x8] sm:$0xff]
                %224 = vst [vmem:[%s220 + $0x8] sm:$0xff] %v223
                %v225 = vld [vmem:[%s219 + $0x10] sm:$0xff]
                %226 = vst [vmem:[%s220 + $0x10] sm:$0xff] %v225
                %v227 = vld [vmem:[%s219 + $0x18] sm:$0xff]
                %228 = vst [vmem:[%s220 + $0x18] sm:$0xff] %v227
                %v229 = vld [vmem:[%s219 + $0x20] sm:$0xff]
                %230 = vst [vmem:[%s220 + $0x20] sm:$0xff] %v229
                %v231 = vld [vmem:[%s219 + $0x28] sm:$0xff]
                %232 = vst [vmem:[%s220 + $0x28] sm:$0xff] %v231
                %v233 = vld [vmem:[%s219 + $0x30] sm:$0xff]
                %234 = vst [vmem:[%s220 + $0x30] sm:$0xff] %v233
                %v235 = vld [vmem:[%s219 + $0x38] sm:$0xff]
                %236 = vst [vmem:[%s220 + $0x38] sm:$0xff] %v235
                %v237 = vld [vmem:[%s219 + $0x40] sm:$0xff]
                %238 = vst [vmem:[%s220 + $0x40] sm:$0xff] %v237
                %v239 = vld [vmem:[%s219 + $0x48] sm:$0xff]
                %240 = vst [vmem:[%s220 + $0x48] sm:$0xff] %v239
                %v241 = vld [vmem:[%s219 + $0x50] sm:$0xff]
                %242 = vst [vmem:[%s220 + $0x50] sm:$0xff] %v241
                %v243 = vld [vmem:[%s219 + $0x58] sm:$0xff]
                %244 = vst [vmem:[%s220 + $0x58] sm:$0xff] %v243
                %v245 = vld [vmem:[%s219 + $0x60] sm:$0xff]
                %246 = vst [vmem:[%s220 + $0x60] sm:$0xff] %v245
                %v247 = vld [vmem:[%s219 + $0x68] sm:$0xff]
                %248 = vst [vmem:[%s220 + $0x68] sm:$0xff] %v247
                %v249 = vld [vmem:[%s219 + $0x70] sm:$0xff]
                %250 = vst [vmem:[%s220 + $0x70] sm:$0xff] %v249
                %v251 = vld [vmem:[%s219 + $0x78] sm:$0xff]
                %252 = vst [vmem:[%s220 + $0x78] sm:$0xff] %v251
                %v253 = vld [vmem:[%s219 + $0x100] sm:$0xff]
                %254 = vst [vmem:[%s220 + $0x80] sm:$0xff] %v253
                %v255 = vld [vmem:[%s219 + $0x108] sm:$0xff]
                %256 = vst [vmem:[%s220 + $0x88] sm:$0xff] %v255
                %v257 = vld [vmem:[%s219 + $0x110] sm:$0xff]
                %258 = vst [vmem:[%s220 + $0x90] sm:$0xff] %v257
                %v259 = vld [vmem:[%s219 + $0x118] sm:$0xff]
                %260 = vst [vmem:[%s220 + $0x98] sm:$0xff] %v259
                %v261 = vld [vmem:[%s219 + $0x120] sm:$0xff]
                %262 = vst [vmem:[%s220 + $0xa0] sm:$0xff] %v261
                %v263 = vld [vmem:[%s219 + $0x128] sm:$0xff]
                %264 = vst [vmem:[%s220 + $0xa8] sm:$0xff] %v263
                %v265 = vld [vmem:[%s219 + $0x130] sm:$0xff]
                %266 = vst [vmem:[%s220 + $0xb0] sm:$0xff] %v265
                %v267 = vld [vmem:[%s219 + $0x138] sm:$0xff]
                %268 = vst [vmem:[%s220 + $0xb8] sm:$0xff] %v267
                %v269 = vld [vmem:[%s219 + $0x140] sm:$0xff]
                %270 = vst [vmem:[%s220 + $0xc0] sm:$0xff] %v269
                %v271 = vld [vmem:[%s219 + $0x148] sm:$0xff]
                %272 = vst [vmem:[%s220 + $0xc8] sm:$0xff] %v271
                %v273 = vld [vmem:[%s219 + $0x150] sm:$0xff]
                %274 = vst [vmem:[%s220 + $0xd0] sm:$0xff] %v273
                %v275 = vld [vmem:[%s219 + $0x158] sm:$0xff]
                %276 = vst [vmem:[%s220 + $0xd8] sm:$0xff] %v275
                %v277 = vld [vmem:[%s219 + $0x160] sm:$0xff]
                %278 = vst [vmem:[%s220 + $0xe0] sm:$0xff] %v277
                %v279 = vld [vmem:[%s219 + $0x168] sm:$0xff]
                %280 = vst [vmem:[%s220 + $0xe8] sm:$0xff] %v279
                %v281 = vld [vmem:[%s219 + $0x170] sm:$0xff]
                %282 = vst [vmem:[%s220 + $0xf0] sm:$0xff] %v281
                %v283 = vld [vmem:[%s219 + $0x178] sm:$0xff]
                %284 = vst [vmem:[%s220 + $0xf8] sm:$0xff] %v283
              $region53: #{tpu_custom_call.1} parent=47 // loop_footer
                %s218 = sadd.s32 1, %s214
              $region54: #{tpu_custom_call.1} parent=47 // loop_footer_branch
                %213 = sbr.rel target = $region50
              $region55: #{tpu_custom_call.1} parent=47 // loop_exit
                _
            $region48: #{tpu_custom_call.1} parent=39 // pred_fallthru
              _
          $region40: #{tpu_custom_call.1} parent=35 // pred_fallthru
            _
          %361 = vnop
        $region36: #{tpu_custom_call.1} parent=31 // pred_fallthru
          _
      $region32: #{tpu_custom_call.1} parent=5 // pred_fallthru
        _
      %p362 = scmp.le.s32.totalorder 1, %s12
      %p363 = scmp.lt.s32.totalorder %s12, 3
      %p364 = pnand %p362, %p363
      %p365 = pneg %p364
      // Predicated region
      $region71: #{tpu_custom_call.1} parent=5 // pred_check
        _
      $region72: #{tpu_custom_call.1} parent=5 // pred_check_branch
        %367 = sbr.rel (%p364) target = $region74
      $region73: #{tpu_custom_call.1} parent=5 // pred_region
        %s368 = ssub.s32 %s12, 1
        %s369 = sand.u32 %s39, 1
        %s370 = sand.u32 %s39, 1
        %s371 = smul.addr %s370, 256
        %s372 = scalar_lea.vmem [#allocation3], %s371
        // Predicated region
        $region75: #{tpu_custom_call.1} parent=73 // pred_check
          %p373 = pneg %p52
        $region76: #{tpu_custom_call.1} parent=73 // pred_check_branch
          %375 = sbr.rel (%p373) target = $region78
        $region77: #{tpu_custom_call.1} parent=73 // pred_region
          _
        $region78: #{tpu_custom_call.1} parent=73 // pred_fallthru
          _
        %s376 = sand.u32 %s39, 1
        %s377 = sand.u32 %s39, 1
        %s378 = smul.addr %s377, 256
        %s379 = scalar_lea.vmem [#allocation3], %s378
        %p380 = pneg %p52
        %p381 = pneg %p49
        %p382 = pneg %p73
        %p383 = pneg %p70
        %p384 = pneg %p94
        %p385 = pneg %p91
        %p386 = pneg %p115
        %p387 = pneg %p112
        %p388 = pneg %p136
        %p389 = pneg %p133
        %p390 = pneg %p162
        %p391 = pneg %p159
        %s392 = smul.u32 2, %s21
        %s393 = smul.u32 16, %s22
        %p394 = scmp.eq.s32.totalorder %s22, 0
        // Predicated region
        $region79: #{tpu_custom_call.1} parent=73 // pred_check
          %p395 = pneg %p394
        $region80: #{tpu_custom_call.1} parent=73 // pred_check_branch
          %397 = sbr.rel (%p395) target = $region82
        $region81: #{tpu_custom_call.1} parent=73 // pred_region
          %398 = vst [vmem:[#allocation2] sm:$0xff] 0.0
          %399 = vst [vmem:[#allocation2 + $0x8] sm:$0xff] 0.0
        $region82: #{tpu_custom_call.1} parent=73 // pred_fallthru
          _
        %v400 = vld [vmem:[%s372] sm:$0xff]
        %v401 = vld [vmem:[%s372 + $0x8] sm:$0xff]
        %v402 = vld [vmem:[%s372 + $0x10] sm:$0xff]
        %v403 = vld [vmem:[%s372 + $0x18] sm:$0xff]
        %v404 = vld [vmem:[%s372 + $0x20] sm:$0xff]
        %v405 = vld [vmem:[%s372 + $0x28] sm:$0xff]
        %v406 = vld [vmem:[%s372 + $0x30] sm:$0xff]
        %v407 = vld [vmem:[%s372 + $0x38] sm:$0xff]
        %v408 = vld [vmem:[%s372 + $0x40] sm:$0xff]
        %v409 = vld [vmem:[%s372 + $0x48] sm:$0xff]
        %v410 = vld [vmem:[%s372 + $0x50] sm:$0xff]
        %v411 = vld [vmem:[%s372 + $0x58] sm:$0xff]
        %v412 = vld [vmem:[%s372 + $0x60] sm:$0xff]
        %v413 = vld [vmem:[%s372 + $0x68] sm:$0xff]
        %v414 = vld [vmem:[%s372 + $0x70] sm:$0xff]
        %v415 = vld [vmem:[%s372 + $0x78] sm:$0xff]
        %v416 = vld [vmem:[%s372 + $0x80] sm:$0xff]
        %v417 = vld [vmem:[%s372 + $0x88] sm:$0xff]
        %v418 = vld [vmem:[%s372 + $0x90] sm:$0xff]
        %v419 = vld [vmem:[%s372 + $0x98] sm:$0xff]
        %v420 = vld [vmem:[%s372 + $0xa0] sm:$0xff]
        %v421 = vld [vmem:[%s372 + $0xa8] sm:$0xff]
        %v422 = vld [vmem:[%s372 + $0xb0] sm:$0xff]
        %v423 = vld [vmem:[%s372 + $0xb8] sm:$0xff]
        %v424 = vld [vmem:[%s372 + $0xc0] sm:$0xff]
        %v425 = vld [vmem:[%s372 + $0xc8] sm:$0xff]
        %v426 = vld [vmem:[%s372 + $0xd0] sm:$0xff]
        %v427 = vld [vmem:[%s372 + $0xd8] sm:$0xff]
        %v428 = vld [vmem:[%s372 + $0xe0] sm:$0xff]
        %v429 = vld [vmem:[%s372 + $0xe8] sm:$0xff]
        %v430 = vld [vmem:[%s372 + $0xf0] sm:$0xff]
        %v431 = vld [vmem:[%s372 + $0xf8] sm:$0xff]
        %v432 = vld [vmem:[%s2] sm:$0xff]
        %v433 = vld [vmem:[%s1] sm:$0xff]
        %v434 = vld [vmem:[%s1 + $0x8] sm:$0xff]
        %v435 = vld [vmem:[%s1 + $0x10] sm:$0xff]
        %v436 = vld [vmem:[%s1 + $0x18] sm:$0xff]
        %438 = vset.pattern.permute.xlu0 0
        %439 = vperm.xlu0 %438, %v400
        %v440 = vpop.permute.xlu0 %439
        %443 = vset.pattern.permute.xlu0 0
        %444 = vperm.xlu0 %443, %v401
        %v445 = vpop.permute.xlu0 %444
        %448 = vset.pattern.permute.xlu0 0
        %449 = vperm.xlu0 %448, %v402
        %v450 = vpop.permute.xlu0 %449
        %453 = vset.pattern.permute.xlu0 0
        %454 = vperm.xlu0 %453, %v403
        %v455 = vpop.permute.xlu0 %454
        %458 = vset.pattern.permute.xlu0 0
        %459 = vperm.xlu0 %458, %v404
        %v460 = vpop.permute.xlu0 %459
        %463 = vset.pattern.permute.xlu0 0
        %464 = vperm.xlu0 %463, %v405
        %v465 = vpop.permute.xlu0 %464
        %468 = vset.pattern.permute.xlu0 0
        %469 = vperm.xlu0 %468, %v406
        %v470 = vpop.permute.xlu0 %469
        %473 = vset.pattern.permute.xlu0 0
        %474 = vperm.xlu0 %473, %v407
        %v475 = vpop.permute.xlu0 %474
        %478 = vset.pattern.permute.xlu0 0
        %479 = vperm.xlu0 %478, %v408
        %v480 = vpop.permute.xlu0 %479
        %483 = vset.pattern.permute.xlu0 0
        %484 = vperm.xlu0 %483, %v409
        %v485 = vpop.permute.xlu0 %484
        %488 = vset.pattern.permute.xlu0 0
        %489 = vperm.xlu0 %488, %v410
        %v490 = vpop.permute.xlu0 %489
        %493 = vset.pattern.permute.xlu0 0
        %494 = vperm.xlu0 %493, %v411
        %v495 = vpop.permute.xlu0 %494
        %498 = vset.pattern.permute.xlu0 0
        %499 = vperm.xlu0 %498, %v412
        %v500 = vpop.permute.xlu0 %499
        %503 = vset.pattern.permute.xlu0 0
        %504 = vperm.xlu0 %503, %v413
        %v505 = vpop.permute.xlu0 %504
        %508 = vset.pattern.permute.xlu0 0
        %509 = vperm.xlu0 %508, %v414
        %v510 = vpop.permute.xlu0 %509
        %513 = vset.pattern.permute.xlu0 0
        %514 = vperm.xlu0 %513, %v415
        %v515 = vpop.permute.xlu0 %514
        %518 = vset.pattern.permute.xlu0 0
        %519 = vperm.xlu0 %518, %v416
        %v520 = vpop.permute.xlu0 %519
        %523 = vset.pattern.permute.xlu0 0
        %524 = vperm.xlu0 %523, %v417
        %v525 = vpop.permute.xlu0 %524
        %528 = vset.pattern.permute.xlu0 0
        %529 = vperm.xlu0 %528, %v418
        %v530 = vpop.permute.xlu0 %529
        %533 = vset.pattern.permute.xlu0 0
        %534 = vperm.xlu0 %533, %v419
        %v535 = vpop.permute.xlu0 %534
        %538 = vset.pattern.permute.xlu0 0
        %539 = vperm.xlu0 %538, %v420
        %v540 = vpop.permute.xlu0 %539
        %543 = vset.pattern.permute.xlu0 0
        %544 = vperm.xlu0 %543, %v421
        %v545 = vpop.permute.xlu0 %544
        %548 = vset.pattern.permute.xlu0 0
        %549 = vperm.xlu0 %548, %v422
        %v550 = vpop.permute.xlu0 %549
        %553 = vset.pattern.permute.xlu0 0
        %554 = vperm.xlu0 %553, %v423
        %v555 = vpop.permute.xlu0 %554
        %558 = vset.pattern.permute.xlu0 0
        %559 = vperm.xlu0 %558, %v424
        %v560 = vpop.permute.xlu0 %559
        %563 = vset.pattern.permute.xlu0 0
        %564 = vperm.xlu0 %563, %v425
        %v565 = vpop.permute.xlu0 %564
        %568 = vset.pattern.permute.xlu0 0
        %569 = vperm.xlu0 %568, %v426
        %v570 = vpop.permute.xlu0 %569
        %573 = vset.pattern.permute.xlu0 0
        %574 = vperm.xlu0 %573, %v427
        %v575 = vpop.permute.xlu0 %574
        %578 = vset.pattern.permute.xlu0 0
        %579 = vperm.xlu0 %578, %v428
        %v580 = vpop.permute.xlu0 %579
        %583 = vset.pattern.permute.xlu0 0
        %584 = vperm.xlu0 %583, %v429
        %v585 = vpop.permute.xlu0 %584
        %588 = vset.pattern.permute.xlu0 0
        %589 = vperm.xlu0 %588, %v430
        %v590 = vpop.permute.xlu0 %589
        %593 = vset.pattern.permute.xlu0 0
        %594 = vperm.xlu0 %593, %v431
        %v595 = vpop.permute.xlu0 %594
        %v601 = vlaneseq
        %v602 = vshrl.u32 %v601, 7
        %v603 = vsub.s32 0, %v602
        %v604 = vrot.slane %v433, %v603
        %v605 = vlaneseq
        %v606 = vshrl.u32 %v605, 7
        %v607 = vsub.s32 4, %v606
        %v608 = vrot.slane %v433, %v607
        %v609 = vlaneseq
        %v610 = vshrl.u32 %v609, 7
        %v611 = vsub.s32 0, %v610
        %v612 = vrot.slane %v434, %v611
        %v613 = vlaneseq
        %v614 = vshrl.u32 %v613, 7
        %v615 = vsub.s32 4, %v614
        %v616 = vrot.slane %v434, %v615
        %v617 = vlaneseq
        %v618 = vshrl.u32 %v617, 7
        %v619 = vsub.s32 0, %v618
        %v620 = vrot.slane %v435, %v619
        %v621 = vlaneseq
        %v622 = vshrl.u32 %v621, 7
        %v623 = vsub.s32 4, %v622
        %v624 = vrot.slane %v435, %v623
        %v625 = vlaneseq
        %v626 = vshrl.u32 %v625, 7
        %v627 = vsub.s32 0, %v626
        %v628 = vrot.slane %v436, %v627
        %v629 = vlaneseq
        %v630 = vshrl.u32 %v629, 7
        %v631 = vsub.s32 4, %v630
        %v632 = vrot.slane %v436, %v631
        %v641 = vlaneseq
        %v642 = vshrl.u32 %v641, 7
        %v643 = vsub.s32 0, %v642
        %v644 = vrot.slane %v604, %v643
        %v645 = vlaneseq
        %v646 = vshrl.u32 %v645, 7
        %v647 = vsub.s32 0, %v646
        %v648 = vrot.slane %v608, %v647
        %v649 = vlaneseq
        %v650 = vshrl.u32 %v649, 7
        %v651 = vsub.s32 0, %v650
        %v652 = vrot.slane %v612, %v651
        %v653 = vlaneseq
        %v654 = vshrl.u32 %v653, 7
        %v655 = vsub.s32 0, %v654
        %v656 = vrot.slane %v616, %v655
        %v657 = vlaneseq
        %v658 = vshrl.u32 %v657, 7
        %v659 = vsub.s32 0, %v658
        %v660 = vrot.slane %v620, %v659
        %v661 = vlaneseq
        %v662 = vshrl.u32 %v661, 7
        %v663 = vsub.s32 0, %v662
        %v664 = vrot.slane %v624, %v663
        %v665 = vlaneseq
        %v666 = vshrl.u32 %v665, 7
        %v667 = vsub.s32 0, %v666
        %v668 = vrot.slane %v628, %v667
        %v669 = vlaneseq
        %v670 = vshrl.u32 %v669, 7
        %v671 = vsub.s32 0, %v670
        %v672 = vrot.slane %v632, %v671
        %v673 = vmul.f32 %v440, %v644
        %v674 = vmul.f32 %v440, %v648
        %v675 = vmul.f32 %v440, %v652
        %v676 = vmul.f32 %v440, %v656
        %v677 = vmul.f32 %v440, %v660
        %v678 = vmul.f32 %v440, %v664
        %v679 = vmul.f32 %v440, %v668
        %v680 = vmul.f32 %v440, %v672
        %v681 = vmul.f32 %v445, %v644
        %v682 = vmul.f32 %v445, %v648
        %v683 = vmul.f32 %v445, %v652
        %v684 = vmul.f32 %v445, %v656
        %v685 = vmul.f32 %v445, %v660
        %v686 = vmul.f32 %v445, %v664
        %v687 = vmul.f32 %v445, %v668
        %v688 = vmul.f32 %v445, %v672
        %v689 = vmul.f32 %v450, %v644
        %v690 = vmul.f32 %v450, %v648
        %v691 = vmul.f32 %v450, %v652
        %v692 = vmul.f32 %v450, %v656
        %v693 = vmul.f32 %v450, %v660
        %v694 = vmul.f32 %v450, %v664
        %v695 = vmul.f32 %v450, %v668
        %v696 = vmul.f32 %v450, %v672
        %v697 = vmul.f32 %v455, %v644
        %v698 = vmul.f32 %v455, %v648
        %v699 = vmul.f32 %v455, %v652
        %v700 = vmul.f32 %v455, %v656
        %v701 = vmul.f32 %v455, %v660
        %v702 = vmul.f32 %v455, %v664
        %v703 = vmul.f32 %v455, %v668
        %v704 = vmul.f32 %v455, %v672
        %v705 = vmul.f32 %v460, %v644
        %v706 = vmul.f32 %v460, %v648
        %v707 = vmul.f32 %v460, %v652
        %v708 = vmul.f32 %v460, %v656
        %v709 = vmul.f32 %v460, %v660
        %v710 = vmul.f32 %v460, %v664
        %v711 = vmul.f32 %v460, %v668
        %v712 = vmul.f32 %v460, %v672
        %v713 = vmul.f32 %v465, %v644
        %v714 = vmul.f32 %v465, %v648
        %v715 = vmul.f32 %v465, %v652
        %v716 = vmul.f32 %v465, %v656
        %v717 = vmul.f32 %v465, %v660
        %v718 = vmul.f32 %v465, %v664
        %v719 = vmul.f32 %v465, %v668
        %v720 = vmul.f32 %v465, %v672
        %v721 = vmul.f32 %v470, %v644
        %v722 = vmul.f32 %v470, %v648
        %v723 = vmul.f32 %v470, %v652
        %v724 = vmul.f32 %v470, %v656
        %v725 = vmul.f32 %v470, %v660
        %v726 = vmul.f32 %v470, %v664
        %v727 = vmul.f32 %v470, %v668
        %v728 = vmul.f32 %v470, %v672
        %v729 = vmul.f32 %v475, %v644
        %v730 = vmul.f32 %v475, %v648
        %v731 = vmul.f32 %v475, %v652
        %v732 = vmul.f32 %v475, %v656
        %v733 = vmul.f32 %v475, %v660
        %v734 = vmul.f32 %v475, %v664
        %v735 = vmul.f32 %v475, %v668
        %v736 = vmul.f32 %v475, %v672
        %v737 = vmul.f32 %v480, %v644
        %v738 = vmul.f32 %v480, %v648
        %v739 = vmul.f32 %v480, %v652
        %v740 = vmul.f32 %v480, %v656
        %v741 = vmul.f32 %v480, %v660
        %v742 = vmul.f32 %v480, %v664
        %v743 = vmul.f32 %v480, %v668
        %v744 = vmul.f32 %v480, %v672
        %v745 = vmul.f32 %v485, %v644
        %v746 = vmul.f32 %v485, %v648
        %v747 = vmul.f32 %v485, %v652
        %v748 = vmul.f32 %v485, %v656
        %v749 = vmul.f32 %v485, %v660
        %v750 = vmul.f32 %v485, %v664
        %v751 = vmul.f32 %v485, %v668
        %v752 = vmul.f32 %v485, %v672
        %v753 = vmul.f32 %v490, %v644
        %v754 = vmul.f32 %v490, %v648
        %v755 = vmul.f32 %v490, %v652
        %v756 = vmul.f32 %v490, %v656
        %v757 = vmul.f32 %v490, %v660
        %v758 = vmul.f32 %v490, %v664
        %v759 = vmul.f32 %v490, %v668
        %v760 = vmul.f32 %v490, %v672
        %v761 = vmul.f32 %v495, %v644
        %v762 = vmul.f32 %v495, %v648
        %v763 = vmul.f32 %v495, %v652
        %v764 = vmul.f32 %v495, %v656
        %v765 = vmul.f32 %v495, %v660
        %v766 = vmul.f32 %v495, %v664
        %v767 = vmul.f32 %v495, %v668
        %v768 = vmul.f32 %v495, %v672
        %v769 = vmul.f32 %v500, %v644
        %v770 = vmul.f32 %v500, %v648
        %v771 = vmul.f32 %v500, %v652
        %v772 = vmul.f32 %v500, %v656
        %v773 = vmul.f32 %v500, %v660
        %v774 = vmul.f32 %v500, %v664
        %v775 = vmul.f32 %v500, %v668
        %v776 = vmul.f32 %v500, %v672
        %v777 = vmul.f32 %v505, %v644
        %v778 = vmul.f32 %v505, %v648
        %v779 = vmul.f32 %v505, %v652
        %v780 = vmul.f32 %v505, %v656
        %v781 = vmul.f32 %v505, %v660
        %v782 = vmul.f32 %v505, %v664
        %v783 = vmul.f32 %v505, %v668
        %v784 = vmul.f32 %v505, %v672
        %v785 = vmul.f32 %v510, %v644
        %v786 = vmul.f32 %v510, %v648
        %v787 = vmul.f32 %v510, %v652
        %v788 = vmul.f32 %v510, %v656
        %v789 = vmul.f32 %v510, %v660
        %v790 = vmul.f32 %v510, %v664
        %v791 = vmul.f32 %v510, %v668
        %v792 = vmul.f32 %v510, %v672
        %v793 = vmul.f32 %v515, %v644
        %v794 = vmul.f32 %v515, %v648
        %v795 = vmul.f32 %v515, %v652
        %v796 = vmul.f32 %v515, %v656
        %v797 = vmul.f32 %v515, %v660
        %v798 = vmul.f32 %v515, %v664
        %v799 = vmul.f32 %v515, %v668
        %v800 = vmul.f32 %v515, %v672
        %v801 = vmul.f32 %v520, %v644
        %v802 = vmul.f32 %v520, %v648
        %v803 = vmul.f32 %v520, %v652
        %v804 = vmul.f32 %v520, %v656
        %v805 = vmul.f32 %v520, %v660
        %v806 = vmul.f32 %v520, %v664
        %v807 = vmul.f32 %v520, %v668
        %v808 = vmul.f32 %v520, %v672
        %v809 = vmul.f32 %v525, %v644
        %v810 = vmul.f32 %v525, %v648
        %v811 = vmul.f32 %v525, %v652
        %v812 = vmul.f32 %v525, %v656
        %v813 = vmul.f32 %v525, %v660
        %v814 = vmul.f32 %v525, %v664
        %v815 = vmul.f32 %v525, %v668
        %v816 = vmul.f32 %v525, %v672
        %v817 = vmul.f32 %v530, %v644
        %v818 = vmul.f32 %v530, %v648
        %v819 = vmul.f32 %v530, %v652
        %v820 = vmul.f32 %v530, %v656
        %v821 = vmul.f32 %v530, %v660
        %v822 = vmul.f32 %v530, %v664
        %v823 = vmul.f32 %v530, %v668
        %v824 = vmul.f32 %v530, %v672
        %v825 = vmul.f32 %v535, %v644
        %v826 = vmul.f32 %v535, %v648
        %v827 = vmul.f32 %v535, %v652
        %v828 = vmul.f32 %v535, %v656
        %v829 = vmul.f32 %v535, %v660
        %v830 = vmul.f32 %v535, %v664
        %v831 = vmul.f32 %v535, %v668
        %v832 = vmul.f32 %v535, %v672
        %v833 = vmul.f32 %v540, %v644
        %v834 = vmul.f32 %v540, %v648
        %v835 = vmul.f32 %v540, %v652
        %v836 = vmul.f32 %v540, %v656
        %v837 = vmul.f32 %v540, %v660
        %v838 = vmul.f32 %v540, %v664
        %v839 = vmul.f32 %v540, %v668
        %v840 = vmul.f32 %v540, %v672
        %v841 = vmul.f32 %v545, %v644
        %v842 = vmul.f32 %v545, %v648
        %v843 = vmul.f32 %v545, %v652
        %v844 = vmul.f32 %v545, %v656
        %v845 = vmul.f32 %v545, %v660
        %v846 = vmul.f32 %v545, %v664
        %v847 = vmul.f32 %v545, %v668
        %v848 = vmul.f32 %v545, %v672
        %v849 = vmul.f32 %v550, %v644
        %v850 = vmul.f32 %v550, %v648
        %v851 = vmul.f32 %v550, %v652
        %v852 = vmul.f32 %v550, %v656
        %v853 = vmul.f32 %v550, %v660
        %v854 = vmul.f32 %v550, %v664
        %v855 = vmul.f32 %v550, %v668
        %v856 = vmul.f32 %v550, %v672
        %v857 = vmul.f32 %v555, %v644
        %v858 = vmul.f32 %v555, %v648
        %v859 = vmul.f32 %v555, %v652
        %v860 = vmul.f32 %v555, %v656
        %v861 = vmul.f32 %v555, %v660
        %v862 = vmul.f32 %v555, %v664
        %v863 = vmul.f32 %v555, %v668
        %v864 = vmul.f32 %v555, %v672
        %v865 = vmul.f32 %v560, %v644
        %v866 = vmul.f32 %v560, %v648
        %v867 = vmul.f32 %v560, %v652
        %v868 = vmul.f32 %v560, %v656
        %v869 = vmul.f32 %v560, %v660
        %v870 = vmul.f32 %v560, %v664
        %v871 = vmul.f32 %v560, %v668
        %v872 = vmul.f32 %v560, %v672
        %v873 = vmul.f32 %v565, %v644
        %v874 = vmul.f32 %v565, %v648
        %v875 = vmul.f32 %v565, %v652
        %v876 = vmul.f32 %v565, %v656
        %v877 = vmul.f32 %v565, %v660
        %v878 = vmul.f32 %v565, %v664
        %v879 = vmul.f32 %v565, %v668
        %v880 = vmul.f32 %v565, %v672
        %v881 = vmul.f32 %v570, %v644
        %v882 = vmul.f32 %v570, %v648
        %v883 = vmul.f32 %v570, %v652
        %v884 = vmul.f32 %v570, %v656
        %v885 = vmul.f32 %v570, %v660
        %v886 = vmul.f32 %v570, %v664
        %v887 = vmul.f32 %v570, %v668
        %v888 = vmul.f32 %v570, %v672
        %v889 = vmul.f32 %v575, %v644
        %v890 = vmul.f32 %v575, %v648
        %v891 = vmul.f32 %v575, %v652
        %v892 = vmul.f32 %v575, %v656
        %v893 = vmul.f32 %v575, %v660
        %v894 = vmul.f32 %v575, %v664
        %v895 = vmul.f32 %v575, %v668
        %v896 = vmul.f32 %v575, %v672
        %v897 = vmul.f32 %v580, %v644
        %v898 = vmul.f32 %v580, %v648
        %v899 = vmul.f32 %v580, %v652
        %v900 = vmul.f32 %v580, %v656
        %v901 = vmul.f32 %v580, %v660
        %v902 = vmul.f32 %v580, %v664
        %v903 = vmul.f32 %v580, %v668
        %v904 = vmul.f32 %v580, %v672
        %v905 = vmul.f32 %v585, %v644
        %v906 = vmul.f32 %v585, %v648
        %v907 = vmul.f32 %v585, %v652
        %v908 = vmul.f32 %v585, %v656
        %v909 = vmul.f32 %v585, %v660
        %v910 = vmul.f32 %v585, %v664
        %v911 = vmul.f32 %v585, %v668
        %v912 = vmul.f32 %v585, %v672
        %v913 = vmul.f32 %v590, %v644
        %v914 = vmul.f32 %v590, %v648
        %v915 = vmul.f32 %v590, %v652
        %v916 = vmul.f32 %v590, %v656
        %v917 = vmul.f32 %v590, %v660
        %v918 = vmul.f32 %v590, %v664
        %v919 = vmul.f32 %v590, %v668
        %v920 = vmul.f32 %v590, %v672
        %v921 = vmul.f32 %v595, %v644
        %v922 = vmul.f32 %v595, %v648
        %v923 = vmul.f32 %v595, %v652
        %v924 = vmul.f32 %v595, %v656
        %v925 = vmul.f32 %v595, %v660
        %v926 = vmul.f32 %v595, %v664
        %v927 = vmul.f32 %v595, %v668
        %v928 = vmul.f32 %v595, %v672
        %929 = vset.pattern.permute.xlu0 1
        %930 = vperm.xlu0 %929, %v400
        %v931 = vpop.permute.xlu0 %930
        %933 = vset.pattern.permute.xlu0 1
        %934 = vperm.xlu0 %933, %v401
        %v935 = vpop.permute.xlu0 %934
        %937 = vset.pattern.permute.xlu0 1
        %938 = vperm.xlu0 %937, %v402
        %v939 = vpop.permute.xlu0 %938
        %941 = vset.pattern.permute.xlu0 1
        %942 = vperm.xlu0 %941, %v403
        %v943 = vpop.permute.xlu0 %942
        %945 = vset.pattern.permute.xlu0 1
        %946 = vperm.xlu0 %945, %v404
        %v947 = vpop.permute.xlu0 %946
        %949 = vset.pattern.permute.xlu0 1
        %950 = vperm.xlu0 %949, %v405
        %v951 = vpop.permute.xlu0 %950
        %953 = vset.pattern.permute.xlu0 1
        %954 = vperm.xlu0 %953, %v406
        %v955 = vpop.permute.xlu0 %954
        %957 = vset.pattern.permute.xlu0 1
        %958 = vperm.xlu0 %957, %v407
        %v959 = vpop.permute.xlu0 %958
        %961 = vset.pattern.permute.xlu0 1
        %962 = vperm.xlu0 %961, %v408
        %v963 = vpop.permute.xlu0 %962
        %965 = vset.pattern.permute.xlu0 1
        %966 = vperm.xlu0 %965, %v409
        %v967 = vpop.permute.xlu0 %966
        %969 = vset.pattern.permute.xlu0 1
        %970 = vperm.xlu0 %969, %v410
        %v971 = vpop.permute.xlu0 %970
        %973 = vset.pattern.permute.xlu0 1
        %974 = vperm.xlu0 %973, %v411
        %v975 = vpop.permute.xlu0 %974
        %977 = vset.pattern.permute.xlu0 1
        %978 = vperm.xlu0 %977, %v412
        %v979 = vpop.permute.xlu0 %978
        %981 = vset.pattern.permute.xlu0 1
        %982 = vperm.xlu0 %981, %v413
        %v983 = vpop.permute.xlu0 %982
        %985 = vset.pattern.permute.xlu0 1
        %986 = vperm.xlu0 %985, %v414
        %v987 = vpop.permute.xlu0 %986
        %989 = vset.pattern.permute.xlu0 1
        %990 = vperm.xlu0 %989, %v415
        %v991 = vpop.permute.xlu0 %990
        %993 = vset.pattern.permute.xlu0 1
        %994 = vperm.xlu0 %993, %v416
        %v995 = vpop.permute.xlu0 %994
        %997 = vset.pattern.permute.xlu0 1
        %998 = vperm.xlu0 %997, %v417
        %v999 = vpop.permute.xlu0 %998
        %1001 = vset.pattern.permute.xlu0 1
        %1002 = vperm.xlu0 %1001, %v418
        %v1003 = vpop.permute.xlu0 %1002
        %1005 = vset.pattern.permute.xlu0 1
        %1006 = vperm.xlu0 %1005, %v419
        %v1007 = vpop.permute.xlu0 %1006
        %1009 = vset.pattern.permute.xlu0 1
        %1010 = vperm.xlu0 %1009, %v420
        %v1011 = vpop.permute.xlu0 %1010
        %1013 = vset.pattern.permute.xlu0 1
        %1014 = vperm.xlu0 %1013, %v421
        %v1015 = vpop.permute.xlu0 %1014
        %1017 = vset.pattern.permute.xlu0 1
        %1018 = vperm.xlu0 %1017, %v422
        %v1019 = vpop.permute.xlu0 %1018
        %1021 = vset.pattern.permute.xlu0 1
        %1022 = vperm.xlu0 %1021, %v423
        %v1023 = vpop.permute.xlu0 %1022
        %1025 = vset.pattern.permute.xlu0 1
        %1026 = vperm.xlu0 %1025, %v424
        %v1027 = vpop.permute.xlu0 %1026
        %1029 = vset.pattern.permute.xlu0 1
        %1030 = vperm.xlu0 %1029, %v425
        %v1031 = vpop.permute.xlu0 %1030
        %1033 = vset.pattern.permute.xlu0 1
        %1034 = vperm.xlu0 %1033, %v426
        %v1035 = vpop.permute.xlu0 %1034
        %1037 = vset.pattern.permute.xlu0 1
        %1038 = vperm.xlu0 %1037, %v427
        %v1039 = vpop.permute.xlu0 %1038
        %1041 = vset.pattern.permute.xlu0 1
        %1042 = vperm.xlu0 %1041, %v428
        %v1043 = vpop.permute.xlu0 %1042
        %1045 = vset.pattern.permute.xlu0 1
        %1046 = vperm.xlu0 %1045, %v429
        %v1047 = vpop.permute.xlu0 %1046
        %1049 = vset.pattern.permute.xlu0 1
        %1050 = vperm.xlu0 %1049, %v430
        %v1051 = vpop.permute.xlu0 %1050
        %1053 = vset.pattern.permute.xlu0 1
        %1054 = vperm.xlu0 %1053, %v431
        %v1055 = vpop.permute.xlu0 %1054
        %v1057 = vlaneseq
        %v1058 = vshrl.u32 %v1057, 7
        %v1059 = vsub.s32 1, %v1058
        %v1060 = vrot.slane %v433, %v1059
        %v1061 = vlaneseq
        %v1062 = vshrl.u32 %v1061, 7
        %v1063 = vsub.s32 5, %v1062
        %v1064 = vrot.slane %v433, %v1063
        %v1065 = vlaneseq
        %v1066 = vshrl.u32 %v1065, 7
        %v1067 = vsub.s32 1, %v1066
        %v1068 = vrot.slane %v434, %v1067
        %v1069 = vlaneseq
        %v1070 = vshrl.u32 %v1069, 7
        %v1071 = vsub.s32 5, %v1070
        %v1072 = vrot.slane %v434, %v1071
        %v1073 = vlaneseq
        %v1074 = vshrl.u32 %v1073, 7
        %v1075 = vsub.s32 1, %v1074
        %v1076 = vrot.slane %v435, %v1075
        %v1077 = vlaneseq
        %v1078 = vshrl.u32 %v1077, 7
        %v1079 = vsub.s32 5, %v1078
        %v1080 = vrot.slane %v435, %v1079
        %v1081 = vlaneseq
        %v1082 = vshrl.u32 %v1081, 7
        %v1083 = vsub.s32 1, %v1082
        %v1084 = vrot.slane %v436, %v1083
        %v1085 = vlaneseq
        %v1086 = vshrl.u32 %v1085, 7
        %v1087 = vsub.s32 5, %v1086
        %v1088 = vrot.slane %v436, %v1087
        %v1097 = vlaneseq
        %v1098 = vshrl.u32 %v1097, 7
        %v1099 = vsub.s32 1, %v1098
        %v1100 = vrot.slane %v1060, %v1099
        %v1101 = vlaneseq
        %v1102 = vshrl.u32 %v1101, 7
        %v1103 = vsub.s32 1, %v1102
        %v1104 = vrot.slane %v1064, %v1103
        %v1105 = vlaneseq
        %v1106 = vshrl.u32 %v1105, 7
        %v1107 = vsub.s32 1, %v1106
        %v1108 = vrot.slane %v1068, %v1107
        %v1109 = vlaneseq
        %v1110 = vshrl.u32 %v1109, 7
        %v1111 = vsub.s32 1, %v1110
        %v1112 = vrot.slane %v1072, %v1111
        %v1113 = vlaneseq
        %v1114 = vshrl.u32 %v1113, 7
        %v1115 = vsub.s32 1, %v1114
        %v1116 = vrot.slane %v1076, %v1115
        %v1117 = vlaneseq
        %v1118 = vshrl.u32 %v1117, 7
        %v1119 = vsub.s32 1, %v1118
        %v1120 = vrot.slane %v1080, %v1119
        %v1121 = vlaneseq
        %v1122 = vshrl.u32 %v1121, 7
        %v1123 = vsub.s32 1, %v1122
        %v1124 = vrot.slane %v1084, %v1123
        %v1125 = vlaneseq
        %v1126 = vshrl.u32 %v1125, 7
        %v1127 = vsub.s32 1, %v1126
        %v1128 = vrot.slane %v1088, %v1127
        %v1129 = vmul.f32 %v931, %v1100
        %v1130 = vmul.f32 %v931, %v1104
        %v1131 = vmul.f32 %v931, %v1108
        %v1132 = vmul.f32 %v931, %v1112
        %v1133 = vmul.f32 %v931, %v1116
        %v1134 = vmul.f32 %v931, %v1120
        %v1135 = vmul.f32 %v931, %v1124
        %v1136 = vmul.f32 %v931, %v1128
        %v1137 = vmul.f32 %v935, %v1100
        %v1138 = vmul.f32 %v935, %v1104
        %v1139 = vmul.f32 %v935, %v1108
        %v1140 = vmul.f32 %v935, %v1112
        %v1141 = vmul.f32 %v935, %v1116
        %v1142 = vmul.f32 %v935, %v1120
        %v1143 = vmul.f32 %v935, %v1124
        %v1144 = vmul.f32 %v935, %v1128
        %v1145 = vmul.f32 %v939, %v1100
        %v1146 = vmul.f32 %v939, %v1104
        %v1147 = vmul.f32 %v939, %v1108
        %v1148 = vmul.f32 %v939, %v1112
        %v1149 = vmul.f32 %v939, %v1116
        %v1150 = vmul.f32 %v939, %v1120
        %v1151 = vmul.f32 %v939, %v1124
        %v1152 = vmul.f32 %v939, %v1128
        %v1153 = vmul.f32 %v943, %v1100
        %v1154 = vmul.f32 %v943, %v1104
        %v1155 = vmul.f32 %v943, %v1108
        %v1156 = vmul.f32 %v943, %v1112
        %v1157 = vmul.f32 %v943, %v1116
        %v1158 = vmul.f32 %v943, %v1120
        %v1159 = vmul.f32 %v943, %v1124
        %v1160 = vmul.f32 %v943, %v1128
        %v1161 = vmul.f32 %v947, %v1100
        %v1162 = vmul.f32 %v947, %v1104
        %v1163 = vmul.f32 %v947, %v1108
        %v1164 = vmul.f32 %v947, %v1112
        %v1165 = vmul.f32 %v947, %v1116
        %v1166 = vmul.f32 %v947, %v1120
        %v1167 = vmul.f32 %v947, %v1124
        %v1168 = vmul.f32 %v947, %v1128
        %v1169 = vmul.f32 %v951, %v1100
        %v1170 = vmul.f32 %v951, %v1104
        %v1171 = vmul.f32 %v951, %v1108
        %v1172 = vmul.f32 %v951, %v1112
        %v1173 = vmul.f32 %v951, %v1116
        %v1174 = vmul.f32 %v951, %v1120
        %v1175 = vmul.f32 %v951, %v1124
        %v1176 = vmul.f32 %v951, %v1128
        %v1177 = vmul.f32 %v955, %v1100
        %v1178 = vmul.f32 %v955, %v1104
        %v1179 = vmul.f32 %v955, %v1108
        %v1180 = vmul.f32 %v955, %v1112
        %v1181 = vmul.f32 %v955, %v1116
        %v1182 = vmul.f32 %v955, %v1120
        %v1183 = vmul.f32 %v955, %v1124
        %v1184 = vmul.f32 %v955, %v1128
        %v1185 = vmul.f32 %v959, %v1100
        %v1186 = vmul.f32 %v959, %v1104
        %v1187 = vmul.f32 %v959, %v1108
        %v1188 = vmul.f32 %v959, %v1112
        %v1189 = vmul.f32 %v959, %v1116
        %v1190 = vmul.f32 %v959, %v1120
        %v1191 = vmul.f32 %v959, %v1124
        %v1192 = vmul.f32 %v959, %v1128
        %v1193 = vmul.f32 %v963, %v1100
        %v1194 = vmul.f32 %v963, %v1104
        %v1195 = vmul.f32 %v963, %v1108
        %v1196 = vmul.f32 %v963, %v1112
        %v1197 = vmul.f32 %v963, %v1116
        %v1198 = vmul.f32 %v963, %v1120
        %v1199 = vmul.f32 %v963, %v1124
        %v1200 = vmul.f32 %v963, %v1128
        %v1201 = vmul.f32 %v967, %v1100
        %v1202 = vmul.f32 %v967, %v1104
        %v1203 = vmul.f32 %v967, %v1108
        %v1204 = vmul.f32 %v967, %v1112
        %v1205 = vmul.f32 %v967, %v1116
        %v1206 = vmul.f32 %v967, %v1120
        %v1207 = vmul.f32 %v967, %v1124
        %v1208 = vmul.f32 %v967, %v1128
        %v1209 = vmul.f32 %v971, %v1100
        %v1210 = vmul.f32 %v971, %v1104
        %v1211 = vmul.f32 %v971, %v1108
        %v1212 = vmul.f32 %v971, %v1112
        %v1213 = vmul.f32 %v971, %v1116
        %v1214 = vmul.f32 %v971, %v1120
        %v1215 = vmul.f32 %v971, %v1124
        %v1216 = vmul.f32 %v971, %v1128
        %v1217 = vmul.f32 %v975, %v1100
        %v1218 = vmul.f32 %v975, %v1104
        %v1219 = vmul.f32 %v975, %v1108
        %v1220 = vmul.f32 %v975, %v1112
        %v1221 = vmul.f32 %v975, %v1116
        %v1222 = vmul.f32 %v975, %v1120
        %v1223 = vmul.f32 %v975, %v1124
        %v1224 = vmul.f32 %v975, %v1128
        %v1225 = vmul.f32 %v979, %v1100
        %v1226 = vmul.f32 %v979, %v1104
        %v1227 = vmul.f32 %v979, %v1108
        %v1228 = vmul.f32 %v979, %v1112
        %v1229 = vmul.f32 %v979, %v1116
        %v1230 = vmul.f32 %v979, %v1120
        %v1231 = vmul.f32 %v979, %v1124
        %v1232 = vmul.f32 %v979, %v1128
        %v1233 = vmul.f32 %v983, %v1100
        %v1234 = vmul.f32 %v983, %v1104
        %v1235 = vmul.f32 %v983, %v1108
        %v1236 = vmul.f32 %v983, %v1112
        %v1237 = vmul.f32 %v983, %v1116
        %v1238 = vmul.f32 %v983, %v1120
        %v1239 = vmul.f32 %v983, %v1124
        %v1240 = vmul.f32 %v983, %v1128
        %v1241 = vmul.f32 %v987, %v1100
        %v1242 = vmul.f32 %v987, %v1104
        %v1243 = vmul.f32 %v987, %v1108
        %v1244 = vmul.f32 %v987, %v1112
        %v1245 = vmul.f32 %v987, %v1116
        %v1246 = vmul.f32 %v987, %v1120
        %v1247 = vmul.f32 %v987, %v1124
        %v1248 = vmul.f32 %v987, %v1128
        %v1249 = vmul.f32 %v991, %v1100
        %v1250 = vmul.f32 %v991, %v1104
        %v1251 = vmul.f32 %v991, %v1108
        %v1252 = vmul.f32 %v991, %v1112
        %v1253 = vmul.f32 %v991, %v1116
        %v1254 = vmul.f32 %v991, %v1120
        %v1255 = vmul.f32 %v991, %v1124
        %v1256 = vmul.f32 %v991, %v1128
        %v1257 = vmul.f32 %v995, %v1100
        %v1258 = vmul.f32 %v995, %v1104
        %v1259 = vmul.f32 %v995, %v1108
        %v1260 = vmul.f32 %v995, %v1112
        %v1261 = vmul.f32 %v995, %v1116
        %v1262 = vmul.f32 %v995, %v1120
        %v1263 = vmul.f32 %v995, %v1124
        %v1264 = vmul.f32 %v995, %v1128
        %v1265 = vmul.f32 %v999, %v1100
        %v1266 = vmul.f32 %v999, %v1104
        %v1267 = vmul.f32 %v999, %v1108
        %v1268 = vmul.f32 %v999, %v1112
        %v1269 = vmul.f32 %v999, %v1116
        %v1270 = vmul.f32 %v999, %v1120
        %v1271 = vmul.f32 %v999, %v1124
        %v1272 = vmul.f32 %v999, %v1128
        %v1273 = vmul.f32 %v1003, %v1100
        %v1274 = vmul.f32 %v1003, %v1104
        %v1275 = vmul.f32 %v1003, %v1108
        %v1276 = vmul.f32 %v1003, %v1112
        %v1277 = vmul.f32 %v1003, %v1116
        %v1278 = vmul.f32 %v1003, %v1120
        %v1279 = vmul.f32 %v1003, %v1124
        %v1280 = vmul.f32 %v1003, %v1128
        %v1281 = vmul.f32 %v1007, %v1100
        %v1282 = vmul.f32 %v1007, %v1104
        %v1283 = vmul.f32 %v1007, %v1108
        %v1284 = vmul.f32 %v1007, %v1112
        %v1285 = vmul.f32 %v1007, %v1116
        %v1286 = vmul.f32 %v1007, %v1120
        %v1287 = vmul.f32 %v1007, %v1124
        %v1288 = vmul.f32 %v1007, %v1128
        %v1289 = vmul.f32 %v1011, %v1100
        %v1290 = vmul.f32 %v1011, %v1104
        %v1291 = vmul.f32 %v1011, %v1108
        %v1292 = vmul.f32 %v1011, %v1112
        %v1293 = vmul.f32 %v1011, %v1116
        %v1294 = vmul.f32 %v1011, %v1120
        %v1295 = vmul.f32 %v1011, %v1124
        %v1296 = vmul.f32 %v1011, %v1128
        %v1297 = vmul.f32 %v1015, %v1100
        %v1298 = vmul.f32 %v1015, %v1104
        %v1299 = vmul.f32 %v1015, %v1108
        %v1300 = vmul.f32 %v1015, %v1112
        %v1301 = vmul.f32 %v1015, %v1116
        %v1302 = vmul.f32 %v1015, %v1120
        %v1303 = vmul.f32 %v1015, %v1124
        %v1304 = vmul.f32 %v1015, %v1128
        %v1305 = vmul.f32 %v1019, %v1100
        %v1306 = vmul.f32 %v1019, %v1104
        %v1307 = vmul.f32 %v1019, %v1108
        %v1308 = vmul.f32 %v1019, %v1112
        %v1309 = vmul.f32 %v1019, %v1116
        %v1310 = vmul.f32 %v1019, %v1120
        %v1311 = vmul.f32 %v1019, %v1124
        %v1312 = vmul.f32 %v1019, %v1128
        %v1313 = vmul.f32 %v1023, %v1100
        %v1314 = vmul.f32 %v1023, %v1104
        %v1315 = vmul.f32 %v1023, %v1108
        %v1316 = vmul.f32 %v1023, %v1112
        %v1317 = vmul.f32 %v1023, %v1116
        %v1318 = vmul.f32 %v1023, %v1120
        %v1319 = vmul.f32 %v1023, %v1124
        %v1320 = vmul.f32 %v1023, %v1128
        %v1321 = vmul.f32 %v1027, %v1100
        %v1322 = vmul.f32 %v1027, %v1104
        %v1323 = vmul.f32 %v1027, %v1108
        %v1324 = vmul.f32 %v1027, %v1112
        %v1325 = vmul.f32 %v1027, %v1116
        %v1326 = vmul.f32 %v1027, %v1120
        %v1327 = vmul.f32 %v1027, %v1124
        %v1328 = vmul.f32 %v1027, %v1128
        %v1329 = vmul.f32 %v1031, %v1100
        %v1330 = vmul.f32 %v1031, %v1104
        %v1331 = vmul.f32 %v1031, %v1108
        %v1332 = vmul.f32 %v1031, %v1112
        %v1333 = vmul.f32 %v1031, %v1116
        %v1334 = vmul.f32 %v1031, %v1120
        %v1335 = vmul.f32 %v1031, %v1124
        %v1336 = vmul.f32 %v1031, %v1128
        %v1337 = vmul.f32 %v1035, %v1100
        %v1338 = vmul.f32 %v1035, %v1104
        %v1339 = vmul.f32 %v1035, %v1108
        %v1340 = vmul.f32 %v1035, %v1112
        %v1341 = vmul.f32 %v1035, %v1116
        %v1342 = vmul.f32 %v1035, %v1120
        %v1343 = vmul.f32 %v1035, %v1124
        %v1344 = vmul.f32 %v1035, %v1128
        %v1345 = vmul.f32 %v1039, %v1100
        %v1346 = vmul.f32 %v1039, %v1104
        %v1347 = vmul.f32 %v1039, %v1108
        %v1348 = vmul.f32 %v1039, %v1112
        %v1349 = vmul.f32 %v1039, %v1116
        %v1350 = vmul.f32 %v1039, %v1120
        %v1351 = vmul.f32 %v1039, %v1124
        %v1352 = vmul.f32 %v1039, %v1128
        %v1353 = vmul.f32 %v1043, %v1100
        %v1354 = vmul.f32 %v1043, %v1104
        %v1355 = vmul.f32 %v1043, %v1108
        %v1356 = vmul.f32 %v1043, %v1112
        %v1357 = vmul.f32 %v1043, %v1116
        %v1358 = vmul.f32 %v1043, %v1120
        %v1359 = vmul.f32 %v1043, %v1124
        %v1360 = vmul.f32 %v1043, %v1128
        %v1361 = vmul.f32 %v1047, %v1100
        %v1362 = vmul.f32 %v1047, %v1104
        %v1363 = vmul.f32 %v1047, %v1108
        %v1364 = vmul.f32 %v1047, %v1112
        %v1365 = vmul.f32 %v1047, %v1116
        %v1366 = vmul.f32 %v1047, %v1120
        %v1367 = vmul.f32 %v1047, %v1124
        %v1368 = vmul.f32 %v1047, %v1128
        %v1369 = vmul.f32 %v1051, %v1100
        %v1370 = vmul.f32 %v1051, %v1104
        %v1371 = vmul.f32 %v1051, %v1108
        %v1372 = vmul.f32 %v1051, %v1112
        %v1373 = vmul.f32 %v1051, %v1116
        %v1374 = vmul.f32 %v1051, %v1120
        %v1375 = vmul.f32 %v1051, %v1124
        %v1376 = vmul.f32 %v1051, %v1128
        %v1377 = vmul.f32 %v1055, %v1100
        %v1378 = vmul.f32 %v1055, %v1104
        %v1379 = vmul.f32 %v1055, %v1108
        %v1380 = vmul.f32 %v1055, %v1112
        %v1381 = vmul.f32 %v1055, %v1116
        %v1382 = vmul.f32 %v1055, %v1120
        %v1383 = vmul.f32 %v1055, %v1124
        %v1384 = vmul.f32 %v1055, %v1128
        %v1385 = vadd.f32 %v673, %v1129
        %v1386 = vadd.f32 %v674, %v1130
        %v1387 = vadd.f32 %v675, %v1131
        %v1388 = vadd.f32 %v676, %v1132
        %v1389 = vadd.f32 %v677, %v1133
        %v1390 = vadd.f32 %v678, %v1134
        %v1391 = vadd.f32 %v679, %v1135
        %v1392 = vadd.f32 %v680, %v1136
        %v1393 = vadd.f32 %v681, %v1137
        %v1394 = vadd.f32 %v682, %v1138
        %v1395 = vadd.f32 %v683, %v1139
        %v1396 = vadd.f32 %v684, %v1140
        %v1397 = vadd.f32 %v685, %v1141
        %v1398 = vadd.f32 %v686, %v1142
        %v1399 = vadd.f32 %v687, %v1143
        %v1400 = vadd.f32 %v688, %v1144
        %v1401 = vadd.f32 %v689, %v1145
        %v1402 = vadd.f32 %v690, %v1146
        %v1403 = vadd.f32 %v691, %v1147
        %v1404 = vadd.f32 %v692, %v1148
        %v1405 = vadd.f32 %v693, %v1149
        %v1406 = vadd.f32 %v694, %v1150
        %v1407 = vadd.f32 %v695, %v1151
        %v1408 = vadd.f32 %v696, %v1152
        %v1409 = vadd.f32 %v697, %v1153
        %v1410 = vadd.f32 %v698, %v1154
        %v1411 = vadd.f32 %v699, %v1155
        %v1412 = vadd.f32 %v700, %v1156
        %v1413 = vadd.f32 %v701, %v1157
        %v1414 = vadd.f32 %v702, %v1158
        %v1415 = vadd.f32 %v703, %v1159
        %v1416 = vadd.f32 %v704, %v1160
        %v1417 = vadd.f32 %v705, %v1161
        %v1418 = vadd.f32 %v706, %v1162
        %v1419 = vadd.f32 %v707, %v1163
        %v1420 = vadd.f32 %v708, %v1164
        %v1421 = vadd.f32 %v709, %v1165
        %v1422 = vadd.f32 %v710, %v1166
        %v1423 = vadd.f32 %v711, %v1167
        %v1424 = vadd.f32 %v712, %v1168
        %v1425 = vadd.f32 %v713, %v1169
        %v1426 = vadd.f32 %v714, %v1170
        %v1427 = vadd.f32 %v715, %v1171
        %v1428 = vadd.f32 %v716, %v1172
        %v1429 = vadd.f32 %v717, %v1173
        %v1430 = vadd.f32 %v718, %v1174
        %v1431 = vadd.f32 %v719, %v1175
        %v1432 = vadd.f32 %v720, %v1176
        %v1433 = vadd.f32 %v721, %v1177
        %v1434 = vadd.f32 %v722, %v1178
        %v1435 = vadd.f32 %v723, %v1179
        %v1436 = vadd.f32 %v724, %v1180
        %v1437 = vadd.f32 %v725, %v1181
        %v1438 = vadd.f32 %v726, %v1182
        %v1439 = vadd.f32 %v727, %v1183
        %v1440 = vadd.f32 %v728, %v1184
        %v1441 = vadd.f32 %v729, %v1185
        %v1442 = vadd.f32 %v730, %v1186
        %v1443 = vadd.f32 %v731, %v1187
        %v1444 = vadd.f32 %v732, %v1188
        %v1445 = vadd.f32 %v733, %v1189
        %v1446 = vadd.f32 %v734, %v1190
        %v1447 = vadd.f32 %v735, %v1191
        %v1448 = vadd.f32 %v736, %v1192
        %v1449 = vadd.f32 %v737, %v1193
        %v1450 = vadd.f32 %v738, %v1194
        %v1451 = vadd.f32 %v739, %v1195
        %v1452 = vadd.f32 %v740, %v1196
        %v1453 = vadd.f32 %v741, %v1197
        %v1454 = vadd.f32 %v742, %v1198
        %v1455 = vadd.f32 %v743, %v1199
        %v1456 = vadd.f32 %v744, %v1200
        %v1457 = vadd.f32 %v745, %v1201
        %v1458 = vadd.f32 %v746, %v1202
        %v1459 = vadd.f32 %v747, %v1203
        %v1460 = vadd.f32 %v748, %v1204
        %v1461 = vadd.f32 %v749, %v1205
        %v1462 = vadd.f32 %v750, %v1206
        %v1463 = vadd.f32 %v751, %v1207
        %v1464 = vadd.f32 %v752, %v1208
        %v1465 = vadd.f32 %v753, %v1209
        %v1466 = vadd.f32 %v754, %v1210
        %v1467 = vadd.f32 %v755, %v1211
        %v1468 = vadd.f32 %v756, %v1212
        %v1469 = vadd.f32 %v757, %v1213
        %v1470 = vadd.f32 %v758, %v1214
        %v1471 = vadd.f32 %v759, %v1215
        %v1472 = vadd.f32 %v760, %v1216
        %v1473 = vadd.f32 %v761, %v1217
        %v1474 = vadd.f32 %v762, %v1218
        %v1475 = vadd.f32 %v763, %v1219
        %v1476 = vadd.f32 %v764, %v1220
        %v1477 = vadd.f32 %v765, %v1221
        %v1478 = vadd.f32 %v766, %v1222
        %v1479 = vadd.f32 %v767, %v1223
        %v1480 = vadd.f32 %v768, %v1224
        %v1481 = vadd.f32 %v769, %v1225
        %v1482 = vadd.f32 %v770, %v1226
        %v1483 = vadd.f32 %v771, %v1227
        %v1484 = vadd.f32 %v772, %v1228
        %v1485 = vadd.f32 %v773, %v1229
        %v1486 = vadd.f32 %v774, %v1230
        %v1487 = vadd.f32 %v775, %v1231
        %v1488 = vadd.f32 %v776, %v1232
        %v1489 = vadd.f32 %v777, %v1233
        %v1490 = vadd.f32 %v778, %v1234
        %v1491 = vadd.f32 %v779, %v1235
        %v1492 = vadd.f32 %v780, %v1236
        %v1493 = vadd.f32 %v781, %v1237
        %v1494 = vadd.f32 %v782, %v1238
        %v1495 = vadd.f32 %v783, %v1239
        %v1496 = vadd.f32 %v784, %v1240
        %v1497 = vadd.f32 %v785, %v1241
        %v1498 = vadd.f32 %v786, %v1242
        %v1499 = vadd.f32 %v787, %v1243
        %v1500 = vadd.f32 %v788, %v1244
        %v1501 = vadd.f32 %v789, %v1245
        %v1502 = vadd.f32 %v790, %v1246
        %v1503 = vadd.f32 %v791, %v1247
        %v1504 = vadd.f32 %v792, %v1248
        %v1505 = vadd.f32 %v793, %v1249
        %v1506 = vadd.f32 %v794, %v1250
        %v1507 = vadd.f32 %v795, %v1251
        %v1508 = vadd.f32 %v796, %v1252
        %v1509 = vadd.f32 %v797, %v1253
        %v1510 = vadd.f32 %v798, %v1254
        %v1511 = vadd.f32 %v799, %v1255
        %v1512 = vadd.f32 %v800, %v1256
        %v1513 = vadd.f32 %v801, %v1257
        %v1514 = vadd.f32 %v802, %v1258
        %v1515 = vadd.f32 %v803, %v1259
        %v1516 = vadd.f32 %v804, %v1260
        %v1517 = vadd.f32 %v805, %v1261
        %v1518 = vadd.f32 %v806, %v1262
        %v1519 = vadd.f32 %v807, %v1263
        %v1520 = vadd.f32 %v808, %v1264
        %v1521 = vadd.f32 %v809, %v1265
        %v1522 = vadd.f32 %v810, %v1266
        %v1523 = vadd.f32 %v811, %v1267
        %v1524 = vadd.f32 %v812, %v1268
        %v1525 = vadd.f32 %v813, %v1269
        %v1526 = vadd.f32 %v814, %v1270
        %v1527 = vadd.f32 %v815, %v1271
        %v1528 = vadd.f32 %v816, %v1272
        %v1529 = vadd.f32 %v817, %v1273
        %v1530 = vadd.f32 %v818, %v1274
        %v1531 = vadd.f32 %v819, %v1275
        %v1532 = vadd.f32 %v820, %v1276
        %v1533 = vadd.f32 %v821, %v1277
        %v1534 = vadd.f32 %v822, %v1278
        %v1535 = vadd.f32 %v823, %v1279
        %v1536 = vadd.f32 %v824, %v1280
        %v1537 = vadd.f32 %v825, %v1281
        %v1538 = vadd.f32 %v826, %v1282
        %v1539 = vadd.f32 %v827, %v1283
        %v1540 = vadd.f32 %v828, %v1284
        %v1541 = vadd.f32 %v829, %v1285
        %v1542 = vadd.f32 %v830, %v1286
        %v1543 = vadd.f32 %v831, %v1287
        %v1544 = vadd.f32 %v832, %v1288
        %v1545 = vadd.f32 %v833, %v1289
        %v1546 = vadd.f32 %v834, %v1290
        %v1547 = vadd.f32 %v835, %v1291
        %v1548 = vadd.f32 %v836, %v1292
        %v1549 = vadd.f32 %v837, %v1293
        %v1550 = vadd.f32 %v838, %v1294
        %v1551 = vadd.f32 %v839, %v1295
        %v1552 = vadd.f32 %v840, %v1296
        %v1553 = vadd.f32 %v841, %v1297
        %v1554 = vadd.f32 %v842, %v1298
        %v1555 = vadd.f32 %v843, %v1299
        %v1556 = vadd.f32 %v844, %v1300
        %v1557 = vadd.f32 %v845, %v1301
        %v1558 = vadd.f32 %v846, %v1302
        %v1559 = vadd.f32 %v847, %v1303
        %v1560 = vadd.f32 %v848, %v1304
        %v1561 = vadd.f32 %v849, %v1305
        %v1562 = vadd.f32 %v850, %v1306
        %v1563 = vadd.f32 %v851, %v1307
        %v1564 = vadd.f32 %v852, %v1308
        %v1565 = vadd.f32 %v853, %v1309
        %v1566 = vadd.f32 %v854, %v1310
        %v1567 = vadd.f32 %v855, %v1311
        %v1568 = vadd.f32 %v856, %v1312
        %v1569 = vadd.f32 %v857, %v1313
        %v1570 = vadd.f32 %v858, %v1314
        %v1571 = vadd.f32 %v859, %v1315
        %v1572 = vadd.f32 %v860, %v1316
        %v1573 = vadd.f32 %v861, %v1317
        %v1574 = vadd.f32 %v862, %v1318
        %v1575 = vadd.f32 %v863, %v1319
        %v1576 = vadd.f32 %v864, %v1320
        %v1577 = vadd.f32 %v865, %v1321
        %v1578 = vadd.f32 %v866, %v1322
        %v1579 = vadd.f32 %v867, %v1323
        %v1580 = vadd.f32 %v868, %v1324
        %v1581 = vadd.f32 %v869, %v1325
        %v1582 = vadd.f32 %v870, %v1326
        %v1583 = vadd.f32 %v871, %v1327
        %v1584 = vadd.f32 %v872, %v1328
        %v1585 = vadd.f32 %v873, %v1329
        %v1586 = vadd.f32 %v874, %v1330
        %v1587 = vadd.f32 %v875, %v1331
        %v1588 = vadd.f32 %v876, %v1332
        %v1589 = vadd.f32 %v877, %v1333
        %v1590 = vadd.f32 %v878, %v1334
        %v1591 = vadd.f32 %v879, %v1335
        %v1592 = vadd.f32 %v880, %v1336
        %v1593 = vadd.f32 %v881, %v1337
        %v1594 = vadd.f32 %v882, %v1338
        %v1595 = vadd.f32 %v883, %v1339
        %v1596 = vadd.f32 %v884, %v1340
        %v1597 = vadd.f32 %v885, %v1341
        %v1598 = vadd.f32 %v886, %v1342
        %v1599 = vadd.f32 %v887, %v1343
        %v1600 = vadd.f32 %v888, %v1344
        %v1601 = vadd.f32 %v889, %v1345
        %v1602 = vadd.f32 %v890, %v1346
        %v1603 = vadd.f32 %v891, %v1347
        %v1604 = vadd.f32 %v892, %v1348
        %v1605 = vadd.f32 %v893, %v1349
        %v1606 = vadd.f32 %v894, %v1350
        %v1607 = vadd.f32 %v895, %v1351
        %v1608 = vadd.f32 %v896, %v1352
        %v1609 = vadd.f32 %v897, %v1353
        %v1610 = vadd.f32 %v898, %v1354
        %v1611 = vadd.f32 %v899, %v1355
        %v1612 = vadd.f32 %v900, %v1356
        %v1613 = vadd.f32 %v901, %v1357
        %v1614 = vadd.f32 %v902, %v1358
        %v1615 = vadd.f32 %v903, %v1359
        %v1616 = vadd.f32 %v904, %v1360
        %v1617 = vadd.f32 %v905, %v1361
        %v1618 = vadd.f32 %v906, %v1362
        %v1619 = vadd.f32 %v907, %v1363
        %v1620 = vadd.f32 %v908, %v1364
        %v1621 = vadd.f32 %v909, %v1365
        %v1622 = vadd.f32 %v910, %v1366
        %v1623 = vadd.f32 %v911, %v1367
        %v1624 = vadd.f32 %v912, %v1368
        %v1625 = vadd.f32 %v913, %v1369
        %v1626 = vadd.f32 %v914, %v1370
        %v1627 = vadd.f32 %v915, %v1371
        %v1628 = vadd.f32 %v916, %v1372
        %v1629 = vadd.f32 %v917, %v1373
        %v1630 = vadd.f32 %v918, %v1374
        %v1631 = vadd.f32 %v919, %v1375
        %v1632 = vadd.f32 %v920, %v1376
        %v1633 = vadd.f32 %v921, %v1377
        %v1634 = vadd.f32 %v922, %v1378
        %v1635 = vadd.f32 %v923, %v1379
        %v1636 = vadd.f32 %v924, %v1380
        %v1637 = vadd.f32 %v925, %v1381
        %v1638 = vadd.f32 %v926, %v1382
        %v1639 = vadd.f32 %v927, %v1383
        %v1640 = vadd.f32 %v928, %v1384
        %1641 = vset.pattern.permute.xlu0 2
        %1642 = vperm.xlu0 %1641, %v400
        %v1643 = vpop.permute.xlu0 %1642
        %1645 = vset.pattern.permute.xlu0 2
        %1646 = vperm.xlu0 %1645, %v401
        %v1647 = vpop.permute.xlu0 %1646
        %1649 = vset.pattern.permute.xlu0 2
        %1650 = vperm.xlu0 %1649, %v402
        %v1651 = vpop.permute.xlu0 %1650
        %1653 = vset.pattern.permute.xlu0 2
        %1654 = vperm.xlu0 %1653, %v403
        %v1655 = vpop.permute.xlu0 %1654
        %1657 = vset.pattern.permute.xlu0 2
        %1658 = vperm.xlu0 %1657, %v404
        %v1659 = vpop.permute.xlu0 %1658
        %1661 = vset.pattern.permute.xlu0 2
        %1662 = vperm.xlu0 %1661, %v405
        %v1663 = vpop.permute.xlu0 %1662
        %1665 = vset.pattern.permute.xlu0 2
        %1666 = vperm.xlu0 %1665, %v406
        %v1667 = vpop.permute.xlu0 %1666
        %1669 = vset.pattern.permute.xlu0 2
        %1670 = vperm.xlu0 %1669, %v407
        %v1671 = vpop.permute.xlu0 %1670
        %1673 = vset.pattern.permute.xlu0 2
        %1674 = vperm.xlu0 %1673, %v408
        %v1675 = vpop.permute.xlu0 %1674
        %1677 = vset.pattern.permute.xlu0 2
        %1678 = vperm.xlu0 %1677, %v409
        %v1679 = vpop.permute.xlu0 %1678
        %1681 = vset.pattern.permute.xlu0 2
        %1682 = vperm.xlu0 %1681, %v410
        %v1683 = vpop.permute.xlu0 %1682
        %1685 = vset.pattern.permute.xlu0 2
        %1686 = vperm.xlu0 %1685, %v411
        %v1687 = vpop.permute.xlu0 %1686
        %1689 = vset.pattern.permute.xlu0 2
        %1690 = vperm.xlu0 %1689, %v412
        %v1691 = vpop.permute.xlu0 %1690
        %1693 = vset.pattern.permute.xlu0 2
        %1694 = vperm.xlu0 %1693, %v413
        %v1695 = vpop.permute.xlu0 %1694
        %1697 = vset.pattern.permute.xlu0 2
        %1698 = vperm.xlu0 %1697, %v414
        %v1699 = vpop.permute.xlu0 %1698
        %1701 = vset.pattern.permute.xlu0 2
        %1702 = vperm.xlu0 %1701, %v415
        %v1703 = vpop.permute.xlu0 %1702
        %1705 = vset.pattern.permute.xlu0 2
        %1706 = vperm.xlu0 %1705, %v416
        %v1707 = vpop.permute.xlu0 %1706
        %1709 = vset.pattern.permute.xlu0 2
        %1710 = vperm.xlu0 %1709, %v417
        %v1711 = vpop.permute.xlu0 %1710
        %1713 = vset.pattern.permute.xlu0 2
        %1714 = vperm.xlu0 %1713, %v418
        %v1715 = vpop.permute.xlu0 %1714
        %1717 = vset.pattern.permute.xlu0 2
        %1718 = vperm.xlu0 %1717, %v419
        %v1719 = vpop.permute.xlu0 %1718
        %1721 = vset.pattern.permute.xlu0 2
        %1722 = vperm.xlu0 %1721, %v420
        %v1723 = vpop.permute.xlu0 %1722
        %1725 = vset.pattern.permute.xlu0 2
        %1726 = vperm.xlu0 %1725, %v421
        %v1727 = vpop.permute.xlu0 %1726
        %1729 = vset.pattern.permute.xlu0 2
        %1730 = vperm.xlu0 %1729, %v422
        %v1731 = vpop.permute.xlu0 %1730
        %1733 = vset.pattern.permute.xlu0 2
        %1734 = vperm.xlu0 %1733, %v423
        %v1735 = vpop.permute.xlu0 %1734
        %1737 = vset.pattern.permute.xlu0 2
        %1738 = vperm.xlu0 %1737, %v424
        %v1739 = vpop.permute.xlu0 %1738
        %1741 = vset.pattern.permute.xlu0 2
        %1742 = vperm.xlu0 %1741, %v425
        %v1743 = vpop.permute.xlu0 %1742
        %1745 = vset.pattern.permute.xlu0 2
        %1746 = vperm.xlu0 %1745, %v426
        %v1747 = vpop.permute.xlu0 %1746
        %1749 = vset.pattern.permute.xlu0 2
        %1750 = vperm.xlu0 %1749, %v427
        %v1751 = vpop.permute.xlu0 %1750
        %1753 = vset.pattern.permute.xlu0 2
        %1754 = vperm.xlu0 %1753, %v428
        %v1755 = vpop.permute.xlu0 %1754
        %1757 = vset.pattern.permute.xlu0 2
        %1758 = vperm.xlu0 %1757, %v429
        %v1759 = vpop.permute.xlu0 %1758
        %1761 = vset.pattern.permute.xlu0 2
        %1762 = vperm.xlu0 %1761, %v430
        %v1763 = vpop.permute.xlu0 %1762
        %1765 = vset.pattern.permute.xlu0 2
        %1766 = vperm.xlu0 %1765, %v431
        %v1767 = vpop.permute.xlu0 %1766
        %v1769 = vlaneseq
        %v1770 = vshrl.u32 %v1769, 7
        %v1771 = vsub.s32 2, %v1770
        %v1772 = vrot.slane %v433, %v1771
        %v1773 = vlaneseq
        %v1774 = vshrl.u32 %v1773, 7
        %v1775 = vsub.s32 6, %v1774
        %v1776 = vrot.slane %v433, %v1775
        %v1777 = vlaneseq
        %v1778 = vshrl.u32 %v1777, 7
        %v1779 = vsub.s32 2, %v1778
        %v1780 = vrot.slane %v434, %v1779
        %v1781 = vlaneseq
        %v1782 = vshrl.u32 %v1781, 7
        %v1783 = vsub.s32 6, %v1782
        %v1784 = vrot.slane %v434, %v1783
        %v1785 = vlaneseq
        %v1786 = vshrl.u32 %v1785, 7
        %v1787 = vsub.s32 2, %v1786
        %v1788 = vrot.slane %v435, %v1787
        %v1789 = vlaneseq
        %v1790 = vshrl.u32 %v1789, 7
        %v1791 = vsub.s32 6, %v1790
        %v1792 = vrot.slane %v435, %v1791
        %v1793 = vlaneseq
        %v1794 = vshrl.u32 %v1793, 7
        %v1795 = vsub.s32 2, %v1794
        %v1796 = vrot.slane %v436, %v1795
        %v1797 = vlaneseq
        %v1798 = vshrl.u32 %v1797, 7
        %v1799 = vsub.s32 6, %v1798
        %v1800 = vrot.slane %v436, %v1799
        %v1809 = vlaneseq
        %v1810 = vshrl.u32 %v1809, 7
        %v1811 = vsub.s32 2, %v1810
        %v1812 = vrot.slane %v1772, %v1811
        %v1813 = vlaneseq
        %v1814 = vshrl.u32 %v1813, 7
        %v1815 = vsub.s32 2, %v1814
        %v1816 = vrot.slane %v1776, %v1815
        %v1817 = vlaneseq
        %v1818 = vshrl.u32 %v1817, 7
        %v1819 = vsub.s32 2, %v1818
        %v1820 = vrot.slane %v1780, %v1819
        %v1821 = vlaneseq
        %v1822 = vshrl.u32 %v1821, 7
        %v1823 = vsub.s32 2, %v1822
        %v1824 = vrot.slane %v1784, %v1823
        %v1825 = vlaneseq
        %v1826 = vshrl.u32 %v1825, 7
        %v1827 = vsub.s32 2, %v1826
        %v1828 = vrot.slane %v1788, %v1827
        %v1829 = vlaneseq
        %v1830 = vshrl.u32 %v1829, 7
        %v1831 = vsub.s32 2, %v1830
        %v1832 = vrot.slane %v1792, %v1831
        %v1833 = vlaneseq
        %v1834 = vshrl.u32 %v1833, 7
        %v1835 = vsub.s32 2, %v1834
        %v1836 = vrot.slane %v1796, %v1835
        %v1837 = vlaneseq
        %v1838 = vshrl.u32 %v1837, 7
        %v1839 = vsub.s32 2, %v1838
        %v1840 = vrot.slane %v1800, %v1839
        %v1841 = vmul.f32 %v1643, %v1812
        %v1842 = vmul.f32 %v1643, %v1816
        %v1843 = vmul.f32 %v1643, %v1820
        %v1844 = vmul.f32 %v1643, %v1824
        %v1845 = vmul.f32 %v1643, %v1828
        %v1846 = vmul.f32 %v1643, %v1832
        %v1847 = vmul.f32 %v1643, %v1836
        %v1848 = vmul.f32 %v1643, %v1840
        %v1849 = vmul.f32 %v1647, %v1812
        %v1850 = vmul.f32 %v1647, %v1816
        %v1851 = vmul.f32 %v1647, %v1820
        %v1852 = vmul.f32 %v1647, %v1824
        %v1853 = vmul.f32 %v1647, %v1828
        %v1854 = vmul.f32 %v1647, %v1832
        %v1855 = vmul.f32 %v1647, %v1836
        %v1856 = vmul.f32 %v1647, %v1840
        %v1857 = vmul.f32 %v1651, %v1812
        %v1858 = vmul.f32 %v1651, %v1816
        %v1859 = vmul.f32 %v1651, %v1820
        %v1860 = vmul.f32 %v1651, %v1824
        %v1861 = vmul.f32 %v1651, %v1828
        %v1862 = vmul.f32 %v1651, %v1832
        %v1863 = vmul.f32 %v1651, %v1836
        %v1864 = vmul.f32 %v1651, %v1840
        %v1865 = vmul.f32 %v1655, %v1812
        %v1866 = vmul.f32 %v1655, %v1816
        %v1867 = vmul.f32 %v1655, %v1820
        %v1868 = vmul.f32 %v1655, %v1824
        %v1869 = vmul.f32 %v1655, %v1828
        %v1870 = vmul.f32 %v1655, %v1832
        %v1871 = vmul.f32 %v1655, %v1836
        %v1872 = vmul.f32 %v1655, %v1840
        %v1873 = vmul.f32 %v1659, %v1812
        %v1874 = vmul.f32 %v1659, %v1816
        %v1875 = vmul.f32 %v1659, %v1820
        %v1876 = vmul.f32 %v1659, %v1824
        %v1877 = vmul.f32 %v1659, %v1828
        %v1878 = vmul.f32 %v1659, %v1832
        %v1879 = vmul.f32 %v1659, %v1836
        %v1880 = vmul.f32 %v1659, %v1840
        %v1881 = vmul.f32 %v1663, %v1812
        %v1882 = vmul.f32 %v1663, %v1816
        %v1883 = vmul.f32 %v1663, %v1820
        %v1884 = vmul.f32 %v1663, %v1824
        %v1885 = vmul.f32 %v1663, %v1828
        %v1886 = vmul.f32 %v1663, %v1832
        %v1887 = vmul.f32 %v1663, %v1836
        %v1888 = vmul.f32 %v1663, %v1840
        %v1889 = vmul.f32 %v1667, %v1812
        %v1890 = vmul.f32 %v1667, %v1816
        %v1891 = vmul.f32 %v1667, %v1820
        %v1892 = vmul.f32 %v1667, %v1824
        %v1893 = vmul.f32 %v1667, %v1828
        %v1894 = vmul.f32 %v1667, %v1832
        %v1895 = vmul.f32 %v1667, %v1836
        %v1896 = vmul.f32 %v1667, %v1840
        %v1897 = vmul.f32 %v1671, %v1812
        %v1898 = vmul.f32 %v1671, %v1816
        %v1899 = vmul.f32 %v1671, %v1820
        %v1900 = vmul.f32 %v1671, %v1824
        %v1901 = vmul.f32 %v1671, %v1828
        %v1902 = vmul.f32 %v1671, %v1832
        %v1903 = vmul.f32 %v1671, %v1836
        %v1904 = vmul.f32 %v1671, %v1840
        %v1905 = vmul.f32 %v1675, %v1812
        %v1906 = vmul.f32 %v1675, %v1816
        %v1907 = vmul.f32 %v1675, %v1820
        %v1908 = vmul.f32 %v1675, %v1824
        %v1909 = vmul.f32 %v1675, %v1828
        %v1910 = vmul.f32 %v1675, %v1832
        %v1911 = vmul.f32 %v1675, %v1836
        %v1912 = vmul.f32 %v1675, %v1840
        %v1913 = vmul.f32 %v1679, %v1812
        %v1914 = vmul.f32 %v1679, %v1816
        %v1915 = vmul.f32 %v1679, %v1820
        %v1916 = vmul.f32 %v1679, %v1824
        %v1917 = vmul.f32 %v1679, %v1828
        %v1918 = vmul.f32 %v1679, %v1832
        %v1919 = vmul.f32 %v1679, %v1836
        %v1920 = vmul.f32 %v1679, %v1840
        %v1921 = vmul.f32 %v1683, %v1812
        %v1922 = vmul.f32 %v1683, %v1816
        %v1923 = vmul.f32 %v1683, %v1820
        %v1924 = vmul.f32 %v1683, %v1824
        %v1925 = vmul.f32 %v1683, %v1828
        %v1926 = vmul.f32 %v1683, %v1832
        %v1927 = vmul.f32 %v1683, %v1836
        %v1928 = vmul.f32 %v1683, %v1840
        %v1929 = vmul.f32 %v1687, %v1812
        %v1930 = vmul.f32 %v1687, %v1816
        %v1931 = vmul.f32 %v1687, %v1820
        %v1932 = vmul.f32 %v1687, %v1824
        %v1933 = vmul.f32 %v1687, %v1828
        %v1934 = vmul.f32 %v1687, %v1832
        %v1935 = vmul.f32 %v1687, %v1836
        %v1936 = vmul.f32 %v1687, %v1840
        %v1937 = vmul.f32 %v1691, %v1812
        %v1938 = vmul.f32 %v1691, %v1816
        %v1939 = vmul.f32 %v1691, %v1820
        %v1940 = vmul.f32 %v1691, %v1824
        %v1941 = vmul.f32 %v1691, %v1828
        %v1942 = vmul.f32 %v1691, %v1832
        %v1943 = vmul.f32 %v1691, %v1836
        %v1944 = vmul.f32 %v1691, %v1840
        %v1945 = vmul.f32 %v1695, %v1812
        %v1946 = vmul.f32 %v1695, %v1816
        %v1947 = vmul.f32 %v1695, %v1820
        %v1948 = vmul.f32 %v1695, %v1824
        %v1949 = vmul.f32 %v1695, %v1828
        %v1950 = vmul.f32 %v1695, %v1832
        %v1951 = vmul.f32 %v1695, %v1836
        %v1952 = vmul.f32 %v1695, %v1840
        %v1953 = vmul.f32 %v1699, %v1812
        %v1954 = vmul.f32 %v1699, %v1816
        %v1955 = vmul.f32 %v1699, %v1820
        %v1956 = vmul.f32 %v1699, %v1824
        %v1957 = vmul.f32 %v1699, %v1828
        %v1958 = vmul.f32 %v1699, %v1832
        %v1959 = vmul.f32 %v1699, %v1836
        %v1960 = vmul.f32 %v1699, %v1840
        %v1961 = vmul.f32 %v1703, %v1812
        %v1962 = vmul.f32 %v1703, %v1816
        %v1963 = vmul.f32 %v1703, %v1820
        %v1964 = vmul.f32 %v1703, %v1824
        %v1965 = vmul.f32 %v1703, %v1828
        %v1966 = vmul.f32 %v1703, %v1832
        %v1967 = vmul.f32 %v1703, %v1836
        %v1968 = vmul.f32 %v1703, %v1840
        %v1969 = vmul.f32 %v1707, %v1812
        %v1970 = vmul.f32 %v1707, %v1816
        %v1971 = vmul.f32 %v1707, %v1820
        %v1972 = vmul.f32 %v1707, %v1824
        %v1973 = vmul.f32 %v1707, %v1828
        %v1974 = vmul.f32 %v1707, %v1832
        %v1975 = vmul.f32 %v1707, %v1836
        %v1976 = vmul.f32 %v1707, %v1840
        %v1977 = vmul.f32 %v1711, %v1812
        %v1978 = vmul.f32 %v1711, %v1816
        %v1979 = vmul.f32 %v1711, %v1820
        %v1980 = vmul.f32 %v1711, %v1824
        %v1981 = vmul.f32 %v1711, %v1828
        %v1982 = vmul.f32 %v1711, %v1832
        %v1983 = vmul.f32 %v1711, %v1836
        %v1984 = vmul.f32 %v1711, %v1840
        %v1985 = vmul.f32 %v1715, %v1812
        %v1986 = vmul.f32 %v1715, %v1816
        %v1987 = vmul.f32 %v1715, %v1820
        %v1988 = vmul.f32 %v1715, %v1824
        %v1989 = vmul.f32 %v1715, %v1828
        %v1990 = vmul.f32 %v1715, %v1832
        %v1991 = vmul.f32 %v1715, %v1836
        %v1992 = vmul.f32 %v1715, %v1840
        %v1993 = vmul.f32 %v1719, %v1812
        %v1994 = vmul.f32 %v1719, %v1816
        %v1995 = vmul.f32 %v1719, %v1820
        %v1996 = vmul.f32 %v1719, %v1824
        %v1997 = vmul.f32 %v1719, %v1828
        %v1998 = vmul.f32 %v1719, %v1832
        %v1999 = vmul.f32 %v1719, %v1836
        %v2000 = vmul.f32 %v1719, %v1840
        %v2001 = vmul.f32 %v1723, %v1812
        %v2002 = vmul.f32 %v1723, %v1816
        %v2003 = vmul.f32 %v1723, %v1820
        %v2004 = vmul.f32 %v1723, %v1824
        %v2005 = vmul.f32 %v1723, %v1828
        %v2006 = vmul.f32 %v1723, %v1832
        %v2007 = vmul.f32 %v1723, %v1836
        %v2008 = vmul.f32 %v1723, %v1840
        %v2009 = vmul.f32 %v1727, %v1812
        %v2010 = vmul.f32 %v1727, %v1816
        %v2011 = vmul.f32 %v1727, %v1820
        %v2012 = vmul.f32 %v1727, %v1824
        %v2013 = vmul.f32 %v1727, %v1828
        %v2014 = vmul.f32 %v1727, %v1832
        %v2015 = vmul.f32 %v1727, %v1836
        %v2016 = vmul.f32 %v1727, %v1840
        %v2017 = vmul.f32 %v1731, %v1812
        %v2018 = vmul.f32 %v1731, %v1816
        %v2019 = vmul.f32 %v1731, %v1820
        %v2020 = vmul.f32 %v1731, %v1824
        %v2021 = vmul.f32 %v1731, %v1828
        %v2022 = vmul.f32 %v1731, %v1832
        %v2023 = vmul.f32 %v1731, %v1836
        %v2024 = vmul.f32 %v1731, %v1840
        %v2025 = vmul.f32 %v1735, %v1812
        %v2026 = vmul.f32 %v1735, %v1816
        %v2027 = vmul.f32 %v1735, %v1820
        %v2028 = vmul.f32 %v1735, %v1824
        %v2029 = vmul.f32 %v1735, %v1828
        %v2030 = vmul.f32 %v1735, %v1832
        %v2031 = vmul.f32 %v1735, %v1836
        %v2032 = vmul.f32 %v1735, %v1840
        %v2033 = vmul.f32 %v1739, %v1812
        %v2034 = vmul.f32 %v1739, %v1816
        %v2035 = vmul.f32 %v1739, %v1820
        %v2036 = vmul.f32 %v1739, %v1824
        %v2037 = vmul.f32 %v1739, %v1828
        %v2038 = vmul.f32 %v1739, %v1832
        %v2039 = vmul.f32 %v1739, %v1836
        %v2040 = vmul.f32 %v1739, %v1840
        %v2041 = vmul.f32 %v1743, %v1812
        %v2042 = vmul.f32 %v1743, %v1816
        %v2043 = vmul.f32 %v1743, %v1820
        %v2044 = vmul.f32 %v1743, %v1824
        %v2045 = vmul.f32 %v1743, %v1828
        %v2046 = vmul.f32 %v1743, %v1832
        %v2047 = vmul.f32 %v1743, %v1836
        %v2048 = vmul.f32 %v1743, %v1840
        %v2049 = vmul.f32 %v1747, %v1812
        %v2050 = vmul.f32 %v1747, %v1816
        %v2051 = vmul.f32 %v1747, %v1820
        %v2052 = vmul.f32 %v1747, %v1824
        %v2053 = vmul.f32 %v1747, %v1828
        %v2054 = vmul.f32 %v1747, %v1832
        %v2055 = vmul.f32 %v1747, %v1836
        %v2056 = vmul.f32 %v1747, %v1840
        %v2057 = vmul.f32 %v1751, %v1812
        %v2058 = vmul.f32 %v1751, %v1816
        %v2059 = vmul.f32 %v1751, %v1820
        %v2060 = vmul.f32 %v1751, %v1824
        %v2061 = vmul.f32 %v1751, %v1828
        %v2062 = vmul.f32 %v1751, %v1832
        %v2063 = vmul.f32 %v1751, %v1836
        %v2064 = vmul.f32 %v1751, %v1840
        %v2065 = vmul.f32 %v1755, %v1812
        %v2066 = vmul.f32 %v1755, %v1816
        %v2067 = vmul.f32 %v1755, %v1820
        %v2068 = vmul.f32 %v1755, %v1824
        %v2069 = vmul.f32 %v1755, %v1828
        %v2070 = vmul.f32 %v1755, %v1832
        %v2071 = vmul.f32 %v1755, %v1836
        %v2072 = vmul.f32 %v1755, %v1840
        %v2073 = vmul.f32 %v1759, %v1812
        %v2074 = vmul.f32 %v1759, %v1816
        %v2075 = vmul.f32 %v1759, %v1820
        %v2076 = vmul.f32 %v1759, %v1824
        %v2077 = vmul.f32 %v1759, %v1828
        %v2078 = vmul.f32 %v1759, %v1832
        %v2079 = vmul.f32 %v1759, %v1836
        %v2080 = vmul.f32 %v1759, %v1840
        %v2081 = vmul.f32 %v1763, %v1812
        %v2082 = vmul.f32 %v1763, %v1816
        %v2083 = vmul.f32 %v1763, %v1820
        %v2084 = vmul.f32 %v1763, %v1824
        %v2085 = vmul.f32 %v1763, %v1828
        %v2086 = vmul.f32 %v1763, %v1832
        %v2087 = vmul.f32 %v1763, %v1836
        %v2088 = vmul.f32 %v1763, %v1840
        %v2089 = vmul.f32 %v1767, %v1812
        %v2090 = vmul.f32 %v1767, %v1816
        %v2091 = vmul.f32 %v1767, %v1820
        %v2092 = vmul.f32 %v1767, %v1824
        %v2093 = vmul.f32 %v1767, %v1828
        %v2094 = vmul.f32 %v1767, %v1832
        %v2095 = vmul.f32 %v1767, %v1836
        %v2096 = vmul.f32 %v1767, %v1840
        %v2097 = vadd.f32 %v1385, %v1841
        %v2098 = vadd.f32 %v1386, %v1842
        %v2099 = vadd.f32 %v1387, %v1843
        %v2100 = vadd.f32 %v1388, %v1844
        %v2101 = vadd.f32 %v1389, %v1845
        %v2102 = vadd.f32 %v1390, %v1846
        %v2103 = vadd.f32 %v1391, %v1847
        %v2104 = vadd.f32 %v1392, %v1848
        %v2105 = vadd.f32 %v1393, %v1849
        %v2106 = vadd.f32 %v1394, %v1850
        %v2107 = vadd.f32 %v1395, %v1851
        %v2108 = vadd.f32 %v1396, %v1852
        %v2109 = vadd.f32 %v1397, %v1853
        %v2110 = vadd.f32 %v1398, %v1854
        %v2111 = vadd.f32 %v1399, %v1855
        %v2112 = vadd.f32 %v1400, %v1856
        %v2113 = vadd.f32 %v1401, %v1857
        %v2114 = vadd.f32 %v1402, %v1858
        %v2115 = vadd.f32 %v1403, %v1859
        %v2116 = vadd.f32 %v1404, %v1860
        %v2117 = vadd.f32 %v1405, %v1861
        %v2118 = vadd.f32 %v1406, %v1862
        %v2119 = vadd.f32 %v1407, %v1863
        %v2120 = vadd.f32 %v1408, %v1864
        %v2121 = vadd.f32 %v1409, %v1865
        %v2122 = vadd.f32 %v1410, %v1866
        %v2123 = vadd.f32 %v1411, %v1867
        %v2124 = vadd.f32 %v1412, %v1868
        %v2125 = vadd.f32 %v1413, %v1869
        %v2126 = vadd.f32 %v1414, %v1870
        %v2127 = vadd.f32 %v1415, %v1871
        %v2128 = vadd.f32 %v1416, %v1872
        %v2129 = vadd.f32 %v1417, %v1873
        %v2130 = vadd.f32 %v1418, %v1874
        %v2131 = vadd.f32 %v1419, %v1875
        %v2132 = vadd.f32 %v1420, %v1876
        %v2133 = vadd.f32 %v1421, %v1877
        %v2134 = vadd.f32 %v1422, %v1878
        %v2135 = vadd.f32 %v1423, %v1879
        %v2136 = vadd.f32 %v1424, %v1880
        %v2137 = vadd.f32 %v1425, %v1881
        %v2138 = vadd.f32 %v1426, %v1882
        %v2139 = vadd.f32 %v1427, %v1883
        %v2140 = vadd.f32 %v1428, %v1884
        %v2141 = vadd.f32 %v1429, %v1885
        %v2142 = vadd.f32 %v1430, %v1886
        %v2143 = vadd.f32 %v1431, %v1887
        %v2144 = vadd.f32 %v1432, %v1888
        %v2145 = vadd.f32 %v1433, %v1889
        %v2146 = vadd.f32 %v1434, %v1890
        %v2147 = vadd.f32 %v1435, %v1891
        %v2148 = vadd.f32 %v1436, %v1892
        %v2149 = vadd.f32 %v1437, %v1893
        %v2150 = vadd.f32 %v1438, %v1894
        %v2151 = vadd.f32 %v1439, %v1895
        %v2152 = vadd.f32 %v1440, %v1896
        %v2153 = vadd.f32 %v1441, %v1897
        %v2154 = vadd.f32 %v1442, %v1898
        %v2155 = vadd.f32 %v1443, %v1899
        %v2156 = vadd.f32 %v1444, %v1900
        %v2157 = vadd.f32 %v1445, %v1901
        %v2158 = vadd.f32 %v1446, %v1902
        %v2159 = vadd.f32 %v1447, %v1903
        %v2160 = vadd.f32 %v1448, %v1904
        %v2161 = vadd.f32 %v1449, %v1905
        %v2162 = vadd.f32 %v1450, %v1906
        %v2163 = vadd.f32 %v1451, %v1907
        %v2164 = vadd.f32 %v1452, %v1908
        %v2165 = vadd.f32 %v1453, %v1909
        %v2166 = vadd.f32 %v1454, %v1910
        %v2167 = vadd.f32 %v1455, %v1911
        %v2168 = vadd.f32 %v1456, %v1912
        %v2169 = vadd.f32 %v1457, %v1913
        %v2170 = vadd.f32 %v1458, %v1914
        %v2171 = vadd.f32 %v1459, %v1915
        %v2172 = vadd.f32 %v1460, %v1916
        %v2173 = vadd.f32 %v1461, %v1917
        %v2174 = vadd.f32 %v1462, %v1918
        %v2175 = vadd.f32 %v1463, %v1919
        %v2176 = vadd.f32 %v1464, %v1920
        %v2177 = vadd.f32 %v1465, %v1921
        %v2178 = vadd.f32 %v1466, %v1922
        %v2179 = vadd.f32 %v1467, %v1923
        %v2180 = vadd.f32 %v1468, %v1924
        %v2181 = vadd.f32 %v1469, %v1925
        %v2182 = vadd.f32 %v1470, %v1926
        %v2183 = vadd.f32 %v1471, %v1927
        %v2184 = vadd.f32 %v1472, %v1928
        %v2185 = vadd.f32 %v1473, %v1929
        %v2186 = vadd.f32 %v1474, %v1930
        %v2187 = vadd.f32 %v1475, %v1931
        %v2188 = vadd.f32 %v1476, %v1932
        %v2189 = vadd.f32 %v1477, %v1933
        %v2190 = vadd.f32 %v1478, %v1934
        %v2191 = vadd.f32 %v1479, %v1935
        %v2192 = vadd.f32 %v1480, %v1936
        %v2193 = vadd.f32 %v1481, %v1937
        %v2194 = vadd.f32 %v1482, %v1938
        %v2195 = vadd.f32 %v1483, %v1939
        %v2196 = vadd.f32 %v1484, %v1940
        %v2197 = vadd.f32 %v1485, %v1941
        %v2198 = vadd.f32 %v1486, %v1942
        %v2199 = vadd.f32 %v1487, %v1943
        %v2200 = vadd.f32 %v1488, %v1944
        %v2201 = vadd.f32 %v1489, %v1945
        %v2202 = vadd.f32 %v1490, %v1946
        %v2203 = vadd.f32 %v1491, %v1947
        %v2204 = vadd.f32 %v1492, %v1948
        %v2205 = vadd.f32 %v1493, %v1949
        %v2206 = vadd.f32 %v1494, %v1950
        %v2207 = vadd.f32 %v1495, %v1951
        %v2208 = vadd.f32 %v1496, %v1952
        %v2209 = vadd.f32 %v1497, %v1953
        %v2210 = vadd.f32 %v1498, %v1954
        %v2211 = vadd.f32 %v1499, %v1955
        %v2212 = vadd.f32 %v1500, %v1956
        %v2213 = vadd.f32 %v1501, %v1957
        %v2214 = vadd.f32 %v1502, %v1958
        %v2215 = vadd.f32 %v1503, %v1959
        %v2216 = vadd.f32 %v1504, %v1960
        %v2217 = vadd.f32 %v1505, %v1961
        %v2218 = vadd.f32 %v1506, %v1962
        %v2219 = vadd.f32 %v1507, %v1963
        %v2220 = vadd.f32 %v1508, %v1964
        %v2221 = vadd.f32 %v1509, %v1965
        %v2222 = vadd.f32 %v1510, %v1966
        %v2223 = vadd.f32 %v1511, %v1967
        %v2224 = vadd.f32 %v1512, %v1968
        %v2225 = vadd.f32 %v1513, %v1969
        %v2226 = vadd.f32 %v1514, %v1970
        %v2227 = vadd.f32 %v1515, %v1971
        %v2228 = vadd.f32 %v1516, %v1972
        %v2229 = vadd.f32 %v1517, %v1973
        %v2230 = vadd.f32 %v1518, %v1974
        %v2231 = vadd.f32 %v1519, %v1975
        %v2232 = vadd.f32 %v1520, %v1976
        %v2233 = vadd.f32 %v1521, %v1977
        %v2234 = vadd.f32 %v1522, %v1978
        %v2235 = vadd.f32 %v1523, %v1979
        %v2236 = vadd.f32 %v1524, %v1980
        %v2237 = vadd.f32 %v1525, %v1981
        %v2238 = vadd.f32 %v1526, %v1982
        %v2239 = vadd.f32 %v1527, %v1983
        %v2240 = vadd.f32 %v1528, %v1984
        %v2241 = vadd.f32 %v1529, %v1985
        %v2242 = vadd.f32 %v1530, %v1986
        %v2243 = vadd.f32 %v1531, %v1987
        %v2244 = vadd.f32 %v1532, %v1988
        %v2245 = vadd.f32 %v1533, %v1989
        %v2246 = vadd.f32 %v1534, %v1990
        %v2247 = vadd.f32 %v1535, %v1991
        %v2248 = vadd.f32 %v1536, %v1992
        %v2249 = vadd.f32 %v1537, %v1993
        %v2250 = vadd.f32 %v1538, %v1994
        %v2251 = vadd.f32 %v1539, %v1995
        %v2252 = vadd.f32 %v1540, %v1996
        %v2253 = vadd.f32 %v1541, %v1997
        %v2254 = vadd.f32 %v1542, %v1998
        %v2255 = vadd.f32 %v1543, %v1999
        %v2256 = vadd.f32 %v1544, %v2000
        %v2257 = vadd.f32 %v1545, %v2001
        %v2258 = vadd.f32 %v1546, %v2002
        %v2259 = vadd.f32 %v1547, %v2003
        %v2260 = vadd.f32 %v1548, %v2004
        %v2261 = vadd.f32 %v1549, %v2005
        %v2262 = vadd.f32 %v1550, %v2006
        %v2263 = vadd.f32 %v1551, %v2007
        %v2264 = vadd.f32 %v1552, %v2008
        %v2265 = vadd.f32 %v1553, %v2009
        %v2266 = vadd.f32 %v1554, %v2010
        %v2267 = vadd.f32 %v1555, %v2011
        %v2268 = vadd.f32 %v1556, %v2012
        %v2269 = vadd.f32 %v1557, %v2013
        %v2270 = vadd.f32 %v1558, %v2014
        %v2271 = vadd.f32 %v1559, %v2015
        %v2272 = vadd.f32 %v1560, %v2016
        %v2273 = vadd.f32 %v1561, %v2017
        %v2274 = vadd.f32 %v1562, %v2018
        %v2275 = vadd.f32 %v1563, %v2019
        %v2276 = vadd.f32 %v1564, %v2020
        %v2277 = vadd.f32 %v1565, %v2021
        %v2278 = vadd.f32 %v1566, %v2022
        %v2279 = vadd.f32 %v1567, %v2023
        %v2280 = vadd.f32 %v1568, %v2024
        %v2281 = vadd.f32 %v1569, %v2025
        %v2282 = vadd.f32 %v1570, %v2026
        %v2283 = vadd.f32 %v1571, %v2027
        %v2284 = vadd.f32 %v1572, %v2028
        %v2285 = vadd.f32 %v1573, %v2029
        %v2286 = vadd.f32 %v1574, %v2030
        %v2287 = vadd.f32 %v1575, %v2031
        %v2288 = vadd.f32 %v1576, %v2032
        %v2289 = vadd.f32 %v1577, %v2033
        %v2290 = vadd.f32 %v1578, %v2034
        %v2291 = vadd.f32 %v1579, %v2035
        %v2292 = vadd.f32 %v1580, %v2036
        %v2293 = vadd.f32 %v1581, %v2037
        %v2294 = vadd.f32 %v1582, %v2038
        %v2295 = vadd.f32 %v1583, %v2039
        %v2296 = vadd.f32 %v1584, %v2040
        %v2297 = vadd.f32 %v1585, %v2041
        %v2298 = vadd.f32 %v1586, %v2042
        %v2299 = vadd.f32 %v1587, %v2043
        %v2300 = vadd.f32 %v1588, %v2044
        %v2301 = vadd.f32 %v1589, %v2045
        %v2302 = vadd.f32 %v1590, %v2046
        %v2303 = vadd.f32 %v1591, %v2047
        %v2304 = vadd.f32 %v1592, %v2048
        %v2305 = vadd.f32 %v1593, %v2049
        %v2306 = vadd.f32 %v1594, %v2050
        %v2307 = vadd.f32 %v1595, %v2051
        %v2308 = vadd.f32 %v1596, %v2052
        %v2309 = vadd.f32 %v1597, %v2053
        %v2310 = vadd.f32 %v1598, %v2054
        %v2311 = vadd.f32 %v1599, %v2055
        %v2312 = vadd.f32 %v1600, %v2056
        %v2313 = vadd.f32 %v1601, %v2057
        %v2314 = vadd.f32 %v1602, %v2058
        %v2315 = vadd.f32 %v1603, %v2059
        %v2316 = vadd.f32 %v1604, %v2060
        %v2317 = vadd.f32 %v1605, %v2061
        %v2318 = vadd.f32 %v1606, %v2062
        %v2319 = vadd.f32 %v1607, %v2063
        %v2320 = vadd.f32 %v1608, %v2064
        %v2321 = vadd.f32 %v1609, %v2065
        %v2322 = vadd.f32 %v1610, %v2066
        %v2323 = vadd.f32 %v1611, %v2067
        %v2324 = vadd.f32 %v1612, %v2068
        %v2325 = vadd.f32 %v1613, %v2069
        %v2326 = vadd.f32 %v1614, %v2070
        %v2327 = vadd.f32 %v1615, %v2071
        %v2328 = vadd.f32 %v1616, %v2072
        %v2329 = vadd.f32 %v1617, %v2073
        %v2330 = vadd.f32 %v1618, %v2074
        %v2331 = vadd.f32 %v1619, %v2075
        %v2332 = vadd.f32 %v1620, %v2076
        %v2333 = vadd.f32 %v1621, %v2077
        %v2334 = vadd.f32 %v1622, %v2078
        %v2335 = vadd.f32 %v1623, %v2079
        %v2336 = vadd.f32 %v1624, %v2080
        %v2337 = vadd.f32 %v1625, %v2081
        %v2338 = vadd.f32 %v1626, %v2082
        %v2339 = vadd.f32 %v1627, %v2083
        %v2340 = vadd.f32 %v1628, %v2084
        %v2341 = vadd.f32 %v1629, %v2085
        %v2342 = vadd.f32 %v1630, %v2086
        %v2343 = vadd.f32 %v1631, %v2087
        %v2344 = vadd.f32 %v1632, %v2088
        %v2345 = vadd.f32 %v1633, %v2089
        %v2346 = vadd.f32 %v1634, %v2090
        %v2347 = vadd.f32 %v1635, %v2091
        %v2348 = vadd.f32 %v1636, %v2092
        %v2349 = vadd.f32 %v1637, %v2093
        %v2350 = vadd.f32 %v1638, %v2094
        %v2351 = vadd.f32 %v1639, %v2095
        %v2352 = vadd.f32 %v1640, %v2096
        %2353 = vset.pattern.permute.xlu0 3
        %2354 = vperm.xlu0 %2353, %v400
        %v2355 = vpop.permute.xlu0 %2354
        %2357 = vset.pattern.permute.xlu0 3
        %2358 = vperm.xlu0 %2357, %v401
        %v2359 = vpop.permute.xlu0 %2358
        %2361 = vset.pattern.permute.xlu0 3
        %2362 = vperm.xlu0 %2361, %v402
        %v2363 = vpop.permute.xlu0 %2362
        %2365 = vset.pattern.permute.xlu0 3
        %2366 = vperm.xlu0 %2365, %v403
        %v2367 = vpop.permute.xlu0 %2366
        %2369 = vset.pattern.permute.xlu0 3
        %2370 = vperm.xlu0 %2369, %v404
        %v2371 = vpop.permute.xlu0 %2370
        %2373 = vset.pattern.permute.xlu0 3
        %2374 = vperm.xlu0 %2373, %v405
        %v2375 = vpop.permute.xlu0 %2374
        %2377 = vset.pattern.permute.xlu0 3
        %2378 = vperm.xlu0 %2377, %v406
        %v2379 = vpop.permute.xlu0 %2378
        %2381 = vset.pattern.permute.xlu0 3
        %2382 = vperm.xlu0 %2381, %v407
        %v2383 = vpop.permute.xlu0 %2382
        %2385 = vset.pattern.permute.xlu0 3
        %2386 = vperm.xlu0 %2385, %v408
        %v2387 = vpop.permute.xlu0 %2386
        %2389 = vset.pattern.permute.xlu0 3
        %2390 = vperm.xlu0 %2389, %v409
        %v2391 = vpop.permute.xlu0 %2390
        %2393 = vset.pattern.permute.xlu0 3
        %2394 = vperm.xlu0 %2393, %v410
        %v2395 = vpop.permute.xlu0 %2394
        %2397 = vset.pattern.permute.xlu0 3
        %2398 = vperm.xlu0 %2397, %v411
        %v2399 = vpop.permute.xlu0 %2398
        %2401 = vset.pattern.permute.xlu0 3
        %2402 = vperm.xlu0 %2401, %v412
        %v2403 = vpop.permute.xlu0 %2402
        %2405 = vset.pattern.permute.xlu0 3
        %2406 = vperm.xlu0 %2405, %v413
        %v2407 = vpop.permute.xlu0 %2406
        %2409 = vset.pattern.permute.xlu0 3
        %2410 = vperm.xlu0 %2409, %v414
        %v2411 = vpop.permute.xlu0 %2410
        %2413 = vset.pattern.permute.xlu0 3
        %2414 = vperm.xlu0 %2413, %v415
        %v2415 = vpop.permute.xlu0 %2414
        %2417 = vset.pattern.permute.xlu0 3
        %2418 = vperm.xlu0 %2417, %v416
        %v2419 = vpop.permute.xlu0 %2418
        %2421 = vset.pattern.permute.xlu0 3
        %2422 = vperm.xlu0 %2421, %v417
        %v2423 = vpop.permute.xlu0 %2422
        %2425 = vset.pattern.permute.xlu0 3
        %2426 = vperm.xlu0 %2425, %v418
        %v2427 = vpop.permute.xlu0 %2426
        %2429 = vset.pattern.permute.xlu0 3
        %2430 = vperm.xlu0 %2429, %v419
        %v2431 = vpop.permute.xlu0 %2430
        %2433 = vset.pattern.permute.xlu0 3
        %2434 = vperm.xlu0 %2433, %v420
        %v2435 = vpop.permute.xlu0 %2434
        %2437 = vset.pattern.permute.xlu0 3
        %2438 = vperm.xlu0 %2437, %v421
        %v2439 = vpop.permute.xlu0 %2438
        %2441 = vset.pattern.permute.xlu0 3
        %2442 = vperm.xlu0 %2441, %v422
        %v2443 = vpop.permute.xlu0 %2442
        %2445 = vset.pattern.permute.xlu0 3
        %2446 = vperm.xlu0 %2445, %v423
        %v2447 = vpop.permute.xlu0 %2446
        %2449 = vset.pattern.permute.xlu0 3
        %2450 = vperm.xlu0 %2449, %v424
        %v2451 = vpop.permute.xlu0 %2450
        %2453 = vset.pattern.permute.xlu0 3
        %2454 = vperm.xlu0 %2453, %v425
        %v2455 = vpop.permute.xlu0 %2454
        %2457 = vset.pattern.permute.xlu0 3
        %2458 = vperm.xlu0 %2457, %v426
        %v2459 = vpop.permute.xlu0 %2458
        %2461 = vset.pattern.permute.xlu0 3
        %2462 = vperm.xlu0 %2461, %v427
        %v2463 = vpop.permute.xlu0 %2462
        %2465 = vset.pattern.permute.xlu0 3
        %2466 = vperm.xlu0 %2465, %v428
        %v2467 = vpop.permute.xlu0 %2466
        %2469 = vset.pattern.permute.xlu0 3
        %2470 = vperm.xlu0 %2469, %v429
        %v2471 = vpop.permute.xlu0 %2470
        %2473 = vset.pattern.permute.xlu0 3
        %2474 = vperm.xlu0 %2473, %v430
        %v2475 = vpop.permute.xlu0 %2474
        %2477 = vset.pattern.permute.xlu0 3
        %2478 = vperm.xlu0 %2477, %v431
        %v2479 = vpop.permute.xlu0 %2478
        %v2481 = vlaneseq
        %v2482 = vshrl.u32 %v2481, 7
        %v2483 = vsub.s32 3, %v2482
        %v2484 = vrot.slane %v433, %v2483
        %v2485 = vlaneseq
        %v2486 = vshrl.u32 %v2485, 7
        %v2487 = vsub.s32 7, %v2486
        %v2488 = vrot.slane %v433, %v2487
        %v2489 = vlaneseq
        %v2490 = vshrl.u32 %v2489, 7
        %v2491 = vsub.s32 3, %v2490
        %v2492 = vrot.slane %v434, %v2491
        %v2493 = vlaneseq
        %v2494 = vshrl.u32 %v2493, 7
        %v2495 = vsub.s32 7, %v2494
        %v2496 = vrot.slane %v434, %v2495
        %v2497 = vlaneseq
        %v2498 = vshrl.u32 %v2497, 7
        %v2499 = vsub.s32 3, %v2498
        %v2500 = vrot.slane %v435, %v2499
        %v2501 = vlaneseq
        %v2502 = vshrl.u32 %v2501, 7
        %v2503 = vsub.s32 7, %v2502
        %v2504 = vrot.slane %v435, %v2503
        %v2505 = vlaneseq
        %v2506 = vshrl.u32 %v2505, 7
        %v2507 = vsub.s32 3, %v2506
        %v2508 = vrot.slane %v436, %v2507
        %v2509 = vlaneseq
        %v2510 = vshrl.u32 %v2509, 7
        %v2511 = vsub.s32 7, %v2510
        %v2512 = vrot.slane %v436, %v2511
        %v2521 = vlaneseq
        %v2522 = vshrl.u32 %v2521, 7
        %v2523 = vsub.s32 3, %v2522
        %v2524 = vrot.slane %v2484, %v2523
        %v2525 = vlaneseq
        %v2526 = vshrl.u32 %v2525, 7
        %v2527 = vsub.s32 3, %v2526
        %v2528 = vrot.slane %v2488, %v2527
        %v2529 = vlaneseq
        %v2530 = vshrl.u32 %v2529, 7
        %v2531 = vsub.s32 3, %v2530
        %v2532 = vrot.slane %v2492, %v2531
        %v2533 = vlaneseq
        %v2534 = vshrl.u32 %v2533, 7
        %v2535 = vsub.s32 3, %v2534
        %v2536 = vrot.slane %v2496, %v2535
        %v2537 = vlaneseq
        %v2538 = vshrl.u32 %v2537, 7
        %v2539 = vsub.s32 3, %v2538
        %v2540 = vrot.slane %v2500, %v2539
        %v2541 = vlaneseq
        %v2542 = vshrl.u32 %v2541, 7
        %v2543 = vsub.s32 3, %v2542
        %v2544 = vrot.slane %v2504, %v2543
        %v2545 = vlaneseq
        %v2546 = vshrl.u32 %v2545, 7
        %v2547 = vsub.s32 3, %v2546
        %v2548 = vrot.slane %v2508, %v2547
        %v2549 = vlaneseq
        %v2550 = vshrl.u32 %v2549, 7
        %v2551 = vsub.s32 3, %v2550
        %v2552 = vrot.slane %v2512, %v2551
        %v2553 = vmul.f32 %v2355, %v2524
        %v2554 = vmul.f32 %v2355, %v2528
        %v2555 = vmul.f32 %v2355, %v2532
        %v2556 = vmul.f32 %v2355, %v2536
        %v2557 = vmul.f32 %v2355, %v2540
        %v2558 = vmul.f32 %v2355, %v2544
        %v2559 = vmul.f32 %v2355, %v2548
        %v2560 = vmul.f32 %v2355, %v2552
        %v2561 = vmul.f32 %v2359, %v2524
        %v2562 = vmul.f32 %v2359, %v2528
        %v2563 = vmul.f32 %v2359, %v2532
        %v2564 = vmul.f32 %v2359, %v2536
        %v2565 = vmul.f32 %v2359, %v2540
        %v2566 = vmul.f32 %v2359, %v2544
        %v2567 = vmul.f32 %v2359, %v2548
        %v2568 = vmul.f32 %v2359, %v2552
        %v2569 = vmul.f32 %v2363, %v2524
        %v2570 = vmul.f32 %v2363, %v2528
        %v2571 = vmul.f32 %v2363, %v2532
        %v2572 = vmul.f32 %v2363, %v2536
        %v2573 = vmul.f32 %v2363, %v2540
        %v2574 = vmul.f32 %v2363, %v2544
        %v2575 = vmul.f32 %v2363, %v2548
        %v2576 = vmul.f32 %v2363, %v2552
        %v2577 = vmul.f32 %v2367, %v2524
        %v2578 = vmul.f32 %v2367, %v2528
        %v2579 = vmul.f32 %v2367, %v2532
        %v2580 = vmul.f32 %v2367, %v2536
        %v2581 = vmul.f32 %v2367, %v2540
        %v2582 = vmul.f32 %v2367, %v2544
        %v2583 = vmul.f32 %v2367, %v2548
        %v2584 = vmul.f32 %v2367, %v2552
        %v2585 = vmul.f32 %v2371, %v2524
        %v2586 = vmul.f32 %v2371, %v2528
        %v2587 = vmul.f32 %v2371, %v2532
        %v2588 = vmul.f32 %v2371, %v2536
        %v2589 = vmul.f32 %v2371, %v2540
        %v2590 = vmul.f32 %v2371, %v2544
        %v2591 = vmul.f32 %v2371, %v2548
        %v2592 = vmul.f32 %v2371, %v2552
        %v2593 = vmul.f32 %v2375, %v2524
        %v2594 = vmul.f32 %v2375, %v2528
        %v2595 = vmul.f32 %v2375, %v2532
        %v2596 = vmul.f32 %v2375, %v2536
        %v2597 = vmul.f32 %v2375, %v2540
        %v2598 = vmul.f32 %v2375, %v2544
        %v2599 = vmul.f32 %v2375, %v2548
        %v2600 = vmul.f32 %v2375, %v2552
        %v2601 = vmul.f32 %v2379, %v2524
        %v2602 = vmul.f32 %v2379, %v2528
        %v2603 = vmul.f32 %v2379, %v2532
        %v2604 = vmul.f32 %v2379, %v2536
        %v2605 = vmul.f32 %v2379, %v2540
        %v2606 = vmul.f32 %v2379, %v2544
        %v2607 = vmul.f32 %v2379, %v2548
        %v2608 = vmul.f32 %v2379, %v2552
        %v2609 = vmul.f32 %v2383, %v2524
        %v2610 = vmul.f32 %v2383, %v2528
        %v2611 = vmul.f32 %v2383, %v2532
        %v2612 = vmul.f32 %v2383, %v2536
        %v2613 = vmul.f32 %v2383, %v2540
        %v2614 = vmul.f32 %v2383, %v2544
        %v2615 = vmul.f32 %v2383, %v2548
        %v2616 = vmul.f32 %v2383, %v2552
        %v2617 = vmul.f32 %v2387, %v2524
        %v2618 = vmul.f32 %v2387, %v2528
        %v2619 = vmul.f32 %v2387, %v2532
        %v2620 = vmul.f32 %v2387, %v2536
        %v2621 = vmul.f32 %v2387, %v2540
        %v2622 = vmul.f32 %v2387, %v2544
        %v2623 = vmul.f32 %v2387, %v2548
        %v2624 = vmul.f32 %v2387, %v2552
        %v2625 = vmul.f32 %v2391, %v2524
        %v2626 = vmul.f32 %v2391, %v2528
        %v2627 = vmul.f32 %v2391, %v2532
        %v2628 = vmul.f32 %v2391, %v2536
        %v2629 = vmul.f32 %v2391, %v2540
        %v2630 = vmul.f32 %v2391, %v2544
        %v2631 = vmul.f32 %v2391, %v2548
        %v2632 = vmul.f32 %v2391, %v2552
        %v2633 = vmul.f32 %v2395, %v2524
        %v2634 = vmul.f32 %v2395, %v2528
        %v2635 = vmul.f32 %v2395, %v2532
        %v2636 = vmul.f32 %v2395, %v2536
        %v2637 = vmul.f32 %v2395, %v2540
        %v2638 = vmul.f32 %v2395, %v2544
        %v2639 = vmul.f32 %v2395, %v2548
        %v2640 = vmul.f32 %v2395, %v2552
        %v2641 = vmul.f32 %v2399, %v2524
        %v2642 = vmul.f32 %v2399, %v2528
        %v2643 = vmul.f32 %v2399, %v2532
        %v2644 = vmul.f32 %v2399, %v2536
        %v2645 = vmul.f32 %v2399, %v2540
        %v2646 = vmul.f32 %v2399, %v2544
        %v2647 = vmul.f32 %v2399, %v2548
        %v2648 = vmul.f32 %v2399, %v2552
        %v2649 = vmul.f32 %v2403, %v2524
        %v2650 = vmul.f32 %v2403, %v2528
        %v2651 = vmul.f32 %v2403, %v2532
        %v2652 = vmul.f32 %v2403, %v2536
        %v2653 = vmul.f32 %v2403, %v2540
        %v2654 = vmul.f32 %v2403, %v2544
        %v2655 = vmul.f32 %v2403, %v2548
        %v2656 = vmul.f32 %v2403, %v2552
        %v2657 = vmul.f32 %v2407, %v2524
        %v2658 = vmul.f32 %v2407, %v2528
        %v2659 = vmul.f32 %v2407, %v2532
        %v2660 = vmul.f32 %v2407, %v2536
        %v2661 = vmul.f32 %v2407, %v2540
        %v2662 = vmul.f32 %v2407, %v2544
        %v2663 = vmul.f32 %v2407, %v2548
        %v2664 = vmul.f32 %v2407, %v2552
        %v2665 = vmul.f32 %v2411, %v2524
        %v2666 = vmul.f32 %v2411, %v2528
        %v2667 = vmul.f32 %v2411, %v2532
        %v2668 = vmul.f32 %v2411, %v2536
        %v2669 = vmul.f32 %v2411, %v2540
        %v2670 = vmul.f32 %v2411, %v2544
        %v2671 = vmul.f32 %v2411, %v2548
        %v2672 = vmul.f32 %v2411, %v2552
        %v2673 = vmul.f32 %v2415, %v2524
        %v2674 = vmul.f32 %v2415, %v2528
        %v2675 = vmul.f32 %v2415, %v2532
        %v2676 = vmul.f32 %v2415, %v2536
        %v2677 = vmul.f32 %v2415, %v2540
        %v2678 = vmul.f32 %v2415, %v2544
        %v2679 = vmul.f32 %v2415, %v2548
        %v2680 = vmul.f32 %v2415, %v2552
        %v2681 = vmul.f32 %v2419, %v2524
        %v2682 = vmul.f32 %v2419, %v2528
        %v2683 = vmul.f32 %v2419, %v2532
        %v2684 = vmul.f32 %v2419, %v2536
        %v2685 = vmul.f32 %v2419, %v2540
        %v2686 = vmul.f32 %v2419, %v2544
        %v2687 = vmul.f32 %v2419, %v2548
        %v2688 = vmul.f32 %v2419, %v2552
        %v2689 = vmul.f32 %v2423, %v2524
        %v2690 = vmul.f32 %v2423, %v2528
        %v2691 = vmul.f32 %v2423, %v2532
        %v2692 = vmul.f32 %v2423, %v2536
        %v2693 = vmul.f32 %v2423, %v2540
        %v2694 = vmul.f32 %v2423, %v2544
        %v2695 = vmul.f32 %v2423, %v2548
        %v2696 = vmul.f32 %v2423, %v2552
        %v2697 = vmul.f32 %v2427, %v2524
        %v2698 = vmul.f32 %v2427, %v2528
        %v2699 = vmul.f32 %v2427, %v2532
        %v2700 = vmul.f32 %v2427, %v2536
        %v2701 = vmul.f32 %v2427, %v2540
        %v2702 = vmul.f32 %v2427, %v2544
        %v2703 = vmul.f32 %v2427, %v2548
        %v2704 = vmul.f32 %v2427, %v2552
        %v2705 = vmul.f32 %v2431, %v2524
        %v2706 = vmul.f32 %v2431, %v2528
        %v2707 = vmul.f32 %v2431, %v2532
        %v2708 = vmul.f32 %v2431, %v2536
        %v2709 = vmul.f32 %v2431, %v2540
        %v2710 = vmul.f32 %v2431, %v2544
        %v2711 = vmul.f32 %v2431, %v2548
        %v2712 = vmul.f32 %v2431, %v2552
        %v2713 = vmul.f32 %v2435, %v2524
        %v2714 = vmul.f32 %v2435, %v2528
        %v2715 = vmul.f32 %v2435, %v2532
        %v2716 = vmul.f32 %v2435, %v2536
        %v2717 = vmul.f32 %v2435, %v2540
        %v2718 = vmul.f32 %v2435, %v2544
        %v2719 = vmul.f32 %v2435, %v2548
        %v2720 = vmul.f32 %v2435, %v2552
        %v2721 = vmul.f32 %v2439, %v2524
        %v2722 = vmul.f32 %v2439, %v2528
        %v2723 = vmul.f32 %v2439, %v2532
        %v2724 = vmul.f32 %v2439, %v2536
        %v2725 = vmul.f32 %v2439, %v2540
        %v2726 = vmul.f32 %v2439, %v2544
        %v2727 = vmul.f32 %v2439, %v2548
        %v2728 = vmul.f32 %v2439, %v2552
        %v2729 = vmul.f32 %v2443, %v2524
        %v2730 = vmul.f32 %v2443, %v2528
        %v2731 = vmul.f32 %v2443, %v2532
        %v2732 = vmul.f32 %v2443, %v2536
        %v2733 = vmul.f32 %v2443, %v2540
        %v2734 = vmul.f32 %v2443, %v2544
        %v2735 = vmul.f32 %v2443, %v2548
        %v2736 = vmul.f32 %v2443, %v2552
        %v2737 = vmul.f32 %v2447, %v2524
        %v2738 = vmul.f32 %v2447, %v2528
        %v2739 = vmul.f32 %v2447, %v2532
        %v2740 = vmul.f32 %v2447, %v2536
        %v2741 = vmul.f32 %v2447, %v2540
        %v2742 = vmul.f32 %v2447, %v2544
        %v2743 = vmul.f32 %v2447, %v2548
        %v2744 = vmul.f32 %v2447, %v2552
        %v2745 = vmul.f32 %v2451, %v2524
        %v2746 = vmul.f32 %v2451, %v2528
        %v2747 = vmul.f32 %v2451, %v2532
        %v2748 = vmul.f32 %v2451, %v2536
        %v2749 = vmul.f32 %v2451, %v2540
        %v2750 = vmul.f32 %v2451, %v2544
        %v2751 = vmul.f32 %v2451, %v2548
        %v2752 = vmul.f32 %v2451, %v2552
        %v2753 = vmul.f32 %v2455, %v2524
        %v2754 = vmul.f32 %v2455, %v2528
        %v2755 = vmul.f32 %v2455, %v2532
        %v2756 = vmul.f32 %v2455, %v2536
        %v2757 = vmul.f32 %v2455, %v2540
        %v2758 = vmul.f32 %v2455, %v2544
        %v2759 = vmul.f32 %v2455, %v2548
        %v2760 = vmul.f32 %v2455, %v2552
        %v2761 = vmul.f32 %v2459, %v2524
        %v2762 = vmul.f32 %v2459, %v2528
        %v2763 = vmul.f32 %v2459, %v2532
        %v2764 = vmul.f32 %v2459, %v2536
        %v2765 = vmul.f32 %v2459, %v2540
        %v2766 = vmul.f32 %v2459, %v2544
        %v2767 = vmul.f32 %v2459, %v2548
        %v2768 = vmul.f32 %v2459, %v2552
        %v2769 = vmul.f32 %v2463, %v2524
        %v2770 = vmul.f32 %v2463, %v2528
        %v2771 = vmul.f32 %v2463, %v2532
        %v2772 = vmul.f32 %v2463, %v2536
        %v2773 = vmul.f32 %v2463, %v2540
        %v2774 = vmul.f32 %v2463, %v2544
        %v2775 = vmul.f32 %v2463, %v2548
        %v2776 = vmul.f32 %v2463, %v2552
        %v2777 = vmul.f32 %v2467, %v2524
        %v2778 = vmul.f32 %v2467, %v2528
        %v2779 = vmul.f32 %v2467, %v2532
        %v2780 = vmul.f32 %v2467, %v2536
        %v2781 = vmul.f32 %v2467, %v2540
        %v2782 = vmul.f32 %v2467, %v2544
        %v2783 = vmul.f32 %v2467, %v2548
        %v2784 = vmul.f32 %v2467, %v2552
        %v2785 = vmul.f32 %v2471, %v2524
        %v2786 = vmul.f32 %v2471, %v2528
        %v2787 = vmul.f32 %v2471, %v2532
        %v2788 = vmul.f32 %v2471, %v2536
        %v2789 = vmul.f32 %v2471, %v2540
        %v2790 = vmul.f32 %v2471, %v2544
        %v2791 = vmul.f32 %v2471, %v2548
        %v2792 = vmul.f32 %v2471, %v2552
        %v2793 = vmul.f32 %v2475, %v2524
        %v2794 = vmul.f32 %v2475, %v2528
        %v2795 = vmul.f32 %v2475, %v2532
        %v2796 = vmul.f32 %v2475, %v2536
        %v2797 = vmul.f32 %v2475, %v2540
        %v2798 = vmul.f32 %v2475, %v2544
        %v2799 = vmul.f32 %v2475, %v2548
        %v2800 = vmul.f32 %v2475, %v2552
        %v2801 = vmul.f32 %v2479, %v2524
        %v2802 = vmul.f32 %v2479, %v2528
        %v2803 = vmul.f32 %v2479, %v2532
        %v2804 = vmul.f32 %v2479, %v2536
        %v2805 = vmul.f32 %v2479, %v2540
        %v2806 = vmul.f32 %v2479, %v2544
        %v2807 = vmul.f32 %v2479, %v2548
        %v2808 = vmul.f32 %v2479, %v2552
        %v2809 = vadd.f32 %v2097, %v2553
        %v2810 = vadd.f32 %v2098, %v2554
        %v2811 = vadd.f32 %v2099, %v2555
        %v2812 = vadd.f32 %v2100, %v2556
        %v2813 = vadd.f32 %v2101, %v2557
        %v2814 = vadd.f32 %v2102, %v2558
        %v2815 = vadd.f32 %v2103, %v2559
        %v2816 = vadd.f32 %v2104, %v2560
        %v2817 = vadd.f32 %v2105, %v2561
        %v2818 = vadd.f32 %v2106, %v2562
        %v2819 = vadd.f32 %v2107, %v2563
        %v2820 = vadd.f32 %v2108, %v2564
        %v2821 = vadd.f32 %v2109, %v2565
        %v2822 = vadd.f32 %v2110, %v2566
        %v2823 = vadd.f32 %v2111, %v2567
        %v2824 = vadd.f32 %v2112, %v2568
        %v2825 = vadd.f32 %v2113, %v2569
        %v2826 = vadd.f32 %v2114, %v2570
        %v2827 = vadd.f32 %v2115, %v2571
        %v2828 = vadd.f32 %v2116, %v2572
        %v2829 = vadd.f32 %v2117, %v2573
        %v2830 = vadd.f32 %v2118, %v2574
        %v2831 = vadd.f32 %v2119, %v2575
        %v2832 = vadd.f32 %v2120, %v2576
        %v2833 = vadd.f32 %v2121, %v2577
        %v2834 = vadd.f32 %v2122, %v2578
        %v2835 = vadd.f32 %v2123, %v2579
        %v2836 = vadd.f32 %v2124, %v2580
        %v2837 = vadd.f32 %v2125, %v2581
        %v2838 = vadd.f32 %v2126, %v2582
        %v2839 = vadd.f32 %v2127, %v2583
        %v2840 = vadd.f32 %v2128, %v2584
        %v2841 = vadd.f32 %v2129, %v2585
        %v2842 = vadd.f32 %v2130, %v2586
        %v2843 = vadd.f32 %v2131, %v2587
        %v2844 = vadd.f32 %v2132, %v2588
        %v2845 = vadd.f32 %v2133, %v2589
        %v2846 = vadd.f32 %v2134, %v2590
        %v2847 = vadd.f32 %v2135, %v2591
        %v2848 = vadd.f32 %v2136, %v2592
        %v2849 = vadd.f32 %v2137, %v2593
        %v2850 = vadd.f32 %v2138, %v2594
        %v2851 = vadd.f32 %v2139, %v2595
        %v2852 = vadd.f32 %v2140, %v2596
        %v2853 = vadd.f32 %v2141, %v2597
        %v2854 = vadd.f32 %v2142, %v2598
        %v2855 = vadd.f32 %v2143, %v2599
        %v2856 = vadd.f32 %v2144, %v2600
        %v2857 = vadd.f32 %v2145, %v2601
        %v2858 = vadd.f32 %v2146, %v2602
        %v2859 = vadd.f32 %v2147, %v2603
        %v2860 = vadd.f32 %v2148, %v2604
        %v2861 = vadd.f32 %v2149, %v2605
        %v2862 = vadd.f32 %v2150, %v2606
        %v2863 = vadd.f32 %v2151, %v2607
        %v2864 = vadd.f32 %v2152, %v2608
        %v2865 = vadd.f32 %v2153, %v2609
        %v2866 = vadd.f32 %v2154, %v2610
        %v2867 = vadd.f32 %v2155, %v2611
        %v2868 = vadd.f32 %v2156, %v2612
        %v2869 = vadd.f32 %v2157, %v2613
        %v2870 = vadd.f32 %v2158, %v2614
        %v2871 = vadd.f32 %v2159, %v2615
        %v2872 = vadd.f32 %v2160, %v2616
        %v2873 = vadd.f32 %v2161, %v2617
        %v2874 = vadd.f32 %v2162, %v2618
        %v2875 = vadd.f32 %v2163, %v2619
        %v2876 = vadd.f32 %v2164, %v2620
        %v2877 = vadd.f32 %v2165, %v2621
        %v2878 = vadd.f32 %v2166, %v2622
        %v2879 = vadd.f32 %v2167, %v2623
        %v2880 = vadd.f32 %v2168, %v2624
        %v2881 = vadd.f32 %v2169, %v2625
        %v2882 = vadd.f32 %v2170, %v2626
        %v2883 = vadd.f32 %v2171, %v2627
        %v2884 = vadd.f32 %v2172, %v2628
        %v2885 = vadd.f32 %v2173, %v2629
        %v2886 = vadd.f32 %v2174, %v2630
        %v2887 = vadd.f32 %v2175, %v2631
        %v2888 = vadd.f32 %v2176, %v2632
        %v2889 = vadd.f32 %v2177, %v2633
        %v2890 = vadd.f32 %v2178, %v2634
        %v2891 = vadd.f32 %v2179, %v2635
        %v2892 = vadd.f32 %v2180, %v2636
        %v2893 = vadd.f32 %v2181, %v2637
        %v2894 = vadd.f32 %v2182, %v2638
        %v2895 = vadd.f32 %v2183, %v2639
        %v2896 = vadd.f32 %v2184, %v2640
        %v2897 = vadd.f32 %v2185, %v2641
        %v2898 = vadd.f32 %v2186, %v2642
        %v2899 = vadd.f32 %v2187, %v2643
        %v2900 = vadd.f32 %v2188, %v2644
        %v2901 = vadd.f32 %v2189, %v2645
        %v2902 = vadd.f32 %v2190, %v2646
        %v2903 = vadd.f32 %v2191, %v2647
        %v2904 = vadd.f32 %v2192, %v2648
        %v2905 = vadd.f32 %v2193, %v2649
        %v2906 = vadd.f32 %v2194, %v2650
        %v2907 = vadd.f32 %v2195, %v2651
        %v2908 = vadd.f32 %v2196, %v2652
        %v2909 = vadd.f32 %v2197, %v2653
        %v2910 = vadd.f32 %v2198, %v2654
        %v2911 = vadd.f32 %v2199, %v2655
        %v2912 = vadd.f32 %v2200, %v2656
        %v2913 = vadd.f32 %v2201, %v2657
        %v2914 = vadd.f32 %v2202, %v2658
        %v2915 = vadd.f32 %v2203, %v2659
        %v2916 = vadd.f32 %v2204, %v2660
        %v2917 = vadd.f32 %v2205, %v2661
        %v2918 = vadd.f32 %v2206, %v2662
        %v2919 = vadd.f32 %v2207, %v2663
        %v2920 = vadd.f32 %v2208, %v2664
        %v2921 = vadd.f32 %v2209, %v2665
        %v2922 = vadd.f32 %v2210, %v2666
        %v2923 = vadd.f32 %v2211, %v2667
        %v2924 = vadd.f32 %v2212, %v2668
        %v2925 = vadd.f32 %v2213, %v2669
        %v2926 = vadd.f32 %v2214, %v2670
        %v2927 = vadd.f32 %v2215, %v2671
        %v2928 = vadd.f32 %v2216, %v2672
        %v2929 = vadd.f32 %v2217, %v2673
        %v2930 = vadd.f32 %v2218, %v2674
        %v2931 = vadd.f32 %v2219, %v2675
        %v2932 = vadd.f32 %v2220, %v2676
        %v2933 = vadd.f32 %v2221, %v2677
        %v2934 = vadd.f32 %v2222, %v2678
        %v2935 = vadd.f32 %v2223, %v2679
        %v2936 = vadd.f32 %v2224, %v2680
        %v2937 = vadd.f32 %v2225, %v2681
        %v2938 = vadd.f32 %v2226, %v2682
        %v2939 = vadd.f32 %v2227, %v2683
        %v2940 = vadd.f32 %v2228, %v2684
        %v2941 = vadd.f32 %v2229, %v2685
        %v2942 = vadd.f32 %v2230, %v2686
        %v2943 = vadd.f32 %v2231, %v2687
        %v2944 = vadd.f32 %v2232, %v2688
        %v2945 = vadd.f32 %v2233, %v2689
        %v2946 = vadd.f32 %v2234, %v2690
        %v2947 = vadd.f32 %v2235, %v2691
        %v2948 = vadd.f32 %v2236, %v2692
        %v2949 = vadd.f32 %v2237, %v2693
        %v2950 = vadd.f32 %v2238, %v2694
        %v2951 = vadd.f32 %v2239, %v2695
        %v2952 = vadd.f32 %v2240, %v2696
        %v2953 = vadd.f32 %v2241, %v2697
        %v2954 = vadd.f32 %v2242, %v2698
        %v2955 = vadd.f32 %v2243, %v2699
        %v2956 = vadd.f32 %v2244, %v2700
        %v2957 = vadd.f32 %v2245, %v2701
        %v2958 = vadd.f32 %v2246, %v2702
        %v2959 = vadd.f32 %v2247, %v2703
        %v2960 = vadd.f32 %v2248, %v2704
        %v2961 = vadd.f32 %v2249, %v2705
        %v2962 = vadd.f32 %v2250, %v2706
        %v2963 = vadd.f32 %v2251, %v2707
        %v2964 = vadd.f32 %v2252, %v2708
        %v2965 = vadd.f32 %v2253, %v2709
        %v2966 = vadd.f32 %v2254, %v2710
        %v2967 = vadd.f32 %v2255, %v2711
        %v2968 = vadd.f32 %v2256, %v2712
        %v2969 = vadd.f32 %v2257, %v2713
        %v2970 = vadd.f32 %v2258, %v2714
        %v2971 = vadd.f32 %v2259, %v2715
        %v2972 = vadd.f32 %v2260, %v2716
        %v2973 = vadd.f32 %v2261, %v2717
        %v2974 = vadd.f32 %v2262, %v2718
        %v2975 = vadd.f32 %v2263, %v2719
        %v2976 = vadd.f32 %v2264, %v2720
        %v2977 = vadd.f32 %v2265, %v2721
        %v2978 = vadd.f32 %v2266, %v2722
        %v2979 = vadd.f32 %v2267, %v2723
        %v2980 = vadd.f32 %v2268, %v2724
        %v2981 = vadd.f32 %v2269, %v2725
        %v2982 = vadd.f32 %v2270, %v2726
        %v2983 = vadd.f32 %v2271, %v2727
        %v2984 = vadd.f32 %v2272, %v2728
        %v2985 = vadd.f32 %v2273, %v2729
        %v2986 = vadd.f32 %v2274, %v2730
        %v2987 = vadd.f32 %v2275, %v2731
        %v2988 = vadd.f32 %v2276, %v2732
        %v2989 = vadd.f32 %v2277, %v2733
        %v2990 = vadd.f32 %v2278, %v2734
        %v2991 = vadd.f32 %v2279, %v2735
        %v2992 = vadd.f32 %v2280, %v2736
        %v2993 = vadd.f32 %v2281, %v2737
        %v2994 = vadd.f32 %v2282, %v2738
        %v2995 = vadd.f32 %v2283, %v2739
        %v2996 = vadd.f32 %v2284, %v2740
        %v2997 = vadd.f32 %v2285, %v2741
        %v2998 = vadd.f32 %v2286, %v2742
        %v2999 = vadd.f32 %v2287, %v2743
        %v3000 = vadd.f32 %v2288, %v2744
        %v3001 = vadd.f32 %v2289, %v2745
        %v3002 = vadd.f32 %v2290, %v2746
        %v3003 = vadd.f32 %v2291, %v2747
        %v3004 = vadd.f32 %v2292, %v2748
        %v3005 = vadd.f32 %v2293, %v2749
        %v3006 = vadd.f32 %v2294, %v2750
        %v3007 = vadd.f32 %v2295, %v2751
        %v3008 = vadd.f32 %v2296, %v2752
        %v3009 = vadd.f32 %v2297, %v2753
        %v3010 = vadd.f32 %v2298, %v2754
        %v3011 = vadd.f32 %v2299, %v2755
        %v3012 = vadd.f32 %v2300, %v2756
        %v3013 = vadd.f32 %v2301, %v2757
        %v3014 = vadd.f32 %v2302, %v2758
        %v3015 = vadd.f32 %v2303, %v2759
        %v3016 = vadd.f32 %v2304, %v2760
        %v3017 = vadd.f32 %v2305, %v2761
        %v3018 = vadd.f32 %v2306, %v2762
        %v3019 = vadd.f32 %v2307, %v2763
        %v3020 = vadd.f32 %v2308, %v2764
        %v3021 = vadd.f32 %v2309, %v2765
        %v3022 = vadd.f32 %v2310, %v2766
        %v3023 = vadd.f32 %v2311, %v2767
        %v3024 = vadd.f32 %v2312, %v2768
        %v3025 = vadd.f32 %v2313, %v2769
        %v3026 = vadd.f32 %v2314, %v2770
        %v3027 = vadd.f32 %v2315, %v2771
        %v3028 = vadd.f32 %v2316, %v2772
        %v3029 = vadd.f32 %v2317, %v2773
        %v3030 = vadd.f32 %v2318, %v2774
        %v3031 = vadd.f32 %v2319, %v2775
        %v3032 = vadd.f32 %v2320, %v2776
        %v3033 = vadd.f32 %v2321, %v2777
        %v3034 = vadd.f32 %v2322, %v2778
        %v3035 = vadd.f32 %v2323, %v2779
        %v3036 = vadd.f32 %v2324, %v2780
        %v3037 = vadd.f32 %v2325, %v2781
        %v3038 = vadd.f32 %v2326, %v2782
        %v3039 = vadd.f32 %v2327, %v2783
        %v3040 = vadd.f32 %v2328, %v2784
        %v3041 = vadd.f32 %v2329, %v2785
        %v3042 = vadd.f32 %v2330, %v2786
        %v3043 = vadd.f32 %v2331, %v2787
        %v3044 = vadd.f32 %v2332, %v2788
        %v3045 = vadd.f32 %v2333, %v2789
        %v3046 = vadd.f32 %v2334, %v2790
        %v3047 = vadd.f32 %v2335, %v2791
        %v3048 = vadd.f32 %v2336, %v2792
        %v3049 = vadd.f32 %v2337, %v2793
        %v3050 = vadd.f32 %v2338, %v2794
        %v3051 = vadd.f32 %v2339, %v2795
        %v3052 = vadd.f32 %v2340, %v2796
        %v3053 = vadd.f32 %v2341, %v2797
        %v3054 = vadd.f32 %v2342, %v2798
        %v3055 = vadd.f32 %v2343, %v2799
        %v3056 = vadd.f32 %v2344, %v2800
        %v3057 = vadd.f32 %v2345, %v2801
        %v3058 = vadd.f32 %v2346, %v2802
        %v3059 = vadd.f32 %v2347, %v2803
        %v3060 = vadd.f32 %v2348, %v2804
        %v3061 = vadd.f32 %v2349, %v2805
        %v3062 = vadd.f32 %v2350, %v2806
        %v3063 = vadd.f32 %v2351, %v2807
        %v3064 = vadd.f32 %v2352, %v2808
        %v3066 = vlaneseq
        %v3067 = vshrl.u32 %v3066, 7
        %v3068 = vsub.s32 0, %v3067
        %v3069 = vrot.slane %v432, %v3068
        %v3070 = vlaneseq
        %v3071 = vshrl.u32 %v3070, 7
        %v3072 = vsub.s32 1, %v3071
        %v3073 = vrot.slane %v432, %v3072
        %v3074 = vlaneseq
        %v3075 = vshrl.u32 %v3074, 7
        %v3076 = vsub.s32 2, %v3075
        %v3077 = vrot.slane %v432, %v3076
        %v3078 = vlaneseq
        %v3079 = vshrl.u32 %v3078, 7
        %v3080 = vsub.s32 3, %v3079
        %v3081 = vrot.slane %v432, %v3080
        %v3082 = vlaneseq
        %v3083 = vshrl.u32 %v3082, 7
        %v3084 = vsub.s32 4, %v3083
        %v3085 = vrot.slane %v432, %v3084
        %v3086 = vlaneseq
        %v3087 = vshrl.u32 %v3086, 7
        %v3088 = vsub.s32 5, %v3087
        %v3089 = vrot.slane %v432, %v3088
        %v3090 = vlaneseq
        %v3091 = vshrl.u32 %v3090, 7
        %v3092 = vsub.s32 6, %v3091
        %v3093 = vrot.slane %v432, %v3092
        %v3094 = vlaneseq
        %v3095 = vshrl.u32 %v3094, 7
        %v3096 = vsub.s32 7, %v3095
        %v3097 = vrot.slane %v432, %v3096
        %v3106 = vadd.f32 %v2809, %v3069
        %v3107 = vadd.f32 %v2810, %v3073
        %v3108 = vadd.f32 %v2811, %v3077
        %v3109 = vadd.f32 %v2812, %v3081
        %v3110 = vadd.f32 %v2813, %v3085
        %v3111 = vadd.f32 %v2814, %v3089
        %v3112 = vadd.f32 %v2815, %v3093
        %v3113 = vadd.f32 %v2816, %v3097
        %v3114 = vadd.f32 %v2817, %v3069
        %v3115 = vadd.f32 %v2818, %v3073
        %v3116 = vadd.f32 %v2819, %v3077
        %v3117 = vadd.f32 %v2820, %v3081
        %v3118 = vadd.f32 %v2821, %v3085
        %v3119 = vadd.f32 %v2822, %v3089
        %v3120 = vadd.f32 %v2823, %v3093
        %v3121 = vadd.f32 %v2824, %v3097
        %v3122 = vadd.f32 %v2825, %v3069
        %v3123 = vadd.f32 %v2826, %v3073
        %v3124 = vadd.f32 %v2827, %v3077
        %v3125 = vadd.f32 %v2828, %v3081
        %v3126 = vadd.f32 %v2829, %v3085
        %v3127 = vadd.f32 %v2830, %v3089
        %v3128 = vadd.f32 %v2831, %v3093
        %v3129 = vadd.f32 %v2832, %v3097
        %v3130 = vadd.f32 %v2833, %v3069
        %v3131 = vadd.f32 %v2834, %v3073
        %v3132 = vadd.f32 %v2835, %v3077
        %v3133 = vadd.f32 %v2836, %v3081
        %v3134 = vadd.f32 %v2837, %v3085
        %v3135 = vadd.f32 %v2838, %v3089
        %v3136 = vadd.f32 %v2839, %v3093
        %v3137 = vadd.f32 %v2840, %v3097
        %v3138 = vadd.f32 %v2841, %v3069
        %v3139 = vadd.f32 %v2842, %v3073
        %v3140 = vadd.f32 %v2843, %v3077
        %v3141 = vadd.f32 %v2844, %v3081
        %v3142 = vadd.f32 %v2845, %v3085
        %v3143 = vadd.f32 %v2846, %v3089
        %v3144 = vadd.f32 %v2847, %v3093
        %v3145 = vadd.f32 %v2848, %v3097
        %v3146 = vadd.f32 %v2849, %v3069
        %v3147 = vadd.f32 %v2850, %v3073
        %v3148 = vadd.f32 %v2851, %v3077
        %v3149 = vadd.f32 %v2852, %v3081
        %v3150 = vadd.f32 %v2853, %v3085
        %v3151 = vadd.f32 %v2854, %v3089
        %v3152 = vadd.f32 %v2855, %v3093
        %v3153 = vadd.f32 %v2856, %v3097
        %v3154 = vadd.f32 %v2857, %v3069
        %v3155 = vadd.f32 %v2858, %v3073
        %v3156 = vadd.f32 %v2859, %v3077
        %v3157 = vadd.f32 %v2860, %v3081
        %v3158 = vadd.f32 %v2861, %v3085
        %v3159 = vadd.f32 %v2862, %v3089
        %v3160 = vadd.f32 %v2863, %v3093
        %v3161 = vadd.f32 %v2864, %v3097
        %v3162 = vadd.f32 %v2865, %v3069
        %v3163 = vadd.f32 %v2866, %v3073
        %v3164 = vadd.f32 %v2867, %v3077
        %v3165 = vadd.f32 %v2868, %v3081
        %v3166 = vadd.f32 %v2869, %v3085
        %v3167 = vadd.f32 %v2870, %v3089
        %v3168 = vadd.f32 %v2871, %v3093
        %v3169 = vadd.f32 %v2872, %v3097
        %v3170 = vadd.f32 %v2873, %v3069
        %v3171 = vadd.f32 %v2874, %v3073
        %v3172 = vadd.f32 %v2875, %v3077
        %v3173 = vadd.f32 %v2876, %v3081
        %v3174 = vadd.f32 %v2877, %v3085
        %v3175 = vadd.f32 %v2878, %v3089
        %v3176 = vadd.f32 %v2879, %v3093
        %v3177 = vadd.f32 %v2880, %v3097
        %v3178 = vadd.f32 %v2881, %v3069
        %v3179 = vadd.f32 %v2882, %v3073
        %v3180 = vadd.f32 %v2883, %v3077
        %v3181 = vadd.f32 %v2884, %v3081
        %v3182 = vadd.f32 %v2885, %v3085
        %v3183 = vadd.f32 %v2886, %v3089
        %v3184 = vadd.f32 %v2887, %v3093
        %v3185 = vadd.f32 %v2888, %v3097
        %v3186 = vadd.f32 %v2889, %v3069
        %v3187 = vadd.f32 %v2890, %v3073
        %v3188 = vadd.f32 %v2891, %v3077
        %v3189 = vadd.f32 %v2892, %v3081
        %v3190 = vadd.f32 %v2893, %v3085
        %v3191 = vadd.f32 %v2894, %v3089
        %v3192 = vadd.f32 %v2895, %v3093
        %v3193 = vadd.f32 %v2896, %v3097
        %v3194 = vadd.f32 %v2897, %v3069
        %v3195 = vadd.f32 %v2898, %v3073
        %v3196 = vadd.f32 %v2899, %v3077
        %v3197 = vadd.f32 %v2900, %v3081
        %v3198 = vadd.f32 %v2901, %v3085
        %v3199 = vadd.f32 %v2902, %v3089
        %v3200 = vadd.f32 %v2903, %v3093
        %v3201 = vadd.f32 %v2904, %v3097
        %v3202 = vadd.f32 %v2905, %v3069
        %v3203 = vadd.f32 %v2906, %v3073
        %v3204 = vadd.f32 %v2907, %v3077
        %v3205 = vadd.f32 %v2908, %v3081
        %v3206 = vadd.f32 %v2909, %v3085
        %v3207 = vadd.f32 %v2910, %v3089
        %v3208 = vadd.f32 %v2911, %v3093
        %v3209 = vadd.f32 %v2912, %v3097
        %v3210 = vadd.f32 %v2913, %v3069
        %v3211 = vadd.f32 %v2914, %v3073
        %v3212 = vadd.f32 %v2915, %v3077
        %v3213 = vadd.f32 %v2916, %v3081
        %v3214 = vadd.f32 %v2917, %v3085
        %v3215 = vadd.f32 %v2918, %v3089
        %v3216 = vadd.f32 %v2919, %v3093
        %v3217 = vadd.f32 %v2920, %v3097
        %v3218 = vadd.f32 %v2921, %v3069
        %v3219 = vadd.f32 %v2922, %v3073
        %v3220 = vadd.f32 %v2923, %v3077
        %v3221 = vadd.f32 %v2924, %v3081
        %v3222 = vadd.f32 %v2925, %v3085
        %v3223 = vadd.f32 %v2926, %v3089
        %v3224 = vadd.f32 %v2927, %v3093
        %v3225 = vadd.f32 %v2928, %v3097
        %v3226 = vadd.f32 %v2929, %v3069
        %v3227 = vadd.f32 %v2930, %v3073
        %v3228 = vadd.f32 %v2931, %v3077
        %v3229 = vadd.f32 %v2932, %v3081
        %v3230 = vadd.f32 %v2933, %v3085
        %v3231 = vadd.f32 %v2934, %v3089
        %v3232 = vadd.f32 %v2935, %v3093
        %v3233 = vadd.f32 %v2936, %v3097
        %v3234 = vadd.f32 %v2937, %v3069
        %v3235 = vadd.f32 %v2938, %v3073
        %v3236 = vadd.f32 %v2939, %v3077
        %v3237 = vadd.f32 %v2940, %v3081
        %v3238 = vadd.f32 %v2941, %v3085
        %v3239 = vadd.f32 %v2942, %v3089
        %v3240 = vadd.f32 %v2943, %v3093
        %v3241 = vadd.f32 %v2944, %v3097
        %v3242 = vadd.f32 %v2945, %v3069
        %v3243 = vadd.f32 %v2946, %v3073
        %v3244 = vadd.f32 %v2947, %v3077
        %v3245 = vadd.f32 %v2948, %v3081
        %v3246 = vadd.f32 %v2949, %v3085
        %v3247 = vadd.f32 %v2950, %v3089
        %v3248 = vadd.f32 %v2951, %v3093
        %v3249 = vadd.f32 %v2952, %v3097
        %v3250 = vadd.f32 %v2953, %v3069
        %v3251 = vadd.f32 %v2954, %v3073
        %v3252 = vadd.f32 %v2955, %v3077
        %v3253 = vadd.f32 %v2956, %v3081
        %v3254 = vadd.f32 %v2957, %v3085
        %v3255 = vadd.f32 %v2958, %v3089
        %v3256 = vadd.f32 %v2959, %v3093
        %v3257 = vadd.f32 %v2960, %v3097
        %v3258 = vadd.f32 %v2961, %v3069
        %v3259 = vadd.f32 %v2962, %v3073
        %v3260 = vadd.f32 %v2963, %v3077
        %v3261 = vadd.f32 %v2964, %v3081
        %v3262 = vadd.f32 %v2965, %v3085
        %v3263 = vadd.f32 %v2966, %v3089
        %v3264 = vadd.f32 %v2967, %v3093
        %v3265 = vadd.f32 %v2968, %v3097
        %v3266 = vadd.f32 %v2969, %v3069
        %v3267 = vadd.f32 %v2970, %v3073
        %v3268 = vadd.f32 %v2971, %v3077
        %v3269 = vadd.f32 %v2972, %v3081
        %v3270 = vadd.f32 %v2973, %v3085
        %v3271 = vadd.f32 %v2974, %v3089
        %v3272 = vadd.f32 %v2975, %v3093
        %v3273 = vadd.f32 %v2976, %v3097
        %v3274 = vadd.f32 %v2977, %v3069
        %v3275 = vadd.f32 %v2978, %v3073
        %v3276 = vadd.f32 %v2979, %v3077
        %v3277 = vadd.f32 %v2980, %v3081
        %v3278 = vadd.f32 %v2981, %v3085
        %v3279 = vadd.f32 %v2982, %v3089
        %v3280 = vadd.f32 %v2983, %v3093
        %v3281 = vadd.f32 %v2984, %v3097
        %v3282 = vadd.f32 %v2985, %v3069
        %v3283 = vadd.f32 %v2986, %v3073
        %v3284 = vadd.f32 %v2987, %v3077
        %v3285 = vadd.f32 %v2988, %v3081
        %v3286 = vadd.f32 %v2989, %v3085
        %v3287 = vadd.f32 %v2990, %v3089
        %v3288 = vadd.f32 %v2991, %v3093
        %v3289 = vadd.f32 %v2992, %v3097
        %v3290 = vadd.f32 %v2993, %v3069
        %v3291 = vadd.f32 %v2994, %v3073
        %v3292 = vadd.f32 %v2995, %v3077
        %v3293 = vadd.f32 %v2996, %v3081
        %v3294 = vadd.f32 %v2997, %v3085
        %v3295 = vadd.f32 %v2998, %v3089
        %v3296 = vadd.f32 %v2999, %v3093
        %v3297 = vadd.f32 %v3000, %v3097
        %v3298 = vadd.f32 %v3001, %v3069
        %v3299 = vadd.f32 %v3002, %v3073
        %v3300 = vadd.f32 %v3003, %v3077
        %v3301 = vadd.f32 %v3004, %v3081
        %v3302 = vadd.f32 %v3005, %v3085
        %v3303 = vadd.f32 %v3006, %v3089
        %v3304 = vadd.f32 %v3007, %v3093
        %v3305 = vadd.f32 %v3008, %v3097
        %v3306 = vadd.f32 %v3009, %v3069
        %v3307 = vadd.f32 %v3010, %v3073
        %v3308 = vadd.f32 %v3011, %v3077
        %v3309 = vadd.f32 %v3012, %v3081
        %v3310 = vadd.f32 %v3013, %v3085
        %v3311 = vadd.f32 %v3014, %v3089
        %v3312 = vadd.f32 %v3015, %v3093
        %v3313 = vadd.f32 %v3016, %v3097
        %v3314 = vadd.f32 %v3017, %v3069
        %v3315 = vadd.f32 %v3018, %v3073
        %v3316 = vadd.f32 %v3019, %v3077
        %v3317 = vadd.f32 %v3020, %v3081
        %v3318 = vadd.f32 %v3021, %v3085
        %v3319 = vadd.f32 %v3022, %v3089
        %v3320 = vadd.f32 %v3023, %v3093
        %v3321 = vadd.f32 %v3024, %v3097
        %v3322 = vadd.f32 %v3025, %v3069
        %v3323 = vadd.f32 %v3026, %v3073
        %v3324 = vadd.f32 %v3027, %v3077
        %v3325 = vadd.f32 %v3028, %v3081
        %v3326 = vadd.f32 %v3029, %v3085
        %v3327 = vadd.f32 %v3030, %v3089
        %v3328 = vadd.f32 %v3031, %v3093
        %v3329 = vadd.f32 %v3032, %v3097
        %v3330 = vadd.f32 %v3033, %v3069
        %v3331 = vadd.f32 %v3034, %v3073
        %v3332 = vadd.f32 %v3035, %v3077
        %v3333 = vadd.f32 %v3036, %v3081
        %v3334 = vadd.f32 %v3037, %v3085
        %v3335 = vadd.f32 %v3038, %v3089
        %v3336 = vadd.f32 %v3039, %v3093
        %v3337 = vadd.f32 %v3040, %v3097
        %v3338 = vadd.f32 %v3041, %v3069
        %v3339 = vadd.f32 %v3042, %v3073
        %v3340 = vadd.f32 %v3043, %v3077
        %v3341 = vadd.f32 %v3044, %v3081
        %v3342 = vadd.f32 %v3045, %v3085
        %v3343 = vadd.f32 %v3046, %v3089
        %v3344 = vadd.f32 %v3047, %v3093
        %v3345 = vadd.f32 %v3048, %v3097
        %v3346 = vadd.f32 %v3049, %v3069
        %v3347 = vadd.f32 %v3050, %v3073
        %v3348 = vadd.f32 %v3051, %v3077
        %v3349 = vadd.f32 %v3052, %v3081
        %v3350 = vadd.f32 %v3053, %v3085
        %v3351 = vadd.f32 %v3054, %v3089
        %v3352 = vadd.f32 %v3055, %v3093
        %v3353 = vadd.f32 %v3056, %v3097
        %v3354 = vadd.f32 %v3057, %v3069
        %v3355 = vadd.f32 %v3058, %v3073
        %v3356 = vadd.f32 %v3059, %v3077
        %v3357 = vadd.f32 %v3060, %v3081
        %v3358 = vadd.f32 %v3061, %v3085
        %v3359 = vadd.f32 %v3062, %v3089
        %v3360 = vadd.f32 %v3063, %v3093
        %v3361 = vadd.f32 %v3064, %v3097
        %v3362 = vmax.f32 %v3106, 0.0
        %v3363 = vmax.f32 %v3107, 0.0
        %v3364 = vmax.f32 %v3108, 0.0
        %v3365 = vmax.f32 %v3109, 0.0
        %v3366 = vmax.f32 %v3110, 0.0
        %v3367 = vmax.f32 %v3111, 0.0
        %v3368 = vmax.f32 %v3112, 0.0
        %v3369 = vmax.f32 %v3113, 0.0
        %v3370 = vmax.f32 %v3114, 0.0
        %v3371 = vmax.f32 %v3115, 0.0
        %v3372 = vmax.f32 %v3116, 0.0
        %v3373 = vmax.f32 %v3117, 0.0
        %v3374 = vmax.f32 %v3118, 0.0
        %v3375 = vmax.f32 %v3119, 0.0
        %v3376 = vmax.f32 %v3120, 0.0
        %v3377 = vmax.f32 %v3121, 0.0
        %v3378 = vmax.f32 %v3122, 0.0
        %v3379 = vmax.f32 %v3123, 0.0
        %v3380 = vmax.f32 %v3124, 0.0
        %v3381 = vmax.f32 %v3125, 0.0
        %v3382 = vmax.f32 %v3126, 0.0
        %v3383 = vmax.f32 %v3127, 0.0
        %v3384 = vmax.f32 %v3128, 0.0
        %v3385 = vmax.f32 %v3129, 0.0
        %v3386 = vmax.f32 %v3130, 0.0
        %v3387 = vmax.f32 %v3131, 0.0
        %v3388 = vmax.f32 %v3132, 0.0
        %v3389 = vmax.f32 %v3133, 0.0
        %v3390 = vmax.f32 %v3134, 0.0
        %v3391 = vmax.f32 %v3135, 0.0
        %v3392 = vmax.f32 %v3136, 0.0
        %v3393 = vmax.f32 %v3137, 0.0
        %v3394 = vmax.f32 %v3138, 0.0
        %v3395 = vmax.f32 %v3139, 0.0
        %v3396 = vmax.f32 %v3140, 0.0
        %v3397 = vmax.f32 %v3141, 0.0
        %v3398 = vmax.f32 %v3142, 0.0
        %v3399 = vmax.f32 %v3143, 0.0
        %v3400 = vmax.f32 %v3144, 0.0
        %v3401 = vmax.f32 %v3145, 0.0
        %v3402 = vmax.f32 %v3146, 0.0
        %v3403 = vmax.f32 %v3147, 0.0
        %v3404 = vmax.f32 %v3148, 0.0
        %v3405 = vmax.f32 %v3149, 0.0
        %v3406 = vmax.f32 %v3150, 0.0
        %v3407 = vmax.f32 %v3151, 0.0
        %v3408 = vmax.f32 %v3152, 0.0
        %v3409 = vmax.f32 %v3153, 0.0
        %v3410 = vmax.f32 %v3154, 0.0
        %v3411 = vmax.f32 %v3155, 0.0
        %v3412 = vmax.f32 %v3156, 0.0
        %v3413 = vmax.f32 %v3157, 0.0
        %v3414 = vmax.f32 %v3158, 0.0
        %v3415 = vmax.f32 %v3159, 0.0
        %v3416 = vmax.f32 %v3160, 0.0
        %v3417 = vmax.f32 %v3161, 0.0
        %v3418 = vmax.f32 %v3162, 0.0
        %v3419 = vmax.f32 %v3163, 0.0
        %v3420 = vmax.f32 %v3164, 0.0
        %v3421 = vmax.f32 %v3165, 0.0
        %v3422 = vmax.f32 %v3166, 0.0
        %v3423 = vmax.f32 %v3167, 0.0
        %v3424 = vmax.f32 %v3168, 0.0
        %v3425 = vmax.f32 %v3169, 0.0
        %v3426 = vmax.f32 %v3170, 0.0
        %v3427 = vmax.f32 %v3171, 0.0
        %v3428 = vmax.f32 %v3172, 0.0
        %v3429 = vmax.f32 %v3173, 0.0
        %v3430 = vmax.f32 %v3174, 0.0
        %v3431 = vmax.f32 %v3175, 0.0
        %v3432 = vmax.f32 %v3176, 0.0
        %v3433 = vmax.f32 %v3177, 0.0
        %v3434 = vmax.f32 %v3178, 0.0
        %v3435 = vmax.f32 %v3179, 0.0
        %v3436 = vmax.f32 %v3180, 0.0
        %v3437 = vmax.f32 %v3181, 0.0
        %v3438 = vmax.f32 %v3182, 0.0
        %v3439 = vmax.f32 %v3183, 0.0
        %v3440 = vmax.f32 %v3184, 0.0
        %v3441 = vmax.f32 %v3185, 0.0
        %v3442 = vmax.f32 %v3186, 0.0
        %v3443 = vmax.f32 %v3187, 0.0
        %v3444 = vmax.f32 %v3188, 0.0
        %v3445 = vmax.f32 %v3189, 0.0
        %v3446 = vmax.f32 %v3190, 0.0
        %v3447 = vmax.f32 %v3191, 0.0
        %v3448 = vmax.f32 %v3192, 0.0
        %v3449 = vmax.f32 %v3193, 0.0
        %v3450 = vmax.f32 %v3194, 0.0
        %v3451 = vmax.f32 %v3195, 0.0
        %v3452 = vmax.f32 %v3196, 0.0
        %v3453 = vmax.f32 %v3197, 0.0
        %v3454 = vmax.f32 %v3198, 0.0
        %v3455 = vmax.f32 %v3199, 0.0
        %v3456 = vmax.f32 %v3200, 0.0
        %v3457 = vmax.f32 %v3201, 0.0
        %v3458 = vmax.f32 %v3202, 0.0
        %v3459 = vmax.f32 %v3203, 0.0
        %v3460 = vmax.f32 %v3204, 0.0
        %v3461 = vmax.f32 %v3205, 0.0
        %v3462 = vmax.f32 %v3206, 0.0
        %v3463 = vmax.f32 %v3207, 0.0
        %v3464 = vmax.f32 %v3208, 0.0
        %v3465 = vmax.f32 %v3209, 0.0
        %v3466 = vmax.f32 %v3210, 0.0
        %v3467 = vmax.f32 %v3211, 0.0
        %v3468 = vmax.f32 %v3212, 0.0
        %v3469 = vmax.f32 %v3213, 0.0
        %v3470 = vmax.f32 %v3214, 0.0
        %v3471 = vmax.f32 %v3215, 0.0
        %v3472 = vmax.f32 %v3216, 0.0
        %v3473 = vmax.f32 %v3217, 0.0
        %v3474 = vmax.f32 %v3218, 0.0
        %v3475 = vmax.f32 %v3219, 0.0
        %v3476 = vmax.f32 %v3220, 0.0
        %v3477 = vmax.f32 %v3221, 0.0
        %v3478 = vmax.f32 %v3222, 0.0
        %v3479 = vmax.f32 %v3223, 0.0
        %v3480 = vmax.f32 %v3224, 0.0
        %v3481 = vmax.f32 %v3225, 0.0
        %v3482 = vmax.f32 %v3226, 0.0
        %v3483 = vmax.f32 %v3227, 0.0
        %v3484 = vmax.f32 %v3228, 0.0
        %v3485 = vmax.f32 %v3229, 0.0
        %v3486 = vmax.f32 %v3230, 0.0
        %v3487 = vmax.f32 %v3231, 0.0
        %v3488 = vmax.f32 %v3232, 0.0
        %v3489 = vmax.f32 %v3233, 0.0
        %v3490 = vmax.f32 %v3234, 0.0
        %v3491 = vmax.f32 %v3235, 0.0
        %v3492 = vmax.f32 %v3236, 0.0
        %v3493 = vmax.f32 %v3237, 0.0
        %v3494 = vmax.f32 %v3238, 0.0
        %v3495 = vmax.f32 %v3239, 0.0
        %v3496 = vmax.f32 %v3240, 0.0
        %v3497 = vmax.f32 %v3241, 0.0
        %v3498 = vmax.f32 %v3242, 0.0
        %v3499 = vmax.f32 %v3243, 0.0
        %v3500 = vmax.f32 %v3244, 0.0
        %v3501 = vmax.f32 %v3245, 0.0
        %v3502 = vmax.f32 %v3246, 0.0
        %v3503 = vmax.f32 %v3247, 0.0
        %v3504 = vmax.f32 %v3248, 0.0
        %v3505 = vmax.f32 %v3249, 0.0
        %v3506 = vmax.f32 %v3250, 0.0
        %v3507 = vmax.f32 %v3251, 0.0
        %v3508 = vmax.f32 %v3252, 0.0
        %v3509 = vmax.f32 %v3253, 0.0
        %v3510 = vmax.f32 %v3254, 0.0
        %v3511 = vmax.f32 %v3255, 0.0
        %v3512 = vmax.f32 %v3256, 0.0
        %v3513 = vmax.f32 %v3257, 0.0
        %v3514 = vmax.f32 %v3258, 0.0
        %v3515 = vmax.f32 %v3259, 0.0
        %v3516 = vmax.f32 %v3260, 0.0
        %v3517 = vmax.f32 %v3261, 0.0
        %v3518 = vmax.f32 %v3262, 0.0
        %v3519 = vmax.f32 %v3263, 0.0
        %v3520 = vmax.f32 %v3264, 0.0
        %v3521 = vmax.f32 %v3265, 0.0
        %v3522 = vmax.f32 %v3266, 0.0
        %v3523 = vmax.f32 %v3267, 0.0
        %v3524 = vmax.f32 %v3268, 0.0
        %v3525 = vmax.f32 %v3269, 0.0
        %v3526 = vmax.f32 %v3270, 0.0
        %v3527 = vmax.f32 %v3271, 0.0
        %v3528 = vmax.f32 %v3272, 0.0
        %v3529 = vmax.f32 %v3273, 0.0
        %v3530 = vmax.f32 %v3274, 0.0
        %v3531 = vmax.f32 %v3275, 0.0
        %v3532 = vmax.f32 %v3276, 0.0
        %v3533 = vmax.f32 %v3277, 0.0
        %v3534 = vmax.f32 %v3278, 0.0
        %v3535 = vmax.f32 %v3279, 0.0
        %v3536 = vmax.f32 %v3280, 0.0
        %v3537 = vmax.f32 %v3281, 0.0
        %v3538 = vmax.f32 %v3282, 0.0
        %v3539 = vmax.f32 %v3283, 0.0
        %v3540 = vmax.f32 %v3284, 0.0
        %v3541 = vmax.f32 %v3285, 0.0
        %v3542 = vmax.f32 %v3286, 0.0
        %v3543 = vmax.f32 %v3287, 0.0
        %v3544 = vmax.f32 %v3288, 0.0
        %v3545 = vmax.f32 %v3289, 0.0
        %v3546 = vmax.f32 %v3290, 0.0
        %v3547 = vmax.f32 %v3291, 0.0
        %v3548 = vmax.f32 %v3292, 0.0
        %v3549 = vmax.f32 %v3293, 0.0
        %v3550 = vmax.f32 %v3294, 0.0
        %v3551 = vmax.f32 %v3295, 0.0
        %v3552 = vmax.f32 %v3296, 0.0
        %v3553 = vmax.f32 %v3297, 0.0
        %v3554 = vmax.f32 %v3298, 0.0
        %v3555 = vmax.f32 %v3299, 0.0
        %v3556 = vmax.f32 %v3300, 0.0
        %v3557 = vmax.f32 %v3301, 0.0
        %v3558 = vmax.f32 %v3302, 0.0
        %v3559 = vmax.f32 %v3303, 0.0
        %v3560 = vmax.f32 %v3304, 0.0
        %v3561 = vmax.f32 %v3305, 0.0
        %v3562 = vmax.f32 %v3306, 0.0
        %v3563 = vmax.f32 %v3307, 0.0
        %v3564 = vmax.f32 %v3308, 0.0
        %v3565 = vmax.f32 %v3309, 0.0
        %v3566 = vmax.f32 %v3310, 0.0
        %v3567 = vmax.f32 %v3311, 0.0
        %v3568 = vmax.f32 %v3312, 0.0
        %v3569 = vmax.f32 %v3313, 0.0
        %v3570 = vmax.f32 %v3314, 0.0
        %v3571 = vmax.f32 %v3315, 0.0
        %v3572 = vmax.f32 %v3316, 0.0
        %v3573 = vmax.f32 %v3317, 0.0
        %v3574 = vmax.f32 %v3318, 0.0
        %v3575 = vmax.f32 %v3319, 0.0
        %v3576 = vmax.f32 %v3320, 0.0
        %v3577 = vmax.f32 %v3321, 0.0
        %v3578 = vmax.f32 %v3322, 0.0
        %v3579 = vmax.f32 %v3323, 0.0
        %v3580 = vmax.f32 %v3324, 0.0
        %v3581 = vmax.f32 %v3325, 0.0
        %v3582 = vmax.f32 %v3326, 0.0
        %v3583 = vmax.f32 %v3327, 0.0
        %v3584 = vmax.f32 %v3328, 0.0
        %v3585 = vmax.f32 %v3329, 0.0
        %v3586 = vmax.f32 %v3330, 0.0
        %v3587 = vmax.f32 %v3331, 0.0
        %v3588 = vmax.f32 %v3332, 0.0
        %v3589 = vmax.f32 %v3333, 0.0
        %v3590 = vmax.f32 %v3334, 0.0
        %v3591 = vmax.f32 %v3335, 0.0
        %v3592 = vmax.f32 %v3336, 0.0
        %v3593 = vmax.f32 %v3337, 0.0
        %v3594 = vmax.f32 %v3338, 0.0
        %v3595 = vmax.f32 %v3339, 0.0
        %v3596 = vmax.f32 %v3340, 0.0
        %v3597 = vmax.f32 %v3341, 0.0
        %v3598 = vmax.f32 %v3342, 0.0
        %v3599 = vmax.f32 %v3343, 0.0
        %v3600 = vmax.f32 %v3344, 0.0
        %v3601 = vmax.f32 %v3345, 0.0
        %v3602 = vmax.f32 %v3346, 0.0
        %v3603 = vmax.f32 %v3347, 0.0
        %v3604 = vmax.f32 %v3348, 0.0
        %v3605 = vmax.f32 %v3349, 0.0
        %v3606 = vmax.f32 %v3350, 0.0
        %v3607 = vmax.f32 %v3351, 0.0
        %v3608 = vmax.f32 %v3352, 0.0
        %v3609 = vmax.f32 %v3353, 0.0
        %v3610 = vmax.f32 %v3354, 0.0
        %v3611 = vmax.f32 %v3355, 0.0
        %v3612 = vmax.f32 %v3356, 0.0
        %v3613 = vmax.f32 %v3357, 0.0
        %v3614 = vmax.f32 %v3358, 0.0
        %v3615 = vmax.f32 %v3359, 0.0
        %v3616 = vmax.f32 %v3360, 0.0
        %v3617 = vmax.f32 %v3361, 0.0
        %v3618 = vld [vmem:[#allocation2] sm:$0xff]
        %v3619 = vld [vmem:[#allocation2 + $0x8] sm:$0xff]
        %v3620 = vadd.f32 %v3362, %v3370
        %v3621 = vadd.f32 %v3620, %v3378
        %v3622 = vadd.f32 %v3621, %v3386
        %v3623 = vadd.f32 %v3622, %v3394
        %v3624 = vadd.f32 %v3623, %v3402
        %v3625 = vadd.f32 %v3624, %v3410
        %v3626 = vadd.f32 %v3625, %v3418
        %v3627 = vadd.f32 %v3626, %v3426
        %v3628 = vadd.f32 %v3627, %v3434
        %v3629 = vadd.f32 %v3628, %v3442
        %v3630 = vadd.f32 %v3629, %v3450
        %v3631 = vadd.f32 %v3630, %v3458
        %v3632 = vadd.f32 %v3631, %v3466
        %v3633 = vadd.f32 %v3632, %v3474
        %v3634 = vadd.f32 %v3633, %v3482
        %v3635 = vrot.slane %v3634, 4
        %v3636 = vadd.f32 %v3634, %v3635
        %v3637 = vrot.slane %v3636, 2
        %v3638 = vadd.f32 %v3636, %v3637
        %v3639 = vrot.slane %v3638, 1
        %v3640 = vadd.f32 %v3638, %v3639
        %v3641 = vadd.f32 %v3363, %v3371
        %v3642 = vadd.f32 %v3641, %v3379
        %v3643 = vadd.f32 %v3642, %v3387
        %v3644 = vadd.f32 %v3643, %v3395
        %v3645 = vadd.f32 %v3644, %v3403
        %v3646 = vadd.f32 %v3645, %v3411
        %v3647 = vadd.f32 %v3646, %v3419
        %v3648 = vadd.f32 %v3647, %v3427
        %v3649 = vadd.f32 %v3648, %v3435
        %v3650 = vadd.f32 %v3649, %v3443
        %v3651 = vadd.f32 %v3650, %v3451
        %v3652 = vadd.f32 %v3651, %v3459
        %v3653 = vadd.f32 %v3652, %v3467
        %v3654 = vadd.f32 %v3653, %v3475
        %v3655 = vadd.f32 %v3654, %v3483
        %v3656 = vrot.slane %v3655, 4
        %v3657 = vadd.f32 %v3655, %v3656
        %v3658 = vrot.slane %v3657, 2
        %v3659 = vadd.f32 %v3657, %v3658
        %v3660 = vrot.slane %v3659, 1
        %v3661 = vadd.f32 %v3659, %v3660
        %v3662 = vadd.f32 %v3364, %v3372
        %v3663 = vadd.f32 %v3662, %v3380
        %v3664 = vadd.f32 %v3663, %v3388
        %v3665 = vadd.f32 %v3664, %v3396
        %v3666 = vadd.f32 %v3665, %v3404
        %v3667 = vadd.f32 %v3666, %v3412
        %v3668 = vadd.f32 %v3667, %v3420
        %v3669 = vadd.f32 %v3668, %v3428
        %v3670 = vadd.f32 %v3669, %v3436
        %v3671 = vadd.f32 %v3670, %v3444
        %v3672 = vadd.f32 %v3671, %v3452
        %v3673 = vadd.f32 %v3672, %v3460
        %v3674 = vadd.f32 %v3673, %v3468
        %v3675 = vadd.f32 %v3674, %v3476
        %v3676 = vadd.f32 %v3675, %v3484
        %v3677 = vrot.slane %v3676, 4
        %v3678 = vadd.f32 %v3676, %v3677
        %v3679 = vrot.slane %v3678, 2
        %v3680 = vadd.f32 %v3678, %v3679
        %v3681 = vrot.slane %v3680, 1
        %v3682 = vadd.f32 %v3680, %v3681
        %v3683 = vadd.f32 %v3365, %v3373
        %v3684 = vadd.f32 %v3683, %v3381
        %v3685 = vadd.f32 %v3684, %v3389
        %v3686 = vadd.f32 %v3685, %v3397
        %v3687 = vadd.f32 %v3686, %v3405
        %v3688 = vadd.f32 %v3687, %v3413
        %v3689 = vadd.f32 %v3688, %v3421
        %v3690 = vadd.f32 %v3689, %v3429
        %v3691 = vadd.f32 %v3690, %v3437
        %v3692 = vadd.f32 %v3691, %v3445
        %v3693 = vadd.f32 %v3692, %v3453
        %v3694 = vadd.f32 %v3693, %v3461
        %v3695 = vadd.f32 %v3694, %v3469
        %v3696 = vadd.f32 %v3695, %v3477
        %v3697 = vadd.f32 %v3696, %v3485
        %v3698 = vrot.slane %v3697, 4
        %v3699 = vadd.f32 %v3697, %v3698
        %v3700 = vrot.slane %v3699, 2
        %v3701 = vadd.f32 %v3699, %v3700
        %v3702 = vrot.slane %v3701, 1
        %v3703 = vadd.f32 %v3701, %v3702
        %v3704 = vadd.f32 %v3366, %v3374
        %v3705 = vadd.f32 %v3704, %v3382
        %v3706 = vadd.f32 %v3705, %v3390
        %v3707 = vadd.f32 %v3706, %v3398
        %v3708 = vadd.f32 %v3707, %v3406
        %v3709 = vadd.f32 %v3708, %v3414
        %v3710 = vadd.f32 %v3709, %v3422
        %v3711 = vadd.f32 %v3710, %v3430
        %v3712 = vadd.f32 %v3711, %v3438
        %v3713 = vadd.f32 %v3712, %v3446
        %v3714 = vadd.f32 %v3713, %v3454
        %v3715 = vadd.f32 %v3714, %v3462
        %v3716 = vadd.f32 %v3715, %v3470
        %v3717 = vadd.f32 %v3716, %v3478
        %v3718 = vadd.f32 %v3717, %v3486
        %v3719 = vrot.slane %v3718, 4
        %v3720 = vadd.f32 %v3718, %v3719
        %v3721 = vrot.slane %v3720, 2
        %v3722 = vadd.f32 %v3720, %v3721
        %v3723 = vrot.slane %v3722, 1
        %v3724 = vadd.f32 %v3722, %v3723
        %v3725 = vadd.f32 %v3367, %v3375
        %v3726 = vadd.f32 %v3725, %v3383
        %v3727 = vadd.f32 %v3726, %v3391
        %v3728 = vadd.f32 %v3727, %v3399
        %v3729 = vadd.f32 %v3728, %v3407
        %v3730 = vadd.f32 %v3729, %v3415
        %v3731 = vadd.f32 %v3730, %v3423
        %v3732 = vadd.f32 %v3731, %v3431
        %v3733 = vadd.f32 %v3732, %v3439
        %v3734 = vadd.f32 %v3733, %v3447
        %v3735 = vadd.f32 %v3734, %v3455
        %v3736 = vadd.f32 %v3735, %v3463
        %v3737 = vadd.f32 %v3736, %v3471
        %v3738 = vadd.f32 %v3737, %v3479
        %v3739 = vadd.f32 %v3738, %v3487
        %v3740 = vrot.slane %v3739, 4
        %v3741 = vadd.f32 %v3739, %v3740
        %v3742 = vrot.slane %v3741, 2
        %v3743 = vadd.f32 %v3741, %v3742
        %v3744 = vrot.slane %v3743, 1
        %v3745 = vadd.f32 %v3743, %v3744
        %v3746 = vadd.f32 %v3368, %v3376
        %v3747 = vadd.f32 %v3746, %v3384
        %v3748 = vadd.f32 %v3747, %v3392
        %v3749 = vadd.f32 %v3748, %v3400
        %v3750 = vadd.f32 %v3749, %v3408
        %v3751 = vadd.f32 %v3750, %v3416
        %v3752 = vadd.f32 %v3751, %v3424
        %v3753 = vadd.f32 %v3752, %v3432
        %v3754 = vadd.f32 %v3753, %v3440
        %v3755 = vadd.f32 %v3754, %v3448
        %v3756 = vadd.f32 %v3755, %v3456
        %v3757 = vadd.f32 %v3756, %v3464
        %v3758 = vadd.f32 %v3757, %v3472
        %v3759 = vadd.f32 %v3758, %v3480
        %v3760 = vadd.f32 %v3759, %v3488
        %v3761 = vrot.slane %v3760, 4
        %v3762 = vadd.f32 %v3760, %v3761
        %v3763 = vrot.slane %v3762, 2
        %v3764 = vadd.f32 %v3762, %v3763
        %v3765 = vrot.slane %v3764, 1
        %v3766 = vadd.f32 %v3764, %v3765
        %v3767 = vadd.f32 %v3369, %v3377
        %v3768 = vadd.f32 %v3767, %v3385
        %v3769 = vadd.f32 %v3768, %v3393
        %v3770 = vadd.f32 %v3769, %v3401
        %v3771 = vadd.f32 %v3770, %v3409
        %v3772 = vadd.f32 %v3771, %v3417
        %v3773 = vadd.f32 %v3772, %v3425
        %v3774 = vadd.f32 %v3773, %v3433
        %v3775 = vadd.f32 %v3774, %v3441
        %v3776 = vadd.f32 %v3775, %v3449
        %v3777 = vadd.f32 %v3776, %v3457
        %v3778 = vadd.f32 %v3777, %v3465
        %v3779 = vadd.f32 %v3778, %v3473
        %v3780 = vadd.f32 %v3779, %v3481
        %v3781 = vadd.f32 %v3780, %v3489
        %v3782 = vrot.slane %v3781, 4
        %v3783 = vadd.f32 %v3781, %v3782
        %v3784 = vrot.slane %v3783, 2
        %v3785 = vadd.f32 %v3783, %v3784
        %v3786 = vrot.slane %v3785, 1
        %v3787 = vadd.f32 %v3785, %v3786
        %v3788 = vadd.f32 %v3490, %v3498
        %v3789 = vadd.f32 %v3788, %v3506
        %v3790 = vadd.f32 %v3789, %v3514
        %v3791 = vadd.f32 %v3790, %v3522
        %v3792 = vadd.f32 %v3791, %v3530
        %v3793 = vadd.f32 %v3792, %v3538
        %v3794 = vadd.f32 %v3793, %v3546
        %v3795 = vadd.f32 %v3794, %v3554
        %v3796 = vadd.f32 %v3795, %v3562
        %v3797 = vadd.f32 %v3796, %v3570
        %v3798 = vadd.f32 %v3797, %v3578
        %v3799 = vadd.f32 %v3798, %v3586
        %v3800 = vadd.f32 %v3799, %v3594
        %v3801 = vadd.f32 %v3800, %v3602
        %v3802 = vadd.f32 %v3801, %v3610
        %v3803 = vrot.slane %v3802, 4
        %v3804 = vadd.f32 %v3802, %v3803
        %v3805 = vrot.slane %v3804, 2
        %v3806 = vadd.f32 %v3804, %v3805
        %v3807 = vrot.slane %v3806, 1
        %v3808 = vadd.f32 %v3806, %v3807
        %v3809 = vadd.f32 %v3491, %v3499
        %v3810 = vadd.f32 %v3809, %v3507
        %v3811 = vadd.f32 %v3810, %v3515
        %v3812 = vadd.f32 %v3811, %v3523
        %v3813 = vadd.f32 %v3812, %v3531
        %v3814 = vadd.f32 %v3813, %v3539
        %v3815 = vadd.f32 %v3814, %v3547
        %v3816 = vadd.f32 %v3815, %v3555
        %v3817 = vadd.f32 %v3816, %v3563
        %v3818 = vadd.f32 %v3817, %v3571
        %v3819 = vadd.f32 %v3818, %v3579
        %v3820 = vadd.f32 %v3819, %v3587
        %v3821 = vadd.f32 %v3820, %v3595
        %v3822 = vadd.f32 %v3821, %v3603
        %v3823 = vadd.f32 %v3822, %v3611
        %v3824 = vrot.slane %v3823, 4
        %v3825 = vadd.f32 %v3823, %v3824
        %v3826 = vrot.slane %v3825, 2
        %v3827 = vadd.f32 %v3825, %v3826
        %v3828 = vrot.slane %v3827, 1
        %v3829 = vadd.f32 %v3827, %v3828
        %v3830 = vadd.f32 %v3492, %v3500
        %v3831 = vadd.f32 %v3830, %v3508
        %v3832 = vadd.f32 %v3831, %v3516
        %v3833 = vadd.f32 %v3832, %v3524
        %v3834 = vadd.f32 %v3833, %v3532
        %v3835 = vadd.f32 %v3834, %v3540
        %v3836 = vadd.f32 %v3835, %v3548
        %v3837 = vadd.f32 %v3836, %v3556
        %v3838 = vadd.f32 %v3837, %v3564
        %v3839 = vadd.f32 %v3838, %v3572
        %v3840 = vadd.f32 %v3839, %v3580
        %v3841 = vadd.f32 %v3840, %v3588
        %v3842 = vadd.f32 %v3841, %v3596
        %v3843 = vadd.f32 %v3842, %v3604
        %v3844 = vadd.f32 %v3843, %v3612
        %v3845 = vrot.slane %v3844, 4
        %v3846 = vadd.f32 %v3844, %v3845
        %v3847 = vrot.slane %v3846, 2
        %v3848 = vadd.f32 %v3846, %v3847
        %v3849 = vrot.slane %v3848, 1
        %v3850 = vadd.f32 %v3848, %v3849
        %v3851 = vadd.f32 %v3493, %v3501
        %v3852 = vadd.f32 %v3851, %v3509
        %v3853 = vadd.f32 %v3852, %v3517
        %v3854 = vadd.f32 %v3853, %v3525
        %v3855 = vadd.f32 %v3854, %v3533
        %v3856 = vadd.f32 %v3855, %v3541
        %v3857 = vadd.f32 %v3856, %v3549
        %v3858 = vadd.f32 %v3857, %v3557
        %v3859 = vadd.f32 %v3858, %v3565
        %v3860 = vadd.f32 %v3859, %v3573
        %v3861 = vadd.f32 %v3860, %v3581
        %v3862 = vadd.f32 %v3861, %v3589
        %v3863 = vadd.f32 %v3862, %v3597
        %v3864 = vadd.f32 %v3863, %v3605
        %v3865 = vadd.f32 %v3864, %v3613
        %v3866 = vrot.slane %v3865, 4
        %v3867 = vadd.f32 %v3865, %v3866
        %v3868 = vrot.slane %v3867, 2
        %v3869 = vadd.f32 %v3867, %v3868
        %v3870 = vrot.slane %v3869, 1
        %v3871 = vadd.f32 %v3869, %v3870
        %v3872 = vadd.f32 %v3494, %v3502
        %v3873 = vadd.f32 %v3872, %v3510
        %v3874 = vadd.f32 %v3873, %v3518
        %v3875 = vadd.f32 %v3874, %v3526
        %v3876 = vadd.f32 %v3875, %v3534
        %v3877 = vadd.f32 %v3876, %v3542
        %v3878 = vadd.f32 %v3877, %v3550
        %v3879 = vadd.f32 %v3878, %v3558
        %v3880 = vadd.f32 %v3879, %v3566
        %v3881 = vadd.f32 %v3880, %v3574
        %v3882 = vadd.f32 %v3881, %v3582
        %v3883 = vadd.f32 %v3882, %v3590
        %v3884 = vadd.f32 %v3883, %v3598
        %v3885 = vadd.f32 %v3884, %v3606
        %v3886 = vadd.f32 %v3885, %v3614
        %v3887 = vrot.slane %v3886, 4
        %v3888 = vadd.f32 %v3886, %v3887
        %v3889 = vrot.slane %v3888, 2
        %v3890 = vadd.f32 %v3888, %v3889
        %v3891 = vrot.slane %v3890, 1
        %v3892 = vadd.f32 %v3890, %v3891
        %v3893 = vadd.f32 %v3495, %v3503
        %v3894 = vadd.f32 %v3893, %v3511
        %v3895 = vadd.f32 %v3894, %v3519
        %v3896 = vadd.f32 %v3895, %v3527
        %v3897 = vadd.f32 %v3896, %v3535
        %v3898 = vadd.f32 %v3897, %v3543
        %v3899 = vadd.f32 %v3898, %v3551
        %v3900 = vadd.f32 %v3899, %v3559
        %v3901 = vadd.f32 %v3900, %v3567
        %v3902 = vadd.f32 %v3901, %v3575
        %v3903 = vadd.f32 %v3902, %v3583
        %v3904 = vadd.f32 %v3903, %v3591
        %v3905 = vadd.f32 %v3904, %v3599
        %v3906 = vadd.f32 %v3905, %v3607
        %v3907 = vadd.f32 %v3906, %v3615
        %v3908 = vrot.slane %v3907, 4
        %v3909 = vadd.f32 %v3907, %v3908
        %v3910 = vrot.slane %v3909, 2
        %v3911 = vadd.f32 %v3909, %v3910
        %v3912 = vrot.slane %v3911, 1
        %v3913 = vadd.f32 %v3911, %v3912
        %v3914 = vadd.f32 %v3496, %v3504
        %v3915 = vadd.f32 %v3914, %v3512
        %v3916 = vadd.f32 %v3915, %v3520
        %v3917 = vadd.f32 %v3916, %v3528
        %v3918 = vadd.f32 %v3917, %v3536
        %v3919 = vadd.f32 %v3918, %v3544
        %v3920 = vadd.f32 %v3919, %v3552
        %v3921 = vadd.f32 %v3920, %v3560
        %v3922 = vadd.f32 %v3921, %v3568
        %v3923 = vadd.f32 %v3922, %v3576
        %v3924 = vadd.f32 %v3923, %v3584
        %v3925 = vadd.f32 %v3924, %v3592
        %v3926 = vadd.f32 %v3925, %v3600
        %v3927 = vadd.f32 %v3926, %v3608
        %v3928 = vadd.f32 %v3927, %v3616
        %v3929 = vrot.slane %v3928, 4
        %v3930 = vadd.f32 %v3928, %v3929
        %v3931 = vrot.slane %v3930, 2
        %v3932 = vadd.f32 %v3930, %v3931
        %v3933 = vrot.slane %v3932, 1
        %v3934 = vadd.f32 %v3932, %v3933
        %v3935 = vadd.f32 %v3497, %v3505
        %v3936 = vadd.f32 %v3935, %v3513
        %v3937 = vadd.f32 %v3936, %v3521
        %v3938 = vadd.f32 %v3937, %v3529
        %v3939 = vadd.f32 %v3938, %v3537
        %v3940 = vadd.f32 %v3939, %v3545
        %v3941 = vadd.f32 %v3940, %v3553
        %v3942 = vadd.f32 %v3941, %v3561
        %v3943 = vadd.f32 %v3942, %v3569
        %v3944 = vadd.f32 %v3943, %v3577
        %v3945 = vadd.f32 %v3944, %v3585
        %v3946 = vadd.f32 %v3945, %v3593
        %v3947 = vadd.f32 %v3946, %v3601
        %v3948 = vadd.f32 %v3947, %v3609
        %v3949 = vadd.f32 %v3948, %v3617
        %v3950 = vrot.slane %v3949, 4
        %v3951 = vadd.f32 %v3949, %v3950
        %v3952 = vrot.slane %v3951, 2
        %v3953 = vadd.f32 %v3951, %v3952
        %v3954 = vrot.slane %v3953, 1
        %v3955 = vadd.f32 %v3953, %v3954
        %v3972 = vcombine.low %v3640, %v3661
        %v3973 = vcombine.low %v3682, %v3703
        %v3975 = vunpack.c.l.s4 1983009808
        %v3976 = vunpack.c.0.s8 %v3975
        %v3977 = vlaneseq
        %v3978 = vshrl.u32 %v3977, 7
        %v3979 = vsub.s32 %v3976, %v3978
        %v3980 = vrot.slane %v3972, %v3979
        %v3982 = vunpack.c.l.s4 1983009808
        %v3983 = vunpack.c.0.s8 %v3982
        %v3984 = vlaneseq
        %v3985 = vshrl.u32 %v3984, 7
        %v3986 = vsub.s32 %v3983, %v3985
        %v3987 = vrot.slane %v3973, %v3986
        %v3988 = vcombine.low %v3980, %v3987
        %v3989 = vcombine.low %v3724, %v3745
        %v3990 = vcombine.low %v3766, %v3787
        %v3992 = vunpack.c.l.s4 1983009808
        %v3993 = vunpack.c.0.s8 %v3992
        %v3994 = vlaneseq
        %v3995 = vshrl.u32 %v3994, 7
        %v3996 = vsub.s32 %v3993, %v3995
        %v3997 = vrot.slane %v3989, %v3996
        %v3999 = vunpack.c.l.s4 1983009808
        %v4000 = vunpack.c.0.s8 %v3999
        %v4001 = vlaneseq
        %v4002 = vshrl.u32 %v4001, 7
        %v4003 = vsub.s32 %v4000, %v4002
        %v4004 = vrot.slane %v3990, %v4003
        %v4005 = vcombine.low %v3997, %v4004
        %v4006 = vcombine.low %v3808, %v3829
        %v4007 = vcombine.low %v3850, %v3871
        %v4009 = vunpack.c.l.s4 1983009808
        %v4010 = vunpack.c.0.s8 %v4009
        %v4011 = vlaneseq
        %v4012 = vshrl.u32 %v4011, 7
        %v4013 = vsub.s32 %v4010, %v4012
        %v4014 = vrot.slane %v4006, %v4013
        %v4016 = vunpack.c.l.s4 1983009808
        %v4017 = vunpack.c.0.s8 %v4016
        %v4018 = vlaneseq
        %v4019 = vshrl.u32 %v4018, 7
        %v4020 = vsub.s32 %v4017, %v4019
        %v4021 = vrot.slane %v4007, %v4020
        %v4022 = vcombine.low %v4014, %v4021
        %v4023 = vcombine.low %v3892, %v3913
        %v4024 = vcombine.low %v3934, %v3955
        %v4026 = vunpack.c.l.s4 1983009808
        %v4027 = vunpack.c.0.s8 %v4026
        %v4028 = vlaneseq
        %v4029 = vshrl.u32 %v4028, 7
        %v4030 = vsub.s32 %v4027, %v4029
        %v4031 = vrot.slane %v4023, %v4030
        %v4033 = vunpack.c.l.s4 1983009808
        %v4034 = vunpack.c.0.s8 %v4033
        %v4035 = vlaneseq
        %v4036 = vshrl.u32 %v4035, 7
        %v4037 = vsub.s32 %v4034, %v4036
        %v4038 = vrot.slane %v4024, %v4037
        %v4039 = vcombine.low %v4031, %v4038
        %vm4040 = vcmask 1044484
        %v4041 = vsel %vm4040, %v3988, %v3988
        %vm4042 = vcmask 1046534
        %v4043 = vsel %vm4042, %v3988, %v4041
        %v4044 = vrot.slane %v4022, 7
        %vm4045 = vcmask 1041409
        %v4046 = vsel %vm4045, %v4044, %v4043
        %vm4047 = vcmask 1043459
        %v4048 = vsel %vm4047, %v4044, %v4046
        %vm4049 = vcmask 1045509
        %v4050 = vsel %vm4049, %v4044, %v4048
        %vm4051 = vcmask 1047559
        %v4052 = vsel %vm4051, %v4044, %v4050
        %v4053 = vsel %vm4040, %v4005, %v4005
        %v4054 = vsel %vm4042, %v4005, %v4053
        %v4055 = vrot.slane %v4039, 7
        %v4056 = vsel %vm4045, %v4055, %v4054
        %v4057 = vsel %vm4047, %v4055, %v4056
        %v4058 = vsel %vm4049, %v4055, %v4057
        %v4059 = vsel %vm4051, %v4055, %v4058
        %v4062 = vadd.f32 %v3618, %v4052
        %v4063 = vadd.f32 %v3619, %v4059
        %4064 = vst [vmem:[#allocation2] sm:$0xff] %v4062
        %4065 = vst [vmem:[#allocation2 + $0x8] sm:$0xff] %v4063
        %p4066 = scmp.eq.s32.totalorder %s22, 1
        // Predicated region
        $region83: #{tpu_custom_call.1} parent=73 // pred_check
          %p4067 = pneg %p4066
        $region84: #{tpu_custom_call.1} parent=73 // pred_check_branch
          %4069 = sbr.rel (%p4067) target = $region86
        $region85: #{tpu_custom_call.1} parent=73 // pred_region
          %v4070 = vld [vmem:[#allocation2] sm:$0xff]
          %v4071 = vld [vmem:[#allocation2 + $0x8] sm:$0xff]
          %v4072 = vmul.f32 %v4070, 0.00390625
          %v4073 = vmul.f32 %v4071, 0.00390625
          %v4074 = vld [vmem:[%s3] sm:$0xff]
          %v4075 = vld [vmem:[%s3 + $0x8] sm:$0xff]
          %v4076 = vld [vmem:[%s3 + $0x10] sm:$0xff]
          %v4077 = vld [vmem:[%s3 + $0x18] sm:$0xff]
          %v4078 = vld [vmem:[%s3 + $0x20] sm:$0xff]
          %v4079 = vld [vmem:[%s3 + $0x28] sm:$0xff]
          %v4080 = vld [vmem:[%s3 + $0x30] sm:$0xff]
          %v4081 = vld [vmem:[%s3 + $0x38] sm:$0xff]
          %v4082 = vld [vmem:[%s3 + $0x40] sm:$0xff]
          %v4083 = vld [vmem:[%s3 + $0x48] sm:$0xff]
          %v4084 = vld [vmem:[%s3 + $0x50] sm:$0xff]
          %v4085 = vld [vmem:[%s3 + $0x58] sm:$0xff]
          %v4086 = vld [vmem:[%s3 + $0x60] sm:$0xff]
          %v4087 = vld [vmem:[%s3 + $0x68] sm:$0xff]
          %v4088 = vld [vmem:[%s3 + $0x70] sm:$0xff]
          %v4089 = vld [vmem:[%s3 + $0x78] sm:$0xff]
          %v4090 = vld [vmem:[%s3 + $0x80] sm:$0xff]
          %v4091 = vld [vmem:[%s3 + $0x88] sm:$0xff]
          %v4092 = vld [vmem:[%s3 + $0x90] sm:$0xff]
          %v4093 = vld [vmem:[%s3 + $0x98] sm:$0xff]
          %v4094 = vld [vmem:[%s3 + $0xa0] sm:$0xff]
          %v4095 = vld [vmem:[%s3 + $0xa8] sm:$0xff]
          %v4096 = vld [vmem:[%s3 + $0xb0] sm:$0xff]
          %v4097 = vld [vmem:[%s3 + $0xb8] sm:$0xff]
          %v4098 = vld [vmem:[%s3 + $0xc0] sm:$0xff]
          %v4099 = vld [vmem:[%s3 + $0xc8] sm:$0xff]
          %v4100 = vld [vmem:[%s3 + $0xd0] sm:$0xff]
          %v4101 = vld [vmem:[%s3 + $0xd8] sm:$0xff]
          %v4102 = vld [vmem:[%s3 + $0xe0] sm:$0xff]
          %v4103 = vld [vmem:[%s3 + $0xe8] sm:$0xff]
          %v4104 = vld [vmem:[%s3 + $0xf0] sm:$0xff]
          %v4105 = vld [vmem:[%s3 + $0xf8] sm:$0xff]
          %v4106 = vld [vmem:[%s3 + $0x100] sm:$0xff]
          %v4107 = vld [vmem:[%s3 + $0x108] sm:$0xff]
          %v4108 = vld [vmem:[%s3 + $0x110] sm:$0xff]
          %v4109 = vld [vmem:[%s3 + $0x118] sm:$0xff]
          %v4110 = vld [vmem:[%s3 + $0x120] sm:$0xff]
          %v4111 = vld [vmem:[%s3 + $0x128] sm:$0xff]
          %v4112 = vld [vmem:[%s3 + $0x130] sm:$0xff]
          %v4113 = vld [vmem:[%s3 + $0x138] sm:$0xff]
          %v4114 = vld [vmem:[%s3 + $0x140] sm:$0xff]
          %v4115 = vld [vmem:[%s3 + $0x148] sm:$0xff]
          %v4116 = vld [vmem:[%s3 + $0x150] sm:$0xff]
          %v4117 = vld [vmem:[%s3 + $0x158] sm:$0xff]
          %v4118 = vld [vmem:[%s3 + $0x160] sm:$0xff]
          %v4119 = vld [vmem:[%s3 + $0x168] sm:$0xff]
          %v4120 = vld [vmem:[%s3 + $0x170] sm:$0xff]
          %v4121 = vld [vmem:[%s3 + $0x178] sm:$0xff]
          %v4122 = vld [vmem:[%s3 + $0x180] sm:$0xff]
          %v4123 = vld [vmem:[%s3 + $0x188] sm:$0xff]
          %v4124 = vld [vmem:[%s3 + $0x190] sm:$0xff]
          %v4125 = vld [vmem:[%s3 + $0x198] sm:$0xff]
          %v4126 = vld [vmem:[%s3 + $0x1a0] sm:$0xff]
          %v4127 = vld [vmem:[%s3 + $0x1a8] sm:$0xff]
          %v4128 = vld [vmem:[%s3 + $0x1b0] sm:$0xff]
          %v4129 = vld [vmem:[%s3 + $0x1b8] sm:$0xff]
          %v4130 = vld [vmem:[%s3 + $0x1c0] sm:$0xff]
          %v4131 = vld [vmem:[%s3 + $0x1c8] sm:$0xff]
          %v4132 = vld [vmem:[%s3 + $0x1d0] sm:$0xff]
          %v4133 = vld [vmem:[%s3 + $0x1d8] sm:$0xff]
          %v4134 = vld [vmem:[%s3 + $0x1e0] sm:$0xff]
          %v4135 = vld [vmem:[%s3 + $0x1e8] sm:$0xff]
          %v4136 = vld [vmem:[%s3 + $0x1f0] sm:$0xff]
          %v4137 = vld [vmem:[%s3 + $0x1f8] sm:$0xff]
          %v4138 = vld [vmem:[%s3 + $0x200] sm:$0xff]
          %v4139 = vld [vmem:[%s3 + $0x208] sm:$0xff]
          %v4140 = vld [vmem:[%s3 + $0x210] sm:$0xff]
          %v4141 = vld [vmem:[%s3 + $0x218] sm:$0xff]
          %v4142 = vld [vmem:[%s3 + $0x220] sm:$0xff]
          %v4143 = vld [vmem:[%s3 + $0x228] sm:$0xff]
          %v4144 = vld [vmem:[%s3 + $0x230] sm:$0xff]
          %v4145 = vld [vmem:[%s3 + $0x238] sm:$0xff]
          %v4146 = vld [vmem:[%s3 + $0x240] sm:$0xff]
          %v4147 = vld [vmem:[%s3 + $0x248] sm:$0xff]
          %v4148 = vld [vmem:[%s3 + $0x250] sm:$0xff]
          %v4149 = vld [vmem:[%s3 + $0x258] sm:$0xff]
          %v4150 = vld [vmem:[%s3 + $0x260] sm:$0xff]
          %v4151 = vld [vmem:[%s3 + $0x268] sm:$0xff]
          %v4152 = vld [vmem:[%s3 + $0x270] sm:$0xff]
          %v4153 = vld [vmem:[%s3 + $0x278] sm:$0xff]
          %v4154 = vld [vmem:[%s3 + $0x280] sm:$0xff]
          %v4155 = vld [vmem:[%s3 + $0x288] sm:$0xff]
          %v4156 = vld [vmem:[%s3 + $0x290] sm:$0xff]
          %v4157 = vld [vmem:[%s3 + $0x298] sm:$0xff]
          %v4158 = vld [vmem:[%s3 + $0x2a0] sm:$0xff]
          %v4159 = vld [vmem:[%s3 + $0x2a8] sm:$0xff]
          %v4160 = vld [vmem:[%s3 + $0x2b0] sm:$0xff]
          %v4161 = vld [vmem:[%s3 + $0x2b8] sm:$0xff]
          %v4162 = vld [vmem:[%s3 + $0x2c0] sm:$0xff]
          %v4163 = vld [vmem:[%s3 + $0x2c8] sm:$0xff]
          %v4164 = vld [vmem:[%s3 + $0x2d0] sm:$0xff]
          %v4165 = vld [vmem:[%s3 + $0x2d8] sm:$0xff]
          %v4166 = vld [vmem:[%s3 + $0x2e0] sm:$0xff]
          %v4167 = vld [vmem:[%s3 + $0x2e8] sm:$0xff]
          %v4168 = vld [vmem:[%s3 + $0x2f0] sm:$0xff]
          %v4169 = vld [vmem:[%s3 + $0x2f8] sm:$0xff]
          %v4170 = vld [vmem:[%s3 + $0x300] sm:$0xff]
          %v4171 = vld [vmem:[%s3 + $0x308] sm:$0xff]
          %v4172 = vld [vmem:[%s3 + $0x310] sm:$0xff]
          %v4173 = vld [vmem:[%s3 + $0x318] sm:$0xff]
          %v4174 = vld [vmem:[%s3 + $0x320] sm:$0xff]
          %v4175 = vld [vmem:[%s3 + $0x328] sm:$0xff]
          %v4176 = vld [vmem:[%s3 + $0x330] sm:$0xff]
          %v4177 = vld [vmem:[%s3 + $0x338] sm:$0xff]
          %v4178 = vld [vmem:[%s3 + $0x340] sm:$0xff]
          %v4179 = vld [vmem:[%s3 + $0x348] sm:$0xff]
          %v4180 = vld [vmem:[%s3 + $0x350] sm:$0xff]
          %v4181 = vld [vmem:[%s3 + $0x358] sm:$0xff]
          %v4182 = vld [vmem:[%s3 + $0x360] sm:$0xff]
          %v4183 = vld [vmem:[%s3 + $0x368] sm:$0xff]
          %v4184 = vld [vmem:[%s3 + $0x370] sm:$0xff]
          %v4185 = vld [vmem:[%s3 + $0x378] sm:$0xff]
          %v4186 = vld [vmem:[%s3 + $0x380] sm:$0xff]
          %v4187 = vld [vmem:[%s3 + $0x388] sm:$0xff]
          %v4188 = vld [vmem:[%s3 + $0x390] sm:$0xff]
          %v4189 = vld [vmem:[%s3 + $0x398] sm:$0xff]
          %v4190 = vld [vmem:[%s3 + $0x3a0] sm:$0xff]
          %v4191 = vld [vmem:[%s3 + $0x3a8] sm:$0xff]
          %v4192 = vld [vmem:[%s3 + $0x3b0] sm:$0xff]
          %v4193 = vld [vmem:[%s3 + $0x3b8] sm:$0xff]
          %v4194 = vld [vmem:[%s3 + $0x3c0] sm:$0xff]
          %v4195 = vld [vmem:[%s3 + $0x3c8] sm:$0xff]
          %v4196 = vld [vmem:[%s3 + $0x3d0] sm:$0xff]
          %v4197 = vld [vmem:[%s3 + $0x3d8] sm:$0xff]
          %v4198 = vld [vmem:[%s3 + $0x3e0] sm:$0xff]
          %v4199 = vld [vmem:[%s3 + $0x3e8] sm:$0xff]
          %v4200 = vld [vmem:[%s3 + $0x3f0] sm:$0xff]
          %v4201 = vld [vmem:[%s3 + $0x3f8] sm:$0xff]
          %v4202 = vld [vmem:[%s4] sm:$0x1]
          %v4204 = vlaneseq
          %v4205 = vshrl.u32 %v4204, 7
          %v4206 = vsub.s32 0, %v4205
          %v4207 = vrot.slane %v4202, %v4206
          %v4211 = vcombine.high %v4072, %v4072
          %v4213 = vunpack.c.l.s4 1983009808
          %v4214 = vunpack.c.0.s8 %v4213
          %v4215 = vlaneseq
          %v4216 = vshrl.u32 %v4215, 7
          %v4217 = vsub.s32 %v4214, %v4216
          %v4218 = vrot.slane %v4072, %v4217
          %v4220 = vunpack.c.l.s4 1983009808
          %v4221 = vunpack.c.0.s8 %v4220
          %v4222 = vlaneseq
          %v4223 = vshrl.u32 %v4222, 7
          %v4224 = vsub.s32 %v4221, %v4223
          %v4225 = vrot.slane %v4211, %v4224
          %v4226 = vcombine.high %v4218, %v4218
          %v4227 = vcombine.high %v4225, %v4225
          %v4228 = vcombine.high %v4073, %v4073
          %v4230 = vunpack.c.l.s4 1983009808
          %v4231 = vunpack.c.0.s8 %v4230
          %v4232 = vlaneseq
          %v4233 = vshrl.u32 %v4232, 7
          %v4234 = vsub.s32 %v4231, %v4233
          %v4235 = vrot.slane %v4073, %v4234
          %v4237 = vunpack.c.l.s4 1983009808
          %v4238 = vunpack.c.0.s8 %v4237
          %v4239 = vlaneseq
          %v4240 = vshrl.u32 %v4239, 7
          %v4241 = vsub.s32 %v4238, %v4240
          %v4242 = vrot.slane %v4228, %v4241
          %v4243 = vcombine.high %v4235, %v4235
          %v4244 = vcombine.high %v4242, %v4242
          %4253 = vmatprep.subr.mxu0 0.0
          %4254 = vmatpush1.msra.mxu0 %v4074
          %4255 = vmatprep.subr.mxu0 0.0
          %4256 = vmatpush1.msra.mxu0 %v4075
          %4257 = vmatprep.subr.mxu0 0.0
          %4258 = vmatpush1.msra.mxu0 %v4076
          %4259 = vmatprep.subr.mxu0 0.0
          %4260 = vmatpush1.msra.mxu0 %v4077
          %4261 = vmatprep.subr.mxu0 0.0
          %4262 = vmatpush1.msra.mxu0 %v4078
          %4263 = vmatprep.subr.mxu0 0.0
          %4264 = vmatpush1.msra.mxu0 %v4079
          %4265 = vmatprep.subr.mxu0 0.0
          %4266 = vmatpush1.msra.mxu0 %v4080
          %4267 = vmatprep.subr.mxu0 0.0
          %4268 = vmatpush1.msra.mxu0 %v4081
          %4269 = vmatprep.subr.mxu0 0.0
          %4270 = vmatpush1.msra.mxu0 %v4082
          %4271 = vmatprep.subr.mxu0 0.0
          %4272 = vmatpush1.msra.mxu0 %v4083
          %4273 = vmatprep.subr.mxu0 0.0
          %4274 = vmatpush1.msra.mxu0 %v4084
          %4275 = vmatprep.subr.mxu0 0.0
          %4276 = vmatpush1.msra.mxu0 %v4085
          %4277 = vmatprep.subr.mxu0 0.0
          %4278 = vmatpush1.msra.mxu0 %v4086
          %4279 = vmatprep.subr.mxu0 0.0
          %4280 = vmatpush1.msra.mxu0 %v4087
          %4281 = vmatprep.subr.mxu0 0.0
          %4282 = vmatpush1.msra.mxu0 %v4088
          %4283 = vmatprep.subr.mxu0 0.0
          %4284 = vmatpush1.msra.mxu0 %v4089
          %4285 = vmatprep.subr.mxu0 0.0
          %4286 = vmatpush1.msra.mxu0 %v4090
          %4287 = vmatprep.subr.mxu0 0.0
          %4288 = vmatpush1.msra.mxu0 %v4091
          %4289 = vmatprep.subr.mxu0 0.0
          %4290 = vmatpush1.msra.mxu0 %v4092
          %4291 = vmatprep.subr.mxu0 0.0
          %4292 = vmatpush1.msra.mxu0 %v4093
          %4293 = vmatprep.subr.mxu0 0.0
          %4294 = vmatpush1.msra.mxu0 %v4094
          %4295 = vmatprep.subr.mxu0 0.0
          %4296 = vmatpush1.msra.mxu0 %v4095
          %4297 = vmatprep.subr.mxu0 0.0
          %4298 = vmatpush1.msra.mxu0 %v4096
          %4299 = vmatprep.subr.mxu0 0.0
          %4300 = vmatpush1.msra.mxu0 %v4097
          %4301 = vmatprep.subr.mxu0 0.0
          %4302 = vmatpush1.msra.mxu0 %v4098
          %4303 = vmatprep.subr.mxu0 0.0
          %4304 = vmatpush1.msra.mxu0 %v4099
          %4305 = vmatprep.subr.mxu0 0.0
          %4306 = vmatpush1.msra.mxu0 %v4100
          %4307 = vmatprep.subr.mxu0 0.0
          %4308 = vmatpush1.msra.mxu0 %v4101
          %4309 = vmatprep.subr.mxu0 0.0
          %4310 = vmatpush1.msra.mxu0 %v4102
          %4311 = vmatprep.subr.mxu0 0.0
          %4312 = vmatpush1.msra.mxu0 %v4103
          %4313 = vmatprep.subr.mxu0 0.0
          %4314 = vmatpush1.msra.mxu0 %v4104
          %4315 = vmatprep.subr.mxu0 0.0
          %4316 = vmatpush1.msra.mxu0 %v4105
          %4317 = vmatprep.mubr.f32.mxu0 %v4226
          %4318 = vmatmul.mubr.f32.gmra.mrb[0].mxu0 %v4218
          %v4319 = vpop.f32.mrb[0].mxu0
          %v4320 = vadd.f32 %v4207, %v4319
          %v4321 = vpop.f32.mrb[0].mxu0
          %4322 = vdwg.mxu0
          %4323 = vmatprep.subr.mxu0 0.0
          %4324 = vmatpush1.msra.mxu0 %v4106
          %4325 = vmatprep.subr.mxu0 0.0
          %4326 = vmatpush1.msra.mxu0 %v4107
          %4327 = vmatprep.subr.mxu0 0.0
          %4328 = vmatpush1.msra.mxu0 %v4108
          %4329 = vmatprep.subr.mxu0 0.0
          %4330 = vmatpush1.msra.mxu0 %v4109
          %4331 = vmatprep.subr.mxu0 0.0
          %4332 = vmatpush1.msra.mxu0 %v4110
          %4333 = vmatprep.subr.mxu0 0.0
          %4334 = vmatpush1.msra.mxu0 %v4111
          %4335 = vmatprep.subr.mxu0 0.0
          %4336 = vmatpush1.msra.mxu0 %v4112
          %4337 = vmatprep.subr.mxu0 0.0
          %4338 = vmatpush1.msra.mxu0 %v4113
          %4339 = vmatprep.subr.mxu0 0.0
          %4340 = vmatpush1.msra.mxu0 %v4114
          %4341 = vmatprep.subr.mxu0 0.0
          %4342 = vmatpush1.msra.mxu0 %v4115
          %4343 = vmatprep.subr.mxu0 0.0
          %4344 = vmatpush1.msra.mxu0 %v4116
          %4345 = vmatprep.subr.mxu0 0.0
          %4346 = vmatpush1.msra.mxu0 %v4117
          %4347 = vmatprep.subr.mxu0 0.0
          %4348 = vmatpush1.msra.mxu0 %v4118
          %4349 = vmatprep.subr.mxu0 0.0
          %4350 = vmatpush1.msra.mxu0 %v4119
          %4351 = vmatprep.subr.mxu0 0.0
          %4352 = vmatpush1.msra.mxu0 %v4120
          %4353 = vmatprep.subr.mxu0 0.0
          %4354 = vmatpush1.msra.mxu0 %v4121
          %4355 = vmatprep.subr.mxu0 0.0
          %4356 = vmatpush1.msra.mxu0 %v4122
          %4357 = vmatprep.subr.mxu0 0.0
          %4358 = vmatpush1.msra.mxu0 %v4123
          %4359 = vmatprep.subr.mxu0 0.0
          %4360 = vmatpush1.msra.mxu0 %v4124
          %4361 = vmatprep.subr.mxu0 0.0
          %4362 = vmatpush1.msra.mxu0 %v4125
          %4363 = vmatprep.subr.mxu0 0.0
          %4364 = vmatpush1.msra.mxu0 %v4126
          %4365 = vmatprep.subr.mxu0 0.0
          %4366 = vmatpush1.msra.mxu0 %v4127
          %4367 = vmatprep.subr.mxu0 0.0
          %4368 = vmatpush1.msra.mxu0 %v4128
          %4369 = vmatprep.subr.mxu0 0.0
          %4370 = vmatpush1.msra.mxu0 %v4129
          %4371 = vmatprep.subr.mxu0 0.0
          %4372 = vmatpush1.msra.mxu0 %v4130
          %4373 = vmatprep.subr.mxu0 0.0
          %4374 = vmatpush1.msra.mxu0 %v4131
          %4375 = vmatprep.subr.mxu0 0.0
          %4376 = vmatpush1.msra.mxu0 %v4132
          %4377 = vmatprep.subr.mxu0 0.0
          %4378 = vmatpush1.msra.mxu0 %v4133
          %4379 = vmatprep.subr.mxu0 0.0
          %4380 = vmatpush1.msra.mxu0 %v4134
          %4381 = vmatprep.subr.mxu0 0.0
          %4382 = vmatpush1.msra.mxu0 %v4135
          %4383 = vmatprep.subr.mxu0 0.0
          %4384 = vmatpush1.msra.mxu0 %v4136
          %4385 = vmatprep.subr.mxu0 0.0
          %4386 = vmatpush1.msra.mxu0 %v4137
          %4387 = vmatprep.mubr.f32.mxu0 %v4227
          %4388 = vmatmul.mubr.f32.gmra.mrb[0].mxu0 %v4225
          %v4389 = vpop.f32.mrb[0].mxu0
          %v4390 = vadd.f32 %v4320, %v4389
          %v4391 = vpop.f32.mrb[0].mxu0
          %4392 = vdwg.mxu0
          %4393 = vmatprep.subr.mxu0 0.0
          %4394 = vmatpush1.msra.mxu0 %v4138
          %4395 = vmatprep.subr.mxu0 0.0
          %4396 = vmatpush1.msra.mxu0 %v4139
          %4397 = vmatprep.subr.mxu0 0.0
          %4398 = vmatpush1.msra.mxu0 %v4140
          %4399 = vmatprep.subr.mxu0 0.0
          %4400 = vmatpush1.msra.mxu0 %v4141
          %4401 = vmatprep.subr.mxu0 0.0
          %4402 = vmatpush1.msra.mxu0 %v4142
          %4403 = vmatprep.subr.mxu0 0.0
          %4404 = vmatpush1.msra.mxu0 %v4143
          %4405 = vmatprep.subr.mxu0 0.0
          %4406 = vmatpush1.msra.mxu0 %v4144
          %4407 = vmatprep.subr.mxu0 0.0
          %4408 = vmatpush1.msra.mxu0 %v4145
          %4409 = vmatprep.subr.mxu0 0.0
          %4410 = vmatpush1.msra.mxu0 %v4146
          %4411 = vmatprep.subr.mxu0 0.0
          %4412 = vmatpush1.msra.mxu0 %v4147
          %4413 = vmatprep.subr.mxu0 0.0
          %4414 = vmatpush1.msra.mxu0 %v4148
          %4415 = vmatprep.subr.mxu0 0.0
          %4416 = vmatpush1.msra.mxu0 %v4149
          %4417 = vmatprep.subr.mxu0 0.0
          %4418 = vmatpush1.msra.mxu0 %v4150
          %4419 = vmatprep.subr.mxu0 0.0
          %4420 = vmatpush1.msra.mxu0 %v4151
          %4421 = vmatprep.subr.mxu0 0.0
          %4422 = vmatpush1.msra.mxu0 %v4152
          %4423 = vmatprep.subr.mxu0 0.0
          %4424 = vmatpush1.msra.mxu0 %v4153
          %4425 = vmatprep.subr.mxu0 0.0
          %4426 = vmatpush1.msra.mxu0 %v4154
          %4427 = vmatprep.subr.mxu0 0.0
          %4428 = vmatpush1.msra.mxu0 %v4155
          %4429 = vmatprep.subr.mxu0 0.0
          %4430 = vmatpush1.msra.mxu0 %v4156
          %4431 = vmatprep.subr.mxu0 0.0
          %4432 = vmatpush1.msra.mxu0 %v4157
          %4433 = vmatprep.subr.mxu0 0.0
          %4434 = vmatpush1.msra.mxu0 %v4158
          %4435 = vmatprep.subr.mxu0 0.0
          %4436 = vmatpush1.msra.mxu0 %v4159
          %4437 = vmatprep.subr.mxu0 0.0
          %4438 = vmatpush1.msra.mxu0 %v4160
          %4439 = vmatprep.subr.mxu0 0.0
          %4440 = vmatpush1.msra.mxu0 %v4161
          %4441 = vmatprep.subr.mxu0 0.0
          %4442 = vmatpush1.msra.mxu0 %v4162
          %4443 = vmatprep.subr.mxu0 0.0
          %4444 = vmatpush1.msra.mxu0 %v4163
          %4445 = vmatprep.subr.mxu0 0.0
          %4446 = vmatpush1.msra.mxu0 %v4164
          %4447 = vmatprep.subr.mxu0 0.0
          %4448 = vmatpush1.msra.mxu0 %v4165
          %4449 = vmatprep.subr.mxu0 0.0
          %4450 = vmatpush1.msra.mxu0 %v4166
          %4451 = vmatprep.subr.mxu0 0.0
          %4452 = vmatpush1.msra.mxu0 %v4167
          %4453 = vmatprep.subr.mxu0 0.0
          %4454 = vmatpush1.msra.mxu0 %v4168
          %4455 = vmatprep.subr.mxu0 0.0
          %4456 = vmatpush1.msra.mxu0 %v4169
          %4457 = vmatprep.mubr.f32.mxu0 %v4243
          %4458 = vmatmul.mubr.f32.gmra.mrb[0].mxu0 %v4235
          %v4459 = vpop.f32.mrb[0].mxu0
          %v4460 = vadd.f32 %v4390, %v4459
          %v4461 = vpop.f32.mrb[0].mxu0
          %4462 = vdwg.mxu0
          %4463 = vmatprep.subr.mxu0 0.0
          %4464 = vmatpush1.msra.mxu0 %v4170
          %4465 = vmatprep.subr.mxu0 0.0
          %4466 = vmatpush1.msra.mxu0 %v4171
          %4467 = vmatprep.subr.mxu0 0.0
          %4468 = vmatpush1.msra.mxu0 %v4172
          %4469 = vmatprep.subr.mxu0 0.0
          %4470 = vmatpush1.msra.mxu0 %v4173
          %4471 = vmatprep.subr.mxu0 0.0
          %4472 = vmatpush1.msra.mxu0 %v4174
          %4473 = vmatprep.subr.mxu0 0.0
          %4474 = vmatpush1.msra.mxu0 %v4175
          %4475 = vmatprep.subr.mxu0 0.0
          %4476 = vmatpush1.msra.mxu0 %v4176
          %4477 = vmatprep.subr.mxu0 0.0
          %4478 = vmatpush1.msra.mxu0 %v4177
          %4479 = vmatprep.subr.mxu0 0.0
          %4480 = vmatpush1.msra.mxu0 %v4178
          %4481 = vmatprep.subr.mxu0 0.0
          %4482 = vmatpush1.msra.mxu0 %v4179
          %4483 = vmatprep.subr.mxu0 0.0
          %4484 = vmatpush1.msra.mxu0 %v4180
          %4485 = vmatprep.subr.mxu0 0.0
          %4486 = vmatpush1.msra.mxu0 %v4181
          %4487 = vmatprep.subr.mxu0 0.0
          %4488 = vmatpush1.msra.mxu0 %v4182
          %4489 = vmatprep.subr.mxu0 0.0
          %4490 = vmatpush1.msra.mxu0 %v4183
          %4491 = vmatprep.subr.mxu0 0.0
          %4492 = vmatpush1.msra.mxu0 %v4184
          %4493 = vmatprep.subr.mxu0 0.0
          %4494 = vmatpush1.msra.mxu0 %v4185
          %4495 = vmatprep.subr.mxu0 0.0
          %4496 = vmatpush1.msra.mxu0 %v4186
          %4497 = vmatprep.subr.mxu0 0.0
          %4498 = vmatpush1.msra.mxu0 %v4187
          %4499 = vmatprep.subr.mxu0 0.0
          %4500 = vmatpush1.msra.mxu0 %v4188
          %4501 = vmatprep.subr.mxu0 0.0
          %4502 = vmatpush1.msra.mxu0 %v4189
          %4503 = vmatprep.subr.mxu0 0.0
          %4504 = vmatpush1.msra.mxu0 %v4190
          %4505 = vmatprep.subr.mxu0 0.0
          %4506 = vmatpush1.msra.mxu0 %v4191
          %4507 = vmatprep.subr.mxu0 0.0
          %4508 = vmatpush1.msra.mxu0 %v4192
          %4509 = vmatprep.subr.mxu0 0.0
          %4510 = vmatpush1.msra.mxu0 %v4193
          %4511 = vmatprep.subr.mxu0 0.0
          %4512 = vmatpush1.msra.mxu0 %v4194
          %4513 = vmatprep.subr.mxu0 0.0
          %4514 = vmatpush1.msra.mxu0 %v4195
          %4515 = vmatprep.subr.mxu0 0.0
          %4516 = vmatpush1.msra.mxu0 %v4196
          %4517 = vmatprep.subr.mxu0 0.0
          %4518 = vmatpush1.msra.mxu0 %v4197
          %4519 = vmatprep.subr.mxu0 0.0
          %4520 = vmatpush1.msra.mxu0 %v4198
          %4521 = vmatprep.subr.mxu0 0.0
          %4522 = vmatpush1.msra.mxu0 %v4199
          %4523 = vmatprep.subr.mxu0 0.0
          %4524 = vmatpush1.msra.mxu0 %v4200
          %4525 = vmatprep.subr.mxu0 0.0
          %4526 = vmatpush1.msra.mxu0 %v4201
          %4527 = vmatprep.mubr.f32.mxu0 %v4244
          %4528 = vmatmul.mubr.f32.gmra.mrb[0].mxu0 %v4242
          %v4529 = vpop.f32.mrb[0].mxu0
          %v4530 = vadd.f32 %v4460, %v4529
          %v4531 = vpop.f32.mrb[0].mxu0
          %4532 = vdwg.mxu0
          %vm4533 = vcmask 33792
          %4534 = vst.msk [vmem:[#allocation4] sm:$0x3] %vm4533, %v4530
        $region86: #{tpu_custom_call.1} parent=73 // pred_fallthru
          _
        // Predicated region
        $region87: #{tpu_custom_call.1} parent=73 // pred_check
          %p4535 = pneg %p159
        $region88: #{tpu_custom_call.1} parent=73 // pred_check_branch
          %4537 = sbr.rel (%p4535) target = $region90
        $region89: #{tpu_custom_call.1} parent=73 // pred_region
          %s4539 = ssub.s32 32, 32
          %4540 = vsyncadd [#allocation5], %s4539
          %s4541 = smul.addr %s21, 32
          %s4542 = scalar_lea.hbm %s5, %s4541
          %s4544 = sshll.u32 [#allocation4], 4
          %s4545 = int_to_ptr.vmem [resolvable:$true] %s4544
          %4547 = dma.vmem_to_hbm [thread:$0]  %s4545, 32, %s4542, [#allocation5]
        $region90: #{tpu_custom_call.1} parent=73 // pred_fallthru
          _
        // Predicated region
        $region91: #{tpu_custom_call.1} parent=73 // pred_check
          %p4548 = pneg %p159
        $region92: #{tpu_custom_call.1} parent=73 // pred_check_branch
          %4550 = sbr.rel (%p4548) target = $region94
        $region93: #{tpu_custom_call.1} parent=73 // pred_region
          %4551 = dma.done [#allocation5], 32
        $region94: #{tpu_custom_call.1} parent=73 // pred_fallthru
          _
      $region74: #{tpu_custom_call.1} parent=5 // pred_fallthru
        _
      %p4552 = scmp.le.s32.totalorder 2, %s12
      // Predicated region
      $region95: #{tpu_custom_call.1} parent=5 // pred_check
        %p4553 = pneg %p4552
      $region96: #{tpu_custom_call.1} parent=5 // pred_check_branch
        %4555 = sbr.rel (%p4553) target = $region98
      $region97: #{tpu_custom_call.1} parent=5 // pred_region
        %s4556 = ssub.s32 %s12, 2
      $region98: #{tpu_custom_call.1} parent=5 // pred_fallthru
        _
    $region6: #{tpu_custom_call.1} parent=1 // loop_footer
      %s16 = sadd.s32 1, %s12
    $region7: #{tpu_custom_call.1} parent=1 // loop_footer_branch
      %11 = sbr.rel target = $region3
    $region8: #{tpu_custom_call.1} parent=1 // loop_exit
      _
    %4557 = vsyncpa [#allocation5], 1
    %s4558 = scalar_lea.sflag [#allocation5], 1
    %4559 = vsyncpa %s4558, 1

</llo_original>
